<compile_context>
chip_gen: v7x
topology: tpu7x:2x2x1
jax: 0.10.0
libtpu: 0.0.40
codegen_flags: <defaults>
</compile_context>

<pallas_src>
import functools
import math

import jax
import jax.numpy as jnp
from jax.experimental import pallas as pl
from jax.experimental.pallas import tpu as pltpu


PACKED_ORDER = ("wqkv1", "bqkv1", "wo1", "bo1", "g1", "be1",
                "wq2", "bq2", "wkv2", "bkv2", "wo2", "bo2", "g2", "be2",
                "w1", "bf1", "w2", "bf2", "g3", "be3")


# ---------------------------------------------------------------------------
# Shared math helpers (used inside the kernel and by the plain-JAX reference).
# ---------------------------------------------------------------------------
def _add_layernorm(x, y, g, b, eps=1e-6):
    """LayerNorm(x + y) with a single-pass variance (E[z^2] - mu^2)."""
    z = x + y
    mu = jnp.mean(z, axis=-1, keepdims=True)
    ms = jnp.mean(z * z, axis=-1, keepdims=True)
    var = ms - mu * mu
    return g * (z - mu) * jax.lax.rsqrt(var + eps) + b


def _mha(q, k, v, bias, wo_bf16, bo, bb, num_heads, approx_recip):
    """Multi-head attention on bb batch elements, rows flattened to (bb*S, D).

    q: (bb*Sq, D) f32, k/v: (bb*Sk, D) f32 (projected; 1/sqrt(dh) already folded into Wq),
    bias: additive f32 mask broadcastable to (bb, H, Sq, Sk) (0 keep / -1e9 masked),
    wo_bf16: (D, D) bf16 output projection, bo: (1, D) f32.
    """
    R, D = q.shape
    Sq = R // bb
    Sk = k.shape[0] // bb
    H = num_heads
    dh = D // H

    def split_heads(t, slen):
        # cast to bf16 BEFORE the relayout so the transpose moves half the bytes
        return (t.astype(jnp.bfloat16)
                 .reshape(bb, slen, H, dh)
                 .transpose(0, 2, 1, 3)
                 .reshape(bb * H, slen, dh))

    qh, kh, vh = split_heads(q, Sq), split_heads(k, Sk), split_heads(v, Sk)

    # batched score matmul over bb*H heads, f32 accumulation on the MXU
    s = jnp.einsum("bqd,bkd->bqk", qh, kh,
                   preferred_element_type=jnp.float32).reshape(bb, H, Sq, Sk)
    s = s + bias                                   # additive mask, f32

    # manual softmax: exp on EUP, divide via approx reciprocal (EUP) inside the kernel
    m = jnp.max(s, axis=-1, keepdims=True)
    e = jnp.exp(s - m)
    denom = jnp.sum(e, axis=-1, keepdims=True)
    if approx_recip:
        p = e * pl.reciprocal(denom, approx=True)
    else:
        p = e / denom

    p = p.reshape(bb * H, Sq, Sk).astype(jnp.bfloat16)
    ctx = jnp.einsum("bqk,bkd->bqd", p, vh,
                     preferred_element_type=jnp.float32)        # (bb*H, Sq, dh)
    ctx = (ctx.astype(jnp.bfloat16)                              # bf16 before the relayout back
              .reshape(bb, H, Sq, dh)
              .transpose(0, 2, 1, 3)
              .reshape(R, D))

    # concat(heads) @ Wo as one big matmul.
    return jnp.dot(ctx, wo_bf16, preferred_element_type=jnp.float32) + bo


# ---------------------------------------------------------------------------
# Pallas kernel: bb batch elements per grid step, everything fused.
# ---------------------------------------------------------------------------
def decoder_kernel(num_heads,
                   dec_in_ref, enc_res_ref, pad_mask_ref,
                   wqkv1_ref, bqkv1_ref, wo1_ref, bo1_ref, g1_ref, be1_ref,
                   wq2_ref, bq2_ref, wkv2_ref, bkv2_ref, wo2_ref, bo2_ref, g2_ref, be2_ref,
                   w1_ref, bf1_ref, w2_ref, bf2_ref, g3_ref, be3_ref,
                   out_ref):
    bb, S, D = dec_in_ref.shape
    R = bb * S

    x_bf = dec_in_ref[...].reshape(R, D)          # bf16 activations (flattened rows)
    enc_bf = enc_res_ref[...].reshape(R, D)       # bf16
    x = x_bf.astype(jnp.float32)                  # f32 residual stream

    # Additive masks built in-kernel (no O(S^2) mask DMA).
    row = jax.lax.broadcasted_iota(jnp.int32, (S, S), 0)
    col = jax.lax.broadcasted_iota(jnp.int32, (S, S), 1)
    causal_bias = jnp.where(col <= row, jnp.float32(0.0), jnp.float32(-1e9))   # (S, S)
    pad_bias = ((1.0 - pad_mask_ref[...].astype(jnp.float32))
                * jnp.float32(-1e9)).reshape(bb, 1, 1, S)                      # (bb,1,1,S)

    # --- self attention: Q = K = V = dec_in, causal mask ---
    qkv = jnp.dot(x_bf, wqkv1_ref[...],
                  preferred_element_type=jnp.float32) + bqkv1_ref[...]
    a = _mha(qkv[:, :D], qkv[:, D:2 * D], qkv[:, 2 * D:],
             causal_bias, wo1_ref[...], bo1_ref[...], bb, num_heads, True)
    x = _add_layernorm(x, a, g1_ref[...], be1_ref[...])
    # drop1: identity (eval)

    # --- enc-dec attention: Q = enc_res, K = V = x (matches the PyTorch module) ---
    x_b16 = x.astype(jnp.bfloat16)
    q2 = jnp.dot(enc_bf, wq2_ref[...],
                 preferred_element_type=jnp.float32) + bq2_ref[...]
    kv2 = jnp.dot(x_b16, wkv2_ref[...],
                  preferred_element_type=jnp.float32) + bkv2_ref[...]
    a = _mha(q2, kv2[:, :D], kv2[:, D:],
             pad_bias, wo2_ref[...], bo2_ref[...], bb, num_heads, True)
    x = _add_layernorm(x, a, g2_ref[...], be2_ref[...])
    # drop2: identity (eval)

    # --- position-wise feed-forward ---
    x_b16 = x.astype(jnp.bfloat16)
    h = jnp.maximum(jnp.dot(x_b16, w1_ref[...],
                            preferred_element_type=jnp.float32) + bf1_ref[...], 0.0)
    f = jnp.dot(h.astype(jnp.bfloat16), w2_ref[...],
                preferred_element_type=jnp.float32) + bf2_ref[...]
    x = _add_layernorm(x, f, g3_ref[...], be3_ref[...])
    # drop3: identity (eval)

    out_ref[...] = x.reshape(bb, S, D).astype(out_ref.dtype)


# ---------------------------------------------------------------------------
# Host-side packing / configuration (done ONCE, outside the per-call path).
# ---------------------------------------------------------------------------
def pack_params(params, num_heads):
    """Fuse QKV / KV weights, fold 1/sqrt(dh) into the Q projections, cast matmul weights
    to bf16 (biases / LayerNorm params stay f32)."""
    bf16, f32 = jnp.bfloat16, jnp.float32
    D = params["wq1"].shape[0]
    scale = jnp.float32(1.0 / math.sqrt(D // num_heads))
    wq1, bq1 = params["wq1"] * scale, params["bq1"] * scale
    wq2, bq2 = params["wq2"] * scale, params["bq2"] * scale
    packed = {
        "wqkv1": jnp.concatenate([wq1, params["wk1"], params["wv1"]], axis=1).astype(bf16),
        "bqkv1": jnp.concatenate([bq1, params["bk1"], params["bv1"]], axis=1).astype(f32),
        "wo1": params["wo1"].astype(bf16), "bo1": params["bo1"].astype(f32),
        "g1": params["g1"].astype(f32), "be1": params["be1"].astype(f32),
        "wq2": wq2.astype(bf16), "bq2": bq2.astype(f32),
        "wkv2": jnp.concatenate([params["wk2"], params["wv2"]], axis=1).astype(bf16),
        "bkv2": jnp.concatenate([params["bk2"], params["bv2"]], axis=1).astype(f32),
        "wo2": params["wo2"].astype(bf16), "bo2": params["bo2"].astype(f32),
        "g2": params["g2"].astype(f32), "be2": params["be2"].astype(f32),
        "w1": params["w1"].astype(bf16), "bf1": params["bf1"].astype(f32),
        "w2": params["w2"].astype(bf16), "bf2": params["bf2"].astype(f32),
        "g3": params["g3"].astype(f32), "be3": params["be3"].astype(f32),
    }
    return tuple(packed[k] for k in PACKED_ORDER)


def _choose_block_batch(B, S, H):
    """Largest divisor bb of B so the per-step working set stays modest and, when possible,
    the grid keeps >= 2 steps (v7x has 2 TensorCores)."""
    max_rows = 512                 # rows fed to each projection / FFN matmul per step
    max_score_bytes = 8 << 20      # f32 (bb, H, S, S) score tensor cap
    best = 1
    for bb in range(1, B + 1):
        if B % bb:
            continue
        if bb > 1 and bb * S > max_rows:
            continue
        if bb > 1 and bb * H * S * S * 4 > max_score_bytes:
            continue
        if bb > 1 and B >= 2 and B // bb < 2:
            continue
        best = bb
    return best


def _vmem_limit_bytes(weight_bytes, bb, S, D, DH, H):
    """Generation-aware VMEM limit: estimated working set, capped below physical VMEM
    with headroom for compiler scratch (v7x: 64 MiB physical; v5e/v6e: 128 MiB)."""
    try:
        phys = int(pltpu.get_tpu_info().vmem_capacity_bytes)
    except Exception:  # pragma: no cover - conservative fallback if the query is unavailable
        phys = 64 << 20
    budget = phys - (12 << 20)                  # leave headroom for scratch / spill
    act = 2 * 2 * bb * S * D * 2                # dec_in + enc_res blocks, double-buffered, bf16
    outb = 2 * bb * S * D * 4                   # output block, double-buffered, f32
    attn = 3 * bb * H * S * S * 4               # f32 scores + exp + bf16 copy (rounded up)
    ffn = bb * S * DH * 4
    est = weight_bytes + act + outb + attn + ffn + (8 << 20)
    return int(min(max(est, 32 << 20), budget))


@functools.partial(jax.jit, static_argnames=("num_heads",))
def decoder_forward(enc_res, dec_in, pad_mask_keys, packed_weights, num_heads):
    """Fused decoder block. pad_mask_keys: (B, S) key validity (1 = keep) for enc-dec attn."""
    B, S, D = dec_in.shape
    DH = packed_weights[PACKED_ORDER.index("w1")].shape[1]
    H = num_heads

    bb = _choose_block_batch(B, S, H)
    grid = (B // bb,)

    # bf16 activation DMA into the kernel; residual / LN math stays f32 in-kernel.
    dec_b16 = dec_in.astype(jnp.bfloat16)
    enc_b16 = enc_res.astype(jnp.bfloat16)
    pad3 = pad_mask_keys.astype(jnp.float32).reshape(B, 1, S)

    act_spec = pl.BlockSpec((bb, S, D), lambda i: (i, 0, 0))
    pad_spec = pl.BlockSpec((bb, 1, S), lambda i: (i, 0, 0))

    def wspec(p):
        # Constant index_map + single buffer: weights stay resident, no double-buffer VMEM.
        return pl.BlockSpec(p.shape, lambda i, _nd=p.ndim: (0,) * _nd,
                            pipeline_mode=pl.Buffered(1))

    weight_bytes = sum(int(w.size) * w.dtype.itemsize for w in packed_weights)

    # Advisory cost estimate for XLA scheduling.
    flops_self = 2 * S * D * (3 * D) + 4 * S * S * D + 2 * S * D * D
    flops_cross = 2 * S * D * D + 2 * S * D * (2 * D) + 4 * S * S * D + 2 * S * D * D
    flops_ffn = 4 * S * D * DH
    flops = B * (flops_self + flops_cross + flops_ffn)
    transcendentals = B * (2 * H * S * S + 2 * H * S + 6 * S)
    bytes_accessed = weight_bytes + 2 * B * S * D * 2 + B * S * D * 4 + B * S * 4
    cost = pl.CostEstimate(flops=int(flops), transcendentals=int(transcendentals),
                           bytes_accessed=int(bytes_accessed))

    vmem_limit = _vmem_limit_bytes(weight_bytes, bb, S, D, DH, H)

    in_specs = [act_spec, act_spec, pad_spec] + [wspec(w) for w in packed_weights]
    call = pl.pallas_call(
        functools.partial(decoder_kernel, num_heads),
        out_shape=jax.ShapeDtypeStruct((B, S, D), jnp.float32),
        grid_spec=pltpu.PrefetchScalarGridSpec(
            num_scalar_prefetch=0,
            grid=grid,
            in_specs=in_specs,
            out_specs=act_spec,
        ),
        compiler_params=pltpu.CompilerParams(
            dimension_semantics=("parallel",),
            vmem_limit_bytes=vmem_limit,
        ),
        cost_estimate=cost,
    )
    return call(dec_b16, enc_b16, pad3, *packed_weights)


# ---------------------------------------------------------------------------
# Plain-JAX reference (same math / same bf16 operands; exact softmax divide).
# ---------------------------------------------------------------------------
def decoder_ref(enc_res, dec_in, pad_mask_keys, packed_weights, num_heads):
    w = dict(zip(PACKED_ORDER, packed_weights))
    B, S, D = dec_in.shape
    x_bf = dec_in.astype(jnp.bfloat16).reshape(B * S, D)
    enc_bf = enc_res.astype(jnp.bfloat16).reshape(B * S, D)
    x = x_bf.astype(jnp.float32)

    row = jax.lax.broadcasted_iota(jnp.int32, (S, S), 0)
    col = jax.lax.broadcasted_iota(jnp.int32, (S, S), 1)
    causal_bias = jnp.where(col <= row, jnp.float32(0.0), jnp.float32(-1e9))
    pad_bias = ((1.0 - pad_mask_keys.astype(jnp.float32))
                * jnp.float32(-1e9)).reshape(B, 1, 1, S)

    qkv = jnp.dot(x_bf, w["wqkv1"], preferred_element_type=jnp.float32) + w["bqkv1"]
    a = _mha(qkv[:, :D], qkv[:, D:2 * D], qkv[:, 2 * D:],
             causal_bias, w["wo1"], w["bo1"], B, num_heads, False)
    x = _add_layernorm(x, a, w["g1"], w["be1"])

    q2 = jnp.dot(enc_bf, w["wq2"], preferred_element_type=jnp.float32) + w["bq2"]
    kv2 = jnp.dot(x.astype(jnp.bfloat16), w["wkv2"],
                  preferred_element_type=jnp.float32) + w["bkv2"]
    a = _mha(q2, kv2[:, :D], kv2[:, D:],
             pad_bias, w["wo2"], w["bo2"], B, num_heads, False)
    x = _add_layernorm(x, a, w["g2"], w["be2"])

    h = jnp.maximum(jnp.dot(x.astype(jnp.bfloat16), w["w1"],
                            preferred_element_type=jnp.float32) + w["bf1"], 0.0)
    f = jnp.dot(h.astype(jnp.bfloat16), w["w2"],
                preferred_element_type=jnp.float32) + w["bf2"]
    x = _add_layernorm(x, f, w["g3"], w["be3"])
    return x.reshape(B, S, D)


def init_params(key, d_model, d_hidden):
    ks = jax.random.split(key, 16)
    it = iter(ks)

    def lin(k, shape, fan_in):
        return jax.random.normal(k, shape, jnp.float32) / math.sqrt(fan_in)

    p = {}
    for name in ("wq1", "wk1", "wv1", "wo1"):
        p[name] = lin(next(it), (d_model, d_model), d_model)
    for name in ("bq1", "bk1", "bv1", "bo1"):
        p[name] = jnp.zeros((1, d_model), jnp.float32)
    p["g1"], p["be1"] = jnp.ones((1, d_model), jnp.float32), jnp.zeros((1, d_model), jnp.float32)
    for name in ("wq2", "wk2", "wv2", "wo2"):
        p[name] = lin(next(it), (d_model, d_model), d_model)
    for name in ("bq2", "bk2", "bv2", "bo2"):
        p[name] = jnp.zeros((1, d_model), jnp.float32)
    p["g2"], p["be2"] = jnp.ones((1, d_model), jnp.float32), jnp.zeros((1, d_model), jnp.float32)
    p["w1"] = lin(next(it), (d_model, d_hidden), d_model)
    p["bf1"] = jnp.zeros((1, d_hidden), jnp.float32)
    p["w2"] = lin(next(it), (d_hidden, d_model), d_hidden)
    p["bf2"] = jnp.zeros((1, d_model), jnp.float32)
    p["g3"], p["be3"] = jnp.ones((1, d_model), jnp.float32), jnp.zeros((1, d_model), jnp.float32)
    return p


if __name__ == "__main__":
    # Small demo shapes (S multiple of 8; real configs should use D / d_hidden that are
    # multiples of 128 so the lane axis is dense, and dh >= 128 on v6e/v7x if possible).
    B, S, D, H, DH = 4, 8, 32, 4, 64   # batch, seq, d_model, num_heads, d_hidden
    key = jax.random.PRNGKey(0)
    k_enc, k_dec, k_par = jax.random.split(key, 3)

    enc_res = jax.random.normal(k_enc, (B, S, D), jnp.float32)
    dec_in = jax.random.normal(k_dec, (B, S, D), jnp.float32)
    pad_mask_keys = jnp.ones((B, S), jnp.float32)     # 1 = keep (no padding)

    params = init_params(k_par, D, DH)
    packed = pack_params(params, num_heads=H)          # one-time host-side packing

    out = decoder_forward(enc_res, dec_in, pad_mask_keys, packed, num_heads=H)
    out = jax.block_until_ready(out)

    ref = decoder_ref(enc_res, dec_in, pad_mask_keys, packed, num_heads=H)
    assert out.shape == (B, S, D)
    assert jnp.allclose(out, ref, rtol=2e-2, atol=2e-2), "mismatch vs JAX reference"
    print("KERNEL_OK")
</pallas_src>

<mosaic_0001>
module attributes {stable_mosaic.version = 11 : i64} {
  func.func @decoder_kernel(%arg0: i32, %arg1: memref<2x8x32xbf16, #tpu.memory_space<vmem>>, %arg2: memref<2x8x32xbf16, #tpu.memory_space<vmem>>, %arg3: memref<2x1x8xf32, #tpu.memory_space<vmem>>, %arg4: memref<32x96xbf16, #tpu.memory_space<vmem>>, %arg5: memref<1x96xf32, #tpu.memory_space<vmem>>, %arg6: memref<32x32xbf16, #tpu.memory_space<vmem>>, %arg7: memref<1x32xf32, #tpu.memory_space<vmem>>, %arg8: memref<1x32xf32, #tpu.memory_space<vmem>>, %arg9: memref<1x32xf32, #tpu.memory_space<vmem>>, %arg10: memref<32x32xbf16, #tpu.memory_space<vmem>>, %arg11: memref<1x32xf32, #tpu.memory_space<vmem>>, %arg12: memref<32x64xbf16, #tpu.memory_space<vmem>>, %arg13: memref<1x64xf32, #tpu.memory_space<vmem>>, %arg14: memref<32x32xbf16, #tpu.memory_space<vmem>>, %arg15: memref<1x32xf32, #tpu.memory_space<vmem>>, %arg16: memref<1x32xf32, #tpu.memory_space<vmem>>, %arg17: memref<1x32xf32, #tpu.memory_space<vmem>>, %arg18: memref<32x64xbf16, #tpu.memory_space<vmem>>, %arg19: memref<1x64xf32, #tpu.memory_space<vmem>>, %arg20: memref<64x32xbf16, #tpu.memory_space<vmem>>, %arg21: memref<1x32xf32, #tpu.memory_space<vmem>>, %arg22: memref<1x32xf32, #tpu.memory_space<vmem>>, %arg23: memref<1x32xf32, #tpu.memory_space<vmem>>, %arg24: memref<2x8x32xf32, #tpu.memory_space<vmem>>) attributes {dimension_semantics = [#tpu.dimension_semantics<parallel>], iteration_bounds = array<i64: 2>, scalar_prefetch = 0 : i64, scratch_operands = 0 : i64, tpu.core_type = #tpu.core_type<tc>, window_params = [{transform_indices = @transform_0, window_bounds = array<i64: 2, 8, 32>}, {transform_indices = @transform_1, window_bounds = array<i64: 2, 8, 32>}, {transform_indices = @transform_2, window_bounds = array<i64: 2, 1, 8>}, {pipeline_mode = #tpu.pipeline_mode<synchronous>, transform_indices = @transform_3, window_bounds = array<i64: 32, 96>}, {pipeline_mode = #tpu.pipeline_mode<synchronous>, transform_indices = @transform_4, window_bounds = array<i64: 1, 96>}, {pipeline_mode = #tpu.pipeline_mode<synchronous>, transform_indices = @transform_5, window_bounds = array<i64: 32, 32>}, {pipeline_mode = #tpu.pipeline_mode<synchronous>, transform_indices = @transform_6, window_bounds = array<i64: 1, 32>}, {pipeline_mode = #tpu.pipeline_mode<synchronous>, transform_indices = @transform_7, window_bounds = array<i64: 1, 32>}, {pipeline_mode = #tpu.pipeline_mode<synchronous>, transform_indices = @transform_8, window_bounds = array<i64: 1, 32>}, {pipeline_mode = #tpu.pipeline_mode<synchronous>, transform_indices = @transform_9, window_bounds = array<i64: 32, 32>}, {pipeline_mode = #tpu.pipeline_mode<synchronous>, transform_indices = @transform_10, window_bounds = array<i64: 1, 32>}, {pipeline_mode = #tpu.pipeline_mode<synchronous>, transform_indices = @transform_11, window_bounds = array<i64: 32, 64>}, {pipeline_mode = #tpu.pipeline_mode<synchronous>, transform_indices = @transform_12, window_bounds = array<i64: 1, 64>}, {pipeline_mode = #tpu.pipeline_mode<synchronous>, transform_indices = @transform_13, window_bounds = array<i64: 32, 32>}, {pipeline_mode = #tpu.pipeline_mode<synchronous>, transform_indices = @transform_14, window_bounds = array<i64: 1, 32>}, {pipeline_mode = #tpu.pipeline_mode<synchronous>, transform_indices = @transform_15, window_bounds = array<i64: 1, 32>}, {pipeline_mode = #tpu.pipeline_mode<synchronous>, transform_indices = @transform_16, window_bounds = array<i64: 1, 32>}, {pipeline_mode = #tpu.pipeline_mode<synchronous>, transform_indices = @transform_17, window_bounds = array<i64: 32, 64>}, {pipeline_mode = #tpu.pipeline_mode<synchronous>, transform_indices = @transform_18, window_bounds = array<i64: 1, 64>}, {pipeline_mode = #tpu.pipeline_mode<synchronous>, transform_indices = @transform_19, window_bounds = array<i64: 64, 32>}, {pipeline_mode = #tpu.pipeline_mode<synchronous>, transform_indices = @transform_20, window_bounds = array<i64: 1, 32>}, {pipeline_mode = #tpu.pipeline_mode<synchronous>, transform_indices = @transform_21, window_bounds = array<i64: 1, 32>}, {pipeline_mode = #tpu.pipeline_mode<synchronous>, transform_indices = @transform_22, window_bounds = array<i64: 1, 32>}, {transform_indices = @transform_23, window_bounds = array<i64: 2, 8, 32>}]} {
    %c0 = arith.constant 0 : index
    %c0_0 = arith.constant 0 : index
    %c0_1 = arith.constant 0 : index
    %0 = vector.load %arg1[%c0, %c0_0, %c0_1] : memref<2x8x32xbf16, #tpu.memory_space<vmem>>, vector<2x8x32xbf16>
    %1 = vector.shape_cast %0 : vector<2x8x32xbf16> to vector<16x32xbf16>
    %c0_2 = arith.constant 0 : index
    %c0_3 = arith.constant 0 : index
    %c0_4 = arith.constant 0 : index
    %2 = vector.load %arg2[%c0_2, %c0_3, %c0_4] : memref<2x8x32xbf16, #tpu.memory_space<vmem>>, vector<2x8x32xbf16>
    %3 = vector.shape_cast %2 : vector<2x8x32xbf16> to vector<16x32xbf16>
    %4 = arith.extf %1 : vector<16x32xbf16> to vector<16x32xf32>
    %5 = tpu.iota {dimensions = array<i32: 0>} : vector<8x8xi32>
    %6 = tpu.iota {dimensions = array<i32: 1>} : vector<8x8xi32>
    %7 = arith.cmpi sle, %6, %5 : vector<8x8xi32>
    %cst = arith.constant 0.000000e+00 : f32
    %cst_5 = arith.constant -1.000000e+09 : f32
    %8 = vector.broadcast %cst : f32 to vector<8x8xf32>
    %9 = vector.broadcast %cst_5 : f32 to vector<8x8xf32>
    %10 = arith.select %7, %8, %9 : vector<8x8xi1>, vector<8x8xf32>
    %c0_6 = arith.constant 0 : index
    %c0_7 = arith.constant 0 : index
    %c0_8 = arith.constant 0 : index
    %11 = vector.load %arg3[%c0_6, %c0_7, %c0_8] : memref<2x1x8xf32, #tpu.memory_space<vmem>>, vector<2x1x8xf32>
    %cst_9 = arith.constant 1.000000e+00 : f32
    %12 = vector.broadcast %cst_9 : f32 to vector<2x1x8xf32>
    %13 = arith.subf %12, %11 : vector<2x1x8xf32>
    %cst_10 = arith.constant -1.000000e+09 : f32
    %14 = vector.broadcast %cst_10 : f32 to vector<2x1x8xf32>
    %15 = arith.mulf %13, %14 : vector<2x1x8xf32>
    %16 = vector.shape_cast %15 : vector<2x1x8xf32> to vector<2x1x1x8xf32>
    %c0_11 = arith.constant 0 : index
    %c0_12 = arith.constant 0 : index
    %17 = vector.load %arg4[%c0_11, %c0_12] : memref<32x96xbf16, #tpu.memory_space<vmem>>, vector<32x96xbf16>
    %cst_13 = arith.constant dense<0.000000e+00> : vector<16x96xf32>
    %18 = tpu.matmul %1, %17, %cst_13 {dimension_numbers = #tpu.dot_dimension_numbers<[1], [0], [0], [1], [0, 0, 1, 1], [], []>} : vector<16x32xbf16>, vector<32x96xbf16>, vector<16x96xf32> -> vector<16x96xf32>
    %c0_14 = arith.constant 0 : index
    %c0_15 = arith.constant 0 : index
    %19 = vector.load %arg5[%c0_14, %c0_15] : memref<1x96xf32, #tpu.memory_space<vmem>>, vector<1x96xf32>
    %20 = vector.broadcast %19 : vector<1x96xf32> to vector<16x96xf32>
    %21 = arith.addf %18, %20 : vector<16x96xf32>
    %22 = vector.extract_strided_slice %21 {offsets = [0, 0], sizes = [16, 32], strides = [1, 1]} : vector<16x96xf32> to vector<16x32xf32>
    %23 = vector.extract_strided_slice %21 {offsets = [0, 32], sizes = [16, 32], strides = [1, 1]} : vector<16x96xf32> to vector<16x32xf32>
    %24 = vector.extract_strided_slice %21 {offsets = [0, 64], sizes = [16, 32], strides = [1, 1]} : vector<16x96xf32> to vector<16x32xf32>
    %c0_16 = arith.constant 0 : index
    %c0_17 = arith.constant 0 : index
    %25 = vector.load %arg6[%c0_16, %c0_17] : memref<32x32xbf16, #tpu.memory_space<vmem>>, vector<32x32xbf16>
    %c0_18 = arith.constant 0 : index
    %c0_19 = arith.constant 0 : index
    %26 = vector.load %arg7[%c0_18, %c0_19] : memref<1x32xf32, #tpu.memory_space<vmem>>, vector<1x32xf32>
    %27 = arith.truncf %22 : vector<16x32xf32> to vector<16x32xbf16>
    %28 = vector.shape_cast %27 : vector<16x32xbf16> to vector<2x8x4x8xbf16>
    %29 = tpu.transpose %28, [0, 2, 1, 3] : vector<2x8x4x8xbf16> -> vector<2x4x8x8xbf16>
    %30 = vector.shape_cast %29 : vector<2x4x8x8xbf16> to vector<8x8x8xbf16>
    %31 = arith.truncf %23 : vector<16x32xf32> to vector<16x32xbf16>
    %32 = vector.shape_cast %31 : vector<16x32xbf16> to vector<2x8x4x8xbf16>
    %33 = tpu.transpose %32, [0, 2, 1, 3] : vector<2x8x4x8xbf16> -> vector<2x4x8x8xbf16>
    %34 = vector.shape_cast %33 : vector<2x4x8x8xbf16> to vector<8x8x8xbf16>
    %35 = arith.truncf %24 : vector<16x32xf32> to vector<16x32xbf16>
    %36 = vector.shape_cast %35 : vector<16x32xbf16> to vector<2x8x4x8xbf16>
    %37 = tpu.transpose %36, [0, 2, 1, 3] : vector<2x8x4x8xbf16> -> vector<2x4x8x8xbf16>
    %38 = vector.shape_cast %37 : vector<2x4x8x8xbf16> to vector<8x8x8xbf16>
    "tpu.trace_start"() <{level = 10 : i32, message = "bqd,bkd->bqk"}> : () -> ()
    %cst_20 = arith.constant dense<0.000000e+00> : vector<8x8x8xf32>
    %39 = tpu.matmul %30, %34, %cst_20 {dimension_numbers = #tpu.dot_dimension_numbers<[2], [2], [1], [1], [0, 0, 0, 1, 1, 1], [0], [0]>} : vector<8x8x8xbf16>, vector<8x8x8xbf16>, vector<8x8x8xf32> -> vector<8x8x8xf32>
    "tpu.trace_stop"() : () -> ()
    %40 = vector.shape_cast %39 : vector<8x8x8xf32> to vector<2x4x8x8xf32>
    %41 = vector.shape_cast %10 : vector<8x8xf32> to vector<1x1x8x8xf32>
    %42 = vector.broadcast %41 : vector<1x1x8x8xf32> to vector<2x4x8x8xf32>
    %43 = arith.addf %40, %42 : vector<2x4x8x8xf32>
    %cst_21 = arith.constant dense<0xFF800000> : vector<2x4x8xf32>
    %44 = vector.multi_reduction <maximumf>, %43, %cst_21 [3] : vector<2x4x8x8xf32> to vector<2x4x8xf32>
    %45 = vector.shape_cast %44 : vector<2x4x8xf32> to vector<2x4x8x1xf32>
    %46 = vector.broadcast %45 : vector<2x4x8x1xf32> to vector<2x4x8x8xf32>
    %47 = arith.subf %43, %46 : vector<2x4x8x8xf32>
    %48 = math.exp %47 : vector<2x4x8x8xf32>
    %cst_22 = arith.constant dense<0.000000e+00> : vector<2x4x8xf32>
    %49 = vector.multi_reduction <add>, %48, %cst_22 [3] : vector<2x4x8x8xf32> to vector<2x4x8xf32>
    %50 = vector.shape_cast %49 : vector<2x4x8xf32> to vector<2x4x8x1xf32>
    %51 = tpu.reciprocal %50 {approx = true} : vector<2x4x8x1xf32> -> vector<2x4x8x1xf32>
    %52 = vector.broadcast %51 : vector<2x4x8x1xf32> to vector<2x4x8x8xf32>
    %53 = arith.mulf %48, %52 : vector<2x4x8x8xf32>
    %54 = vector.shape_cast %53 : vector<2x4x8x8xf32> to vector<8x8x8xf32>
    %55 = arith.truncf %54 : vector<8x8x8xf32> to vector<8x8x8xbf16>
    "tpu.trace_start"() <{level = 10 : i32, message = "bqk,bkd->bqd"}> : () -> ()
    %cst_23 = arith.constant dense<0.000000e+00> : vector<8x8x8xf32>
    %56 = tpu.matmul %55, %38, %cst_23 {dimension_numbers = #tpu.dot_dimension_numbers<[2], [1], [1], [2], [0, 0, 0, 1, 1, 2], [0], [0]>} : vector<8x8x8xbf16>, vector<8x8x8xbf16>, vector<8x8x8xf32> -> vector<8x8x8xf32>
    "tpu.trace_stop"() : () -> ()
    %57 = arith.truncf %56 : vector<8x8x8xf32> to vector<8x8x8xbf16>
    %58 = vector.shape_cast %57 : vector<8x8x8xbf16> to vector<2x4x8x8xbf16>
    %59 = tpu.transpose %58, [0, 2, 1, 3] : vector<2x4x8x8xbf16> -> vector<2x8x4x8xbf16>
    %60 = vector.shape_cast %59 : vector<2x8x4x8xbf16> to vector<16x32xbf16>
    %cst_24 = arith.constant dense<0.000000e+00> : vector<16x32xf32>
    %61 = tpu.matmul %60, %25, %cst_24 {dimension_numbers = #tpu.dot_dimension_numbers<[1], [0], [0], [1], [0, 0, 1, 1], [], []>} : vector<16x32xbf16>, vector<32x32xbf16>, vector<16x32xf32> -> vector<16x32xf32>
    %62 = vector.broadcast %26 : vector<1x32xf32> to vector<16x32xf32>
    %63 = arith.addf %61, %62 : vector<16x32xf32>
    %c0_25 = arith.constant 0 : index
    %c0_26 = arith.constant 0 : index
    %64 = vector.load %arg8[%c0_25, %c0_26] : memref<1x32xf32, #tpu.memory_space<vmem>>, vector<1x32xf32>
    %c0_27 = arith.constant 0 : index
    %c0_28 = arith.constant 0 : index
    %65 = vector.load %arg9[%c0_27, %c0_28] : memref<1x32xf32, #tpu.memory_space<vmem>>, vector<1x32xf32>
    %66 = arith.addf %4, %63 : vector<16x32xf32>
    %cst_29 = arith.constant dense<0.000000e+00> : vector<16xf32>
    %67 = vector.multi_reduction <add>, %66, %cst_29 [1] : vector<16x32xf32> to vector<16xf32>
    %68 = vector.shape_cast %67 : vector<16xf32> to vector<16x1xf32>
    %cst_30 = arith.constant 3.200000e+01 : f32
    %69 = vector.broadcast %cst_30 : f32 to vector<16x1xf32>
    %70 = arith.divf %68, %69 : vector<16x1xf32>
    %71 = arith.mulf %66, %66 : vector<16x32xf32>
    %cst_31 = arith.constant dense<0.000000e+00> : vector<16xf32>
    %72 = vector.multi_reduction <add>, %71, %cst_31 [1] : vector<16x32xf32> to vector<16xf32>
    %73 = vector.shape_cast %72 : vector<16xf32> to vector<16x1xf32>
    %cst_32 = arith.constant 3.200000e+01 : f32
    %74 = vector.broadcast %cst_32 : f32 to vector<16x1xf32>
    %75 = arith.divf %73, %74 : vector<16x1xf32>
    %76 = arith.mulf %70, %70 : vector<16x1xf32>
    %77 = arith.subf %75, %76 : vector<16x1xf32>
    %78 = vector.broadcast %70 : vector<16x1xf32> to vector<16x32xf32>
    %79 = arith.subf %66, %78 : vector<16x32xf32>
    %80 = vector.broadcast %64 : vector<1x32xf32> to vector<16x32xf32>
    %81 = arith.mulf %80, %79 : vector<16x32xf32>
    %cst_33 = arith.constant 9.99999997E-7 : f32
    %82 = vector.broadcast %cst_33 : f32 to vector<16x1xf32>
    %83 = arith.addf %77, %82 : vector<16x1xf32>
    %84 = math.rsqrt %83 : vector<16x1xf32>
    %85 = vector.broadcast %84 : vector<16x1xf32> to vector<16x32xf32>
    %86 = arith.mulf %81, %85 : vector<16x32xf32>
    %87 = vector.broadcast %65 : vector<1x32xf32> to vector<16x32xf32>
    %88 = arith.addf %86, %87 : vector<16x32xf32>
    %89 = arith.truncf %88 : vector<16x32xf32> to vector<16x32xbf16>
    %c0_34 = arith.constant 0 : index
    %c0_35 = arith.constant 0 : index
    %90 = vector.load %arg10[%c0_34, %c0_35] : memref<32x32xbf16, #tpu.memory_space<vmem>>, vector<32x32xbf16>
    %cst_36 = arith.constant dense<0.000000e+00> : vector<16x32xf32>
    %91 = tpu.matmul %3, %90, %cst_36 {dimension_numbers = #tpu.dot_dimension_numbers<[1], [0], [0], [1], [0, 0, 1, 1], [], []>} : vector<16x32xbf16>, vector<32x32xbf16>, vector<16x32xf32> -> vector<16x32xf32>
    %c0_37 = arith.constant 0 : index
    %c0_38 = arith.constant 0 : index
    %92 = vector.load %arg11[%c0_37, %c0_38] : memref<1x32xf32, #tpu.memory_space<vmem>>, vector<1x32xf32>
    %93 = vector.broadcast %92 : vector<1x32xf32> to vector<16x32xf32>
    %94 = arith.addf %91, %93 : vector<16x32xf32>
    %c0_39 = arith.constant 0 : index
    %c0_40 = arith.constant 0 : index
    %95 = vector.load %arg12[%c0_39, %c0_40] : memref<32x64xbf16, #tpu.memory_space<vmem>>, vector<32x64xbf16>
    %cst_41 = arith.constant dense<0.000000e+00> : vector<16x64xf32>
    %96 = tpu.matmul %89, %95, %cst_41 {dimension_numbers = #tpu.dot_dimension_numbers<[1], [0], [0], [1], [0, 0, 1, 1], [], []>} : vector<16x32xbf16>, vector<32x64xbf16>, vector<16x64xf32> -> vector<16x64xf32>
    %c0_42 = arith.constant 0 : index
    %c0_43 = arith.constant 0 : index
    %97 = vector.load %arg13[%c0_42, %c0_43] : memref<1x64xf32, #tpu.memory_space<vmem>>, vector<1x64xf32>
    %98 = vector.broadcast %97 : vector<1x64xf32> to vector<16x64xf32>
    %99 = arith.addf %96, %98 : vector<16x64xf32>
    %100 = vector.extract_strided_slice %99 {offsets = [0, 0], sizes = [16, 32], strides = [1, 1]} : vector<16x64xf32> to vector<16x32xf32>
    %101 = vector.extract_strided_slice %99 {offsets = [0, 32], sizes = [16, 32], strides = [1, 1]} : vector<16x64xf32> to vector<16x32xf32>
    %c0_44 = arith.constant 0 : index
    %c0_45 = arith.constant 0 : index
    %102 = vector.load %arg14[%c0_44, %c0_45] : memref<32x32xbf16, #tpu.memory_space<vmem>>, vector<32x32xbf16>
    %c0_46 = arith.constant 0 : index
    %c0_47 = arith.constant 0 : index
    %103 = vector.load %arg15[%c0_46, %c0_47] : memref<1x32xf32, #tpu.memory_space<vmem>>, vector<1x32xf32>
    %104 = arith.truncf %94 : vector<16x32xf32> to vector<16x32xbf16>
    %105 = vector.shape_cast %104 : vector<16x32xbf16> to vector<2x8x4x8xbf16>
    %106 = tpu.transpose %105, [0, 2, 1, 3] : vector<2x8x4x8xbf16> -> vector<2x4x8x8xbf16>
    %107 = vector.shape_cast %106 : vector<2x4x8x8xbf16> to vector<8x8x8xbf16>
    %108 = arith.truncf %100 : vector<16x32xf32> to vector<16x32xbf16>
    %109 = vector.shape_cast %108 : vector<16x32xbf16> to vector<2x8x4x8xbf16>
    %110 = tpu.transpose %109, [0, 2, 1, 3] : vector<2x8x4x8xbf16> -> vector<2x4x8x8xbf16>
    %111 = vector.shape_cast %110 : vector<2x4x8x8xbf16> to vector<8x8x8xbf16>
    %112 = arith.truncf %101 : vector<16x32xf32> to vector<16x32xbf16>
    %113 = vector.shape_cast %112 : vector<16x32xbf16> to vector<2x8x4x8xbf16>
    %114 = tpu.transpose %113, [0, 2, 1, 3] : vector<2x8x4x8xbf16> -> vector<2x4x8x8xbf16>
    %115 = vector.shape_cast %114 : vector<2x4x8x8xbf16> to vector<8x8x8xbf16>
    "tpu.trace_start"() <{level = 10 : i32, message = "bqd,bkd->bqk"}> : () -> ()
    %cst_48 = arith.constant dense<0.000000e+00> : vector<8x8x8xf32>
    %116 = tpu.matmul %107, %111, %cst_48 {dimension_numbers = #tpu.dot_dimension_numbers<[2], [2], [1], [1], [0, 0, 0, 1, 1, 1], [0], [0]>} : vector<8x8x8xbf16>, vector<8x8x8xbf16>, vector<8x8x8xf32> -> vector<8x8x8xf32>
    "tpu.trace_stop"() : () -> ()
    %117 = vector.shape_cast %116 : vector<8x8x8xf32> to vector<2x4x8x8xf32>
    %118 = vector.broadcast %16 : vector<2x1x1x8xf32> to vector<2x4x8x8xf32>
    %119 = arith.addf %117, %118 : vector<2x4x8x8xf32>
    %cst_49 = arith.constant dense<0xFF800000> : vector<2x4x8xf32>
    %120 = vector.multi_reduction <maximumf>, %119, %cst_49 [3] : vector<2x4x8x8xf32> to vector<2x4x8xf32>
    %121 = vector.shape_cast %120 : vector<2x4x8xf32> to vector<2x4x8x1xf32>
    %122 = vector.broadcast %121 : vector<2x4x8x1xf32> to vector<2x4x8x8xf32>
    %123 = arith.subf %119, %122 : vector<2x4x8x8xf32>
    %124 = math.exp %123 : vector<2x4x8x8xf32>
    %cst_50 = arith.constant dense<0.000000e+00> : vector<2x4x8xf32>
    %125 = vector.multi_reduction <add>, %124, %cst_50 [3] : vector<2x4x8x8xf32> to vector<2x4x8xf32>
    %126 = vector.shape_cast %125 : vector<2x4x8xf32> to vector<2x4x8x1xf32>
    %127 = tpu.reciprocal %126 {approx = true} : vector<2x4x8x1xf32> -> vector<2x4x8x1xf32>
    %128 = vector.broadcast %127 : vector<2x4x8x1xf32> to vector<2x4x8x8xf32>
    %129 = arith.mulf %124, %128 : vector<2x4x8x8xf32>
    %130 = vector.shape_cast %129 : vector<2x4x8x8xf32> to vector<8x8x8xf32>
    %131 = arith.truncf %130 : vector<8x8x8xf32> to vector<8x8x8xbf16>
    "tpu.trace_start"() <{level = 10 : i32, message = "bqk,bkd->bqd"}> : () -> ()
    %cst_51 = arith.constant dense<0.000000e+00> : vector<8x8x8xf32>
    %132 = tpu.matmul %131, %115, %cst_51 {dimension_numbers = #tpu.dot_dimension_numbers<[2], [1], [1], [2], [0, 0, 0, 1, 1, 2], [0], [0]>} : vector<8x8x8xbf16>, vector<8x8x8xbf16>, vector<8x8x8xf32> -> vector<8x8x8xf32>
    "tpu.trace_stop"() : () -> ()
    %133 = arith.truncf %132 : vector<8x8x8xf32> to vector<8x8x8xbf16>
    %134 = vector.shape_cast %133 : vector<8x8x8xbf16> to vector<2x4x8x8xbf16>
    %135 = tpu.transpose %134, [0, 2, 1, 3] : vector<2x4x8x8xbf16> -> vector<2x8x4x8xbf16>
    %136 = vector.shape_cast %135 : vector<2x8x4x8xbf16> to vector<16x32xbf16>
    %cst_52 = arith.constant dense<0.000000e+00> : vector<16x32xf32>
    %137 = tpu.matmul %136, %102, %cst_52 {dimension_numbers = #tpu.dot_dimension_numbers<[1], [0], [0], [1], [0, 0, 1, 1], [], []>} : vector<16x32xbf16>, vector<32x32xbf16>, vector<16x32xf32> -> vector<16x32xf32>
    %138 = vector.broadcast %103 : vector<1x32xf32> to vector<16x32xf32>
    %139 = arith.addf %137, %138 : vector<16x32xf32>
    %c0_53 = arith.constant 0 : index
    %c0_54 = arith.constant 0 : index
    %140 = vector.load %arg16[%c0_53, %c0_54] : memref<1x32xf32, #tpu.memory_space<vmem>>, vector<1x32xf32>
    %c0_55 = arith.constant 0 : index
    %c0_56 = arith.constant 0 : index
    %141 = vector.load %arg17[%c0_55, %c0_56] : memref<1x32xf32, #tpu.memory_space<vmem>>, vector<1x32xf32>
    %142 = arith.addf %88, %139 : vector<16x32xf32>
    %cst_57 = arith.constant dense<0.000000e+00> : vector<16xf32>
    %143 = vector.multi_reduction <add>, %142, %cst_57 [1] : vector<16x32xf32> to vector<16xf32>
    %144 = vector.shape_cast %143 : vector<16xf32> to vector<16x1xf32>
    %cst_58 = arith.constant 3.200000e+01 : f32
    %145 = vector.broadcast %cst_58 : f32 to vector<16x1xf32>
    %146 = arith.divf %144, %145 : vector<16x1xf32>
    %147 = arith.mulf %142, %142 : vector<16x32xf32>
    %cst_59 = arith.constant dense<0.000000e+00> : vector<16xf32>
    %148 = vector.multi_reduction <add>, %147, %cst_59 [1] : vector<16x32xf32> to vector<16xf32>
    %149 = vector.shape_cast %148 : vector<16xf32> to vector<16x1xf32>
    %cst_60 = arith.constant 3.200000e+01 : f32
    %150 = vector.broadcast %cst_60 : f32 to vector<16x1xf32>
    %151 = arith.divf %149, %150 : vector<16x1xf32>
    %152 = arith.mulf %146, %146 : vector<16x1xf32>
    %153 = arith.subf %151, %152 : vector<16x1xf32>
    %154 = vector.broadcast %146 : vector<16x1xf32> to vector<16x32xf32>
    %155 = arith.subf %142, %154 : vector<16x32xf32>
    %156 = vector.broadcast %140 : vector<1x32xf32> to vector<16x32xf32>
    %157 = arith.mulf %156, %155 : vector<16x32xf32>
    %cst_61 = arith.constant 9.99999997E-7 : f32
    %158 = vector.broadcast %cst_61 : f32 to vector<16x1xf32>
    %159 = arith.addf %153, %158 : vector<16x1xf32>
    %160 = math.rsqrt %159 : vector<16x1xf32>
    %161 = vector.broadcast %160 : vector<16x1xf32> to vector<16x32xf32>
    %162 = arith.mulf %157, %161 : vector<16x32xf32>
    %163 = vector.broadcast %141 : vector<1x32xf32> to vector<16x32xf32>
    %164 = arith.addf %162, %163 : vector<16x32xf32>
    %165 = arith.truncf %164 : vector<16x32xf32> to vector<16x32xbf16>
    %c0_62 = arith.constant 0 : index
    %c0_63 = arith.constant 0 : index
    %166 = vector.load %arg18[%c0_62, %c0_63] : memref<32x64xbf16, #tpu.memory_space<vmem>>, vector<32x64xbf16>
    %cst_64 = arith.constant dense<0.000000e+00> : vector<16x64xf32>
    %167 = tpu.matmul %165, %166, %cst_64 {dimension_numbers = #tpu.dot_dimension_numbers<[1], [0], [0], [1], [0, 0, 1, 1], [], []>} : vector<16x32xbf16>, vector<32x64xbf16>, vector<16x64xf32> -> vector<16x64xf32>
    %c0_65 = arith.constant 0 : index
    %c0_66 = arith.constant 0 : index
    %168 = vector.load %arg19[%c0_65, %c0_66] : memref<1x64xf32, #tpu.memory_space<vmem>>, vector<1x64xf32>
    %169 = vector.broadcast %168 : vector<1x64xf32> to vector<16x64xf32>
    %170 = arith.addf %167, %169 : vector<16x64xf32>
    %cst_67 = arith.constant 0.000000e+00 : f32
    %171 = vector.broadcast %cst_67 : f32 to vector<16x64xf32>
    %172 = arith.maximumf %170, %171 : vector<16x64xf32>
    %173 = arith.truncf %172 : vector<16x64xf32> to vector<16x64xbf16>
    %c0_68 = arith.constant 0 : index
    %c0_69 = arith.constant 0 : index
    %174 = vector.load %arg20[%c0_68, %c0_69] : memref<64x32xbf16, #tpu.memory_space<vmem>>, vector<64x32xbf16>
    %cst_70 = arith.constant dense<0.000000e+00> : vector<16x32xf32>
    %175 = tpu.matmul %173, %174, %cst_70 {dimension_numbers = #tpu.dot_dimension_numbers<[1], [0], [0], [1], [0, 0, 1, 1], [], []>} : vector<16x64xbf16>, vector<64x32xbf16>, vector<16x32xf32> -> vector<16x32xf32>
    %c0_71 = arith.constant 0 : index
    %c0_72 = arith.constant 0 : index
    %176 = vector.load %arg21[%c0_71, %c0_72] : memref<1x32xf32, #tpu.memory_space<vmem>>, vector<1x32xf32>
    %177 = vector.broadcast %176 : vector<1x32xf32> to vector<16x32xf32>
    %178 = arith.addf %175, %177 : vector<16x32xf32>
    %c0_73 = arith.constant 0 : index
    %c0_74 = arith.constant 0 : index
    %179 = vector.load %arg22[%c0_73, %c0_74] : memref<1x32xf32, #tpu.memory_space<vmem>>, vector<1x32xf32>
    %c0_75 = arith.constant 0 : index
    %c0_76 = arith.constant 0 : index
    %180 = vector.load %arg23[%c0_75, %c0_76] : memref<1x32xf32, #tpu.memory_space<vmem>>, vector<1x32xf32>
    %181 = arith.addf %164, %178 : vector<16x32xf32>
    %cst_77 = arith.constant dense<0.000000e+00> : vector<16xf32>
    %182 = vector.multi_reduction <add>, %181, %cst_77 [1] : vector<16x32xf32> to vector<16xf32>
    %183 = vector.shape_cast %182 : vector<16xf32> to vector<16x1xf32>
    %cst_78 = arith.constant 3.200000e+01 : f32
    %184 = vector.broadcast %cst_78 : f32 to vector<16x1xf32>
    %185 = arith.divf %183, %184 : vector<16x1xf32>
    %186 = arith.mulf %181, %181 : vector<16x32xf32>
    %cst_79 = arith.constant dense<0.000000e+00> : vector<16xf32>
    %187 = vector.multi_reduction <add>, %186, %cst_79 [1] : vector<16x32xf32> to vector<16xf32>
    %188 = vector.shape_cast %187 : vector<16xf32> to vector<16x1xf32>
    %cst_80 = arith.constant 3.200000e+01 : f32
    %189 = vector.broadcast %cst_80 : f32 to vector<16x1xf32>
    %190 = arith.divf %188, %189 : vector<16x1xf32>
    %191 = arith.mulf %185, %185 : vector<16x1xf32>
    %192 = arith.subf %190, %191 : vector<16x1xf32>
    %193 = vector.broadcast %185 : vector<16x1xf32> to vector<16x32xf32>
    %194 = arith.subf %181, %193 : vector<16x32xf32>
    %195 = vector.broadcast %179 : vector<1x32xf32> to vector<16x32xf32>
    %196 = arith.mulf %195, %194 : vector<16x32xf32>
    %cst_81 = arith.constant 9.99999997E-7 : f32
    %197 = vector.broadcast %cst_81 : f32 to vector<16x1xf32>
    %198 = arith.addf %192, %197 : vector<16x1xf32>
    %199 = math.rsqrt %198 : vector<16x1xf32>
    %200 = vector.broadcast %199 : vector<16x1xf32> to vector<16x32xf32>
    %201 = arith.mulf %196, %200 : vector<16x32xf32>
    %202 = vector.broadcast %180 : vector<1x32xf32> to vector<16x32xf32>
    %203 = arith.addf %201, %202 : vector<16x32xf32>
    %204 = vector.shape_cast %203 : vector<16x32xf32> to vector<2x8x32xf32>
    %c0_82 = arith.constant 0 : index
    %c0_83 = arith.constant 0 : index
    %c0_84 = arith.constant 0 : index
    %205 = vector.load %arg24[%c0_82, %c0_83, %c0_84] : memref<2x8x32xf32, #tpu.memory_space<vmem>>, vector<2x8x32xf32>
    tpu.vector_store %arg24[%c0_82, %c0_83, %c0_84], %204 {strides = array<i32>} : memref<2x8x32xf32, #tpu.memory_space<vmem>>, vector<2x8x32xf32>,
    return
  }
  func.func @transform_0(%arg0: i32) -> (i32, i32, i32) {
    %c0_i32 = arith.constant 0 : i32
    %c0_i32_0 = arith.constant 0 : i32
    %c0_i32_1 = arith.constant 0 : i32
    return %arg0, %c0_i32, %c0_i32_0 : i32, i32, i32
  }
  func.func @transform_1(%arg0: i32) -> (i32, i32, i32) {
    %c0_i32 = arith.constant 0 : i32
    %c0_i32_0 = arith.constant 0 : i32
    %c0_i32_1 = arith.constant 0 : i32
    return %arg0, %c0_i32, %c0_i32_0 : i32, i32, i32
  }
  func.func @transform_2(%arg0: i32) -> (i32, i32, i32) {
    %c0_i32 = arith.constant 0 : i32
    %c0_i32_0 = arith.constant 0 : i32
    %c0_i32_1 = arith.constant 0 : i32
    return %arg0, %c0_i32, %c0_i32_0 : i32, i32, i32
  }
  func.func @transform_3(%arg0: i32) -> (i32, i32) {
    %c0_i32 = arith.constant 0 : i32
    %c0_i32_0 = arith.constant 0 : i32
    %c0_i32_1 = arith.constant 0 : i32
    return %c0_i32, %c0_i32_0 : i32, i32
  }
  func.func @transform_4(%arg0: i32) -> (i32, i32) {
    %c0_i32 = arith.constant 0 : i32
    %c0_i32_0 = arith.constant 0 : i32
    %c0_i32_1 = arith.constant 0 : i32
    return %c0_i32, %c0_i32_0 : i32, i32
  }
  func.func @transform_5(%arg0: i32) -> (i32, i32) {
    %c0_i32 = arith.constant 0 : i32
    %c0_i32_0 = arith.constant 0 : i32
    %c0_i32_1 = arith.constant 0 : i32
    return %c0_i32, %c0_i32_0 : i32, i32
  }
  func.func @transform_6(%arg0: i32) -> (i32, i32) {
    %c0_i32 = arith.constant 0 : i32
    %c0_i32_0 = arith.constant 0 : i32
    %c0_i32_1 = arith.constant 0 : i32
    return %c0_i32, %c0_i32_0 : i32, i32
  }
  func.func @transform_7(%arg0: i32) -> (i32, i32) {
    %c0_i32 = arith.constant 0 : i32
    %c0_i32_0 = arith.constant 0 : i32
    %c0_i32_1 = arith.constant 0 : i32
    return %c0_i32, %c0_i32_0 : i32, i32
  }
  func.func @transform_8(%arg0: i32) -> (i32, i32) {
    %c0_i32 = arith.constant 0 : i32
    %c0_i32_0 = arith.constant 0 : i32
    %c0_i32_1 = arith.constant 0 : i32
    return %c0_i32, %c0_i32_0 : i32, i32
  }
  func.func @transform_9(%arg0: i32) -> (i32, i32) {
    %c0_i32 = arith.constant 0 : i32
    %c0_i32_0 = arith.constant 0 : i32
    %c0_i32_1 = arith.constant 0 : i32
    return %c0_i32, %c0_i32_0 : i32, i32
  }
  func.func @transform_10(%arg0: i32) -> (i32, i32) {
    %c0_i32 = arith.constant 0 : i32
    %c0_i32_0 = arith.constant 0 : i32
    %c0_i32_1 = arith.constant 0 : i32
    return %c0_i32, %c0_i32_0 : i32, i32
  }
  func.func @transform_11(%arg0: i32) -> (i32, i32) {
    %c0_i32 = arith.constant 0 : i32
    %c0_i32_0 = arith.constant 0 : i32
    %c0_i32_1 = arith.constant 0 : i32
    return %c0_i32, %c0_i32_0 : i32, i32
  }
  func.func @transform_12(%arg0: i32) -> (i32, i32) {
    %c0_i32 = arith.constant 0 : i32
    %c0_i32_0 = arith.constant 0 : i32
    %c0_i32_1 = arith.constant 0 : i32
    return %c0_i32, %c0_i32_0 : i32, i32
  }
  func.func @transform_13(%arg0: i32) -> (i32, i32) {
    %c0_i32 = arith.constant 0 : i32
    %c0_i32_0 = arith.constant 0 : i32
    %c0_i32_1 = arith.constant 0 : i32
    return %c0_i32, %c0_i32_0 : i32, i32
  }
  func.func @transform_14(%arg0: i32) -> (i32, i32) {
    %c0_i32 = arith.constant 0 : i32
    %c0_i32_0 = arith.constant 0 : i32
    %c0_i32_1 = arith.constant 0 : i32
    return %c0_i32, %c0_i32_0 : i32, i32
  }
  func.func @transform_15(%arg0: i32) -> (i32, i32) {
    %c0_i32 = arith.constant 0 : i32
    %c0_i32_0 = arith.constant 0 : i32
    %c0_i32_1 = arith.constant 0 : i32
    return %c0_i32, %c0_i32_0 : i32, i32
  }
  func.func @transform_16(%arg0: i32) -> (i32, i32) {
    %c0_i32 = arith.constant 0 : i32
    %c0_i32_0 = arith.constant 0 : i32
    %c0_i32_1 = arith.constant 0 : i32
    return %c0_i32, %c0_i32_0 : i32, i32
  }
  func.func @transform_17(%arg0: i32) -> (i32, i32) {
    %c0_i32 = arith.constant 0 : i32
    %c0_i32_0 = arith.constant 0 : i32
    %c0_i32_1 = arith.constant 0 : i32
    return %c0_i32, %c0_i32_0 : i32, i32
  }
  func.func @transform_18(%arg0: i32) -> (i32, i32) {
    %c0_i32 = arith.constant 0 : i32
    %c0_i32_0 = arith.constant 0 : i32
    %c0_i32_1 = arith.constant 0 : i32
    return %c0_i32, %c0_i32_0 : i32, i32
  }
  func.func @transform_19(%arg0: i32) -> (i32, i32) {
    %c0_i32 = arith.constant 0 : i32
    %c0_i32_0 = arith.constant 0 : i32
    %c0_i32_1 = arith.constant 0 : i32
    return %c0_i32, %c0_i32_0 : i32, i32
  }
  func.func @transform_20(%arg0: i32) -> (i32, i32) {
    %c0_i32 = arith.constant 0 : i32
    %c0_i32_0 = arith.constant 0 : i32
    %c0_i32_1 = arith.constant 0 : i32
    return %c0_i32, %c0_i32_0 : i32, i32
  }
  func.func @transform_21(%arg0: i32) -> (i32, i32) {
    %c0_i32 = arith.constant 0 : i32
    %c0_i32_0 = arith.constant 0 : i32
    %c0_i32_1 = arith.constant 0 : i32
    return %c0_i32, %c0_i32_0 : i32, i32
  }
  func.func @transform_22(%arg0: i32) -> (i32, i32) {
    %c0_i32 = arith.constant 0 : i32
    %c0_i32_0 = arith.constant 0 : i32
    %c0_i32_1 = arith.constant 0 : i32
    return %c0_i32, %c0_i32_0 : i32, i32
  }
  func.func @transform_23(%arg0: i32) -> (i32, i32, i32) {
    %c0_i32 = arith.constant 0 : i32
    %c0_i32_0 = arith.constant 0 : i32
    %c0_i32_1 = arith.constant 0 : i32
    return %arg0, %c0_i32, %c0_i32_0 : i32, i32, i32
  }
}

</mosaic_0001>

<llo_original>
// kernel: decoder_forward.1
$region0: #{decoder_forward.1}
  #allocation0 [shape = 'u32[]', space=smem, size = 0x4, offset = 0x4, fixed_abs, tag = 'smem constant byte address 0x4 - core index']
  #allocation1 [shape = 'u32[144,128]{1,0:T(1,128)}', space=vmem, size = 0x12000, scoped, tag = 'internal scratch']
  %s0 = inlined_call_operand.vmem [shape: bf16[4,8,32], index: 0, kind: input, shape index: {}]
  %s1 = inlined_call_operand.vmem [shape: bf16[4,8,32], index: 1, kind: input, shape index: {}]
  %s2 = inlined_call_operand.vmem [shape: f32[4,1,8], index: 2, kind: input, shape index: {}]
  %s3 = inlined_call_operand.vmem [shape: bf16[32,96], index: 3, kind: input, shape index: {}]
  %s4 = inlined_call_operand.vmem [shape: f32[1,96], index: 4, kind: input, shape index: {}]
  %s5 = inlined_call_operand.vmem [shape: bf16[32,32], index: 5, kind: input, shape index: {}]
  %s6 = inlined_call_operand.vmem [shape: f32[1,32], index: 6, kind: input, shape index: {}]
  %s7 = inlined_call_operand.vmem [shape: f32[1,32], index: 7, kind: input, shape index: {}]
  %s8 = inlined_call_operand.vmem [shape: f32[1,32], index: 8, kind: input, shape index: {}]
  %s9 = inlined_call_operand.vmem [shape: bf16[32,32], index: 9, kind: input, shape index: {}]
  %s10 = inlined_call_operand.vmem [shape: f32[1,32], index: 10, kind: input, shape index: {}]
  %s11 = inlined_call_operand.vmem [shape: bf16[32,64], index: 11, kind: input, shape index: {}]
  %s12 = inlined_call_operand.vmem [shape: f32[1,64], index: 12, kind: input, shape index: {}]
  %s13 = inlined_call_operand.vmem [shape: bf16[32,32], index: 13, kind: input, shape index: {}]
  %s14 = inlined_call_operand.vmem [shape: f32[1,32], index: 14, kind: input, shape index: {}]
  %s15 = inlined_call_operand.vmem [shape: f32[1,32], index: 15, kind: input, shape index: {}]
  %s16 = inlined_call_operand.vmem [shape: f32[1,32], index: 16, kind: input, shape index: {}]
  %s17 = inlined_call_operand.vmem [shape: bf16[32,64], index: 17, kind: input, shape index: {}]
  %s18 = inlined_call_operand.vmem [shape: f32[1,64], index: 18, kind: input, shape index: {}]
  %s19 = inlined_call_operand.vmem [shape: bf16[64,32], index: 19, kind: input, shape index: {}]
  %s20 = inlined_call_operand.vmem [shape: f32[1,32], index: 20, kind: input, shape index: {}]
  %s21 = inlined_call_operand.vmem [shape: f32[1,32], index: 21, kind: input, shape index: {}]
  %s22 = inlined_call_operand.vmem [shape: f32[1,32], index: 22, kind: input, shape index: {}]
  %s23 = inlined_call_operand.hbm [shape: f32[4,8,32], index: 23, kind: output, shape index: {}]
  %s24 = sld [smem:[#allocation0]]
  $region125: #{decoder_forward.1} parent=0
    _
  %s26 = ssub.s32 1, %s24
  %s27 = scalar_select 0, %s26, %s24
  $region1: #{decoder_forward.1} parent=0
    #allocation2 [shape = 'u8[16384]{0}', space=vmem, size = 0x4000, scoped, tag = 'output window, operand 0']
    #allocation3 [shape = 's32[2]{0}', space=sflag, size = 0x8, scoped, tag = 'scoped memory for decoder_forward.1']
    %28 = vsyncpa [#allocation3], 0
    %s29 = scalar_lea.sflag [#allocation3], 1
    %30 = vsyncpa %s29, 0
    loop: start=0, step=1, limit=4
    $region2: #{decoder_forward.1} parent=1 // loop_pre_header
      _
    $region3: #{decoder_forward.1} parent=1 // loop_header
      %s32 = sphi 0, %s36
      %p33 = scmp.ge.s32.totalorder %s32, 4
      %s42 = sphi 0, %s44
      %s45 = sphi 0, %s42
      %s46 = sphi 0, %s45
      %s62 = sphi 0, %s46
      %s68 = sphi 0, %s70
      %s71 = sphi 0, %s68
      %s72 = sphi 0, %s71
      %s88 = sphi 0, %s72
      %s94 = sphi 0, %s96
      %s97 = sphi 0, %s94
      %s98 = sphi 0, %s97
      %s114 = sphi 0, %s98
      %s118 = sphi 0, %s118
      %s120 = sphi 0, %s118
      %s121 = sphi 0, %s120
      %s135 = sphi 0, %s121
      %s139 = sphi 0, %s139
      %s141 = sphi 0, %s139
      %s142 = sphi 0, %s141
      %s156 = sphi 0, %s142
      %s160 = sphi 0, %s160
      %s162 = sphi 0, %s160
      %s163 = sphi 0, %s162
      %s177 = sphi 0, %s163
      %s181 = sphi 0, %s181
      %s183 = sphi 0, %s181
      %s184 = sphi 0, %s183
      %s198 = sphi 0, %s184
      %s202 = sphi 0, %s202
      %s204 = sphi 0, %s202
      %s205 = sphi 0, %s204
      %s219 = sphi 0, %s205
      %s223 = sphi 0, %s223
      %s225 = sphi 0, %s223
      %s226 = sphi 0, %s225
      %s240 = sphi 0, %s226
      %s244 = sphi 0, %s244
      %s246 = sphi 0, %s244
      %s247 = sphi 0, %s246
      %s261 = sphi 0, %s247
      %s265 = sphi 0, %s265
      %s267 = sphi 0, %s265
      %s268 = sphi 0, %s267
      %s282 = sphi 0, %s268
      %s286 = sphi 0, %s286
      %s288 = sphi 0, %s286
      %s289 = sphi 0, %s288
      %s303 = sphi 0, %s289
      %s307 = sphi 0, %s307
      %s309 = sphi 0, %s307
      %s310 = sphi 0, %s309
      %s324 = sphi 0, %s310
      %s328 = sphi 0, %s328
      %s330 = sphi 0, %s328
      %s331 = sphi 0, %s330
      %s345 = sphi 0, %s331
      %s349 = sphi 0, %s349
      %s351 = sphi 0, %s349
      %s352 = sphi 0, %s351
      %s366 = sphi 0, %s352
      %s370 = sphi 0, %s370
      %s372 = sphi 0, %s370
      %s373 = sphi 0, %s372
      %s387 = sphi 0, %s373
      %s391 = sphi 0, %s391
      %s393 = sphi 0, %s391
      %s394 = sphi 0, %s393
      %s408 = sphi 0, %s394
      %s412 = sphi 0, %s412
      %s414 = sphi 0, %s412
      %s415 = sphi 0, %s414
      %s429 = sphi 0, %s415
      %s433 = sphi 0, %s433
      %s435 = sphi 0, %s433
      %s436 = sphi 0, %s435
      %s450 = sphi 0, %s436
      %s454 = sphi 0, %s454
      %s456 = sphi 0, %s454
      %s457 = sphi 0, %s456
      %s471 = sphi 0, %s457
      %s475 = sphi 0, %s475
      %s477 = sphi 0, %s475
      %s478 = sphi 0, %s477
      %s492 = sphi 0, %s478
      %s496 = sphi 0, %s496
      %s498 = sphi 0, %s496
      %s499 = sphi 0, %s498
      %s513 = sphi 0, %s499
      %s517 = sphi 0, %s517
      %s519 = sphi 0, %s517
      %s520 = sphi 0, %s519
      %s534 = sphi 0, %s520
      %s540 = sphi 0, %s542
      %s543 = sphi 0, %s540
      %s544 = sphi 0, %s543
      %s560 = sphi 0, %s544
    $region4: #{decoder_forward.1} parent=1 // loop_header_branch
      %35 = sbr.rel (%p33) target = $region8
    $region5: #{decoder_forward.1} parent=1 // loop_body
      %s37 = ssub.s32 %s32, 1
      %s38 = ssub.s32 %s32, 2
      %s39 = sadd.s32 %s32, 1
      %s40 = ssub.s32 %s32, %s39
      %p41 = scmp.eq.s32.totalorder %s40, 0
      %s43 = sadd.s32 %s42, 1
      %s44 = scalar_select %p41, %s42, %s43
      %p47 = pneg %p41
      %p48 = scmp.eq.s32.totalorder %s32, 1
      %p49 = por %p47, %p48
      %p50 = scmp.ne.s32.totalorder %s42, %s45
      %p51 = scmp.eq.s32.totalorder %s32, 0
      %p52 = por %p50, %p51
      %p53 = scmp.ne.s32.totalorder %s42, %s45
      %p54 = scmp.eq.s32.totalorder %s37, 1
      %p55 = por %p53, %p54
      %p56 = scmp.ne.s32.totalorder %s45, %s46
      %p57 = scmp.eq.s32.totalorder %s37, 0
      %p58 = por %p56, %p57
      %p59 = scmp.ne.s32.totalorder %s45, %s46
      %p60 = scmp.eq.s32.totalorder %s38, 1
      %p61 = por %p59, %p60
      %p63 = scmp.ne.s32.totalorder %s46, %s62
      %p64 = scmp.eq.s32.totalorder %s38, 0
      %p65 = por %p63, %p64
      %s66 = ssub.s32 %s32, %s39
      %p67 = scmp.eq.s32.totalorder %s66, 0
      %s69 = sadd.s32 %s68, 1
      %s70 = scalar_select %p67, %s68, %s69
      %p73 = pneg %p67
      %p74 = scmp.eq.s32.totalorder %s32, 1
      %p75 = por %p73, %p74
      %p76 = scmp.ne.s32.totalorder %s68, %s71
      %p77 = scmp.eq.s32.totalorder %s32, 0
      %p78 = por %p76, %p77
      %p79 = scmp.ne.s32.totalorder %s68, %s71
      %p80 = scmp.eq.s32.totalorder %s37, 1
      %p81 = por %p79, %p80
      %p82 = scmp.ne.s32.totalorder %s71, %s72
      %p83 = scmp.eq.s32.totalorder %s37, 0
      %p84 = por %p82, %p83
      %p85 = scmp.ne.s32.totalorder %s71, %s72
      %p86 = scmp.eq.s32.totalorder %s38, 1
      %p87 = por %p85, %p86
      %p89 = scmp.ne.s32.totalorder %s72, %s88
      %p90 = scmp.eq.s32.totalorder %s38, 0
      %p91 = por %p89, %p90
      %s92 = ssub.s32 %s32, %s39
      %p93 = scmp.eq.s32.totalorder %s92, 0
      %s95 = sadd.s32 %s94, 1
      %s96 = scalar_select %p93, %s94, %s95
      %p99 = pneg %p93
      %p100 = scmp.eq.s32.totalorder %s32, 1
      %p101 = por %p99, %p100
      %p102 = scmp.ne.s32.totalorder %s94, %s97
      %p103 = scmp.eq.s32.totalorder %s32, 0
      %p104 = por %p102, %p103
      %p105 = scmp.ne.s32.totalorder %s94, %s97
      %p106 = scmp.eq.s32.totalorder %s37, 1
      %p107 = por %p105, %p106
      %p108 = scmp.ne.s32.totalorder %s97, %s98
      %p109 = scmp.eq.s32.totalorder %s37, 0
      %p110 = por %p108, %p109
      %p111 = scmp.ne.s32.totalorder %s97, %s98
      %p112 = scmp.eq.s32.totalorder %s38, 1
      %p113 = por %p111, %p112
      %p115 = scmp.ne.s32.totalorder %s98, %s114
      %p116 = scmp.eq.s32.totalorder %s38, 0
      %p117 = por %p115, %p116
      %s119 = sadd.s32 %s118, 1
      %p122 = scmp.eq.s32.totalorder %s32, 1
      %p123 = scmp.ne.s32.totalorder %s118, %s120
      %p124 = scmp.eq.s32.totalorder %s32, 0
      %p125 = por %p123, %p124
      %p126 = scmp.ne.s32.totalorder %s118, %s120
      %p127 = scmp.eq.s32.totalorder %s37, 1
      %p128 = por %p126, %p127
      %p129 = scmp.ne.s32.totalorder %s120, %s121
      %p130 = scmp.eq.s32.totalorder %s37, 0
      %p131 = por %p129, %p130
      %p132 = scmp.ne.s32.totalorder %s120, %s121
      %p133 = scmp.eq.s32.totalorder %s38, 1
      %p134 = por %p132, %p133
      %p136 = scmp.ne.s32.totalorder %s121, %s135
      %p137 = scmp.eq.s32.totalorder %s38, 0
      %p138 = por %p136, %p137
      %s140 = sadd.s32 %s139, 1
      %p143 = scmp.eq.s32.totalorder %s32, 1
      %p144 = scmp.ne.s32.totalorder %s139, %s141
      %p145 = scmp.eq.s32.totalorder %s32, 0
      %p146 = por %p144, %p145
      %p147 = scmp.ne.s32.totalorder %s139, %s141
      %p148 = scmp.eq.s32.totalorder %s37, 1
      %p149 = por %p147, %p148
      %p150 = scmp.ne.s32.totalorder %s141, %s142
      %p151 = scmp.eq.s32.totalorder %s37, 0
      %p152 = por %p150, %p151
      %p153 = scmp.ne.s32.totalorder %s141, %s142
      %p154 = scmp.eq.s32.totalorder %s38, 1
      %p155 = por %p153, %p154
      %p157 = scmp.ne.s32.totalorder %s142, %s156
      %p158 = scmp.eq.s32.totalorder %s38, 0
      %p159 = por %p157, %p158
      %s161 = sadd.s32 %s160, 1
      %p164 = scmp.eq.s32.totalorder %s32, 1
      %p165 = scmp.ne.s32.totalorder %s160, %s162
      %p166 = scmp.eq.s32.totalorder %s32, 0
      %p167 = por %p165, %p166
      %p168 = scmp.ne.s32.totalorder %s160, %s162
      %p169 = scmp.eq.s32.totalorder %s37, 1
      %p170 = por %p168, %p169
      %p171 = scmp.ne.s32.totalorder %s162, %s163
      %p172 = scmp.eq.s32.totalorder %s37, 0
      %p173 = por %p171, %p172
      %p174 = scmp.ne.s32.totalorder %s162, %s163
      %p175 = scmp.eq.s32.totalorder %s38, 1
      %p176 = por %p174, %p175
      %p178 = scmp.ne.s32.totalorder %s163, %s177
      %p179 = scmp.eq.s32.totalorder %s38, 0
      %p180 = por %p178, %p179
      %s182 = sadd.s32 %s181, 1
      %p185 = scmp.eq.s32.totalorder %s32, 1
      %p186 = scmp.ne.s32.totalorder %s181, %s183
      %p187 = scmp.eq.s32.totalorder %s32, 0
      %p188 = por %p186, %p187
      %p189 = scmp.ne.s32.totalorder %s181, %s183
      %p190 = scmp.eq.s32.totalorder %s37, 1
      %p191 = por %p189, %p190
      %p192 = scmp.ne.s32.totalorder %s183, %s184
      %p193 = scmp.eq.s32.totalorder %s37, 0
      %p194 = por %p192, %p193
      %p195 = scmp.ne.s32.totalorder %s183, %s184
      %p196 = scmp.eq.s32.totalorder %s38, 1
      %p197 = por %p195, %p196
      %p199 = scmp.ne.s32.totalorder %s184, %s198
      %p200 = scmp.eq.s32.totalorder %s38, 0
      %p201 = por %p199, %p200
      %s203 = sadd.s32 %s202, 1
      %p206 = scmp.eq.s32.totalorder %s32, 1
      %p207 = scmp.ne.s32.totalorder %s202, %s204
      %p208 = scmp.eq.s32.totalorder %s32, 0
      %p209 = por %p207, %p208
      %p210 = scmp.ne.s32.totalorder %s202, %s204
      %p211 = scmp.eq.s32.totalorder %s37, 1
      %p212 = por %p210, %p211
      %p213 = scmp.ne.s32.totalorder %s204, %s205
      %p214 = scmp.eq.s32.totalorder %s37, 0
      %p215 = por %p213, %p214
      %p216 = scmp.ne.s32.totalorder %s204, %s205
      %p217 = scmp.eq.s32.totalorder %s38, 1
      %p218 = por %p216, %p217
      %p220 = scmp.ne.s32.totalorder %s205, %s219
      %p221 = scmp.eq.s32.totalorder %s38, 0
      %p222 = por %p220, %p221
      %s224 = sadd.s32 %s223, 1
      %p227 = scmp.eq.s32.totalorder %s32, 1
      %p228 = scmp.ne.s32.totalorder %s223, %s225
      %p229 = scmp.eq.s32.totalorder %s32, 0
      %p230 = por %p228, %p229
      %p231 = scmp.ne.s32.totalorder %s223, %s225
      %p232 = scmp.eq.s32.totalorder %s37, 1
      %p233 = por %p231, %p232
      %p234 = scmp.ne.s32.totalorder %s225, %s226
      %p235 = scmp.eq.s32.totalorder %s37, 0
      %p236 = por %p234, %p235
      %p237 = scmp.ne.s32.totalorder %s225, %s226
      %p238 = scmp.eq.s32.totalorder %s38, 1
      %p239 = por %p237, %p238
      %p241 = scmp.ne.s32.totalorder %s226, %s240
      %p242 = scmp.eq.s32.totalorder %s38, 0
      %p243 = por %p241, %p242
      %s245 = sadd.s32 %s244, 1
      %p248 = scmp.eq.s32.totalorder %s32, 1
      %p249 = scmp.ne.s32.totalorder %s244, %s246
      %p250 = scmp.eq.s32.totalorder %s32, 0
      %p251 = por %p249, %p250
      %p252 = scmp.ne.s32.totalorder %s244, %s246
      %p253 = scmp.eq.s32.totalorder %s37, 1
      %p254 = por %p252, %p253
      %p255 = scmp.ne.s32.totalorder %s246, %s247
      %p256 = scmp.eq.s32.totalorder %s37, 0
      %p257 = por %p255, %p256
      %p258 = scmp.ne.s32.totalorder %s246, %s247
      %p259 = scmp.eq.s32.totalorder %s38, 1
      %p260 = por %p258, %p259
      %p262 = scmp.ne.s32.totalorder %s247, %s261
      %p263 = scmp.eq.s32.totalorder %s38, 0
      %p264 = por %p262, %p263
      %s266 = sadd.s32 %s265, 1
      %p269 = scmp.eq.s32.totalorder %s32, 1
      %p270 = scmp.ne.s32.totalorder %s265, %s267
      %p271 = scmp.eq.s32.totalorder %s32, 0
      %p272 = por %p270, %p271
      %p273 = scmp.ne.s32.totalorder %s265, %s267
      %p274 = scmp.eq.s32.totalorder %s37, 1
      %p275 = por %p273, %p274
      %p276 = scmp.ne.s32.totalorder %s267, %s268
      %p277 = scmp.eq.s32.totalorder %s37, 0
      %p278 = por %p276, %p277
      %p279 = scmp.ne.s32.totalorder %s267, %s268
      %p280 = scmp.eq.s32.totalorder %s38, 1
      %p281 = por %p279, %p280
      %p283 = scmp.ne.s32.totalorder %s268, %s282
      %p284 = scmp.eq.s32.totalorder %s38, 0
      %p285 = por %p283, %p284
      %s287 = sadd.s32 %s286, 1
      %p290 = scmp.eq.s32.totalorder %s32, 1
      %p291 = scmp.ne.s32.totalorder %s286, %s288
      %p292 = scmp.eq.s32.totalorder %s32, 0
      %p293 = por %p291, %p292
      %p294 = scmp.ne.s32.totalorder %s286, %s288
      %p295 = scmp.eq.s32.totalorder %s37, 1
      %p296 = por %p294, %p295
      %p297 = scmp.ne.s32.totalorder %s288, %s289
      %p298 = scmp.eq.s32.totalorder %s37, 0
      %p299 = por %p297, %p298
      %p300 = scmp.ne.s32.totalorder %s288, %s289
      %p301 = scmp.eq.s32.totalorder %s38, 1
      %p302 = por %p300, %p301
      %p304 = scmp.ne.s32.totalorder %s289, %s303
      %p305 = scmp.eq.s32.totalorder %s38, 0
      %p306 = por %p304, %p305
      %s308 = sadd.s32 %s307, 1
      %p311 = scmp.eq.s32.totalorder %s32, 1
      %p312 = scmp.ne.s32.totalorder %s307, %s309
      %p313 = scmp.eq.s32.totalorder %s32, 0
      %p314 = por %p312, %p313
      %p315 = scmp.ne.s32.totalorder %s307, %s309
      %p316 = scmp.eq.s32.totalorder %s37, 1
      %p317 = por %p315, %p316
      %p318 = scmp.ne.s32.totalorder %s309, %s310
      %p319 = scmp.eq.s32.totalorder %s37, 0
      %p320 = por %p318, %p319
      %p321 = scmp.ne.s32.totalorder %s309, %s310
      %p322 = scmp.eq.s32.totalorder %s38, 1
      %p323 = por %p321, %p322
      %p325 = scmp.ne.s32.totalorder %s310, %s324
      %p326 = scmp.eq.s32.totalorder %s38, 0
      %p327 = por %p325, %p326
      %s329 = sadd.s32 %s328, 1
      %p332 = scmp.eq.s32.totalorder %s32, 1
      %p333 = scmp.ne.s32.totalorder %s328, %s330
      %p334 = scmp.eq.s32.totalorder %s32, 0
      %p335 = por %p333, %p334
      %p336 = scmp.ne.s32.totalorder %s328, %s330
      %p337 = scmp.eq.s32.totalorder %s37, 1
      %p338 = por %p336, %p337
      %p339 = scmp.ne.s32.totalorder %s330, %s331
      %p340 = scmp.eq.s32.totalorder %s37, 0
      %p341 = por %p339, %p340
      %p342 = scmp.ne.s32.totalorder %s330, %s331
      %p343 = scmp.eq.s32.totalorder %s38, 1
      %p344 = por %p342, %p343
      %p346 = scmp.ne.s32.totalorder %s331, %s345
      %p347 = scmp.eq.s32.totalorder %s38, 0
      %p348 = por %p346, %p347
      %s350 = sadd.s32 %s349, 1
      %p353 = scmp.eq.s32.totalorder %s32, 1
      %p354 = scmp.ne.s32.totalorder %s349, %s351
      %p355 = scmp.eq.s32.totalorder %s32, 0
      %p356 = por %p354, %p355
      %p357 = scmp.ne.s32.totalorder %s349, %s351
      %p358 = scmp.eq.s32.totalorder %s37, 1
      %p359 = por %p357, %p358
      %p360 = scmp.ne.s32.totalorder %s351, %s352
      %p361 = scmp.eq.s32.totalorder %s37, 0
      %p362 = por %p360, %p361
      %p363 = scmp.ne.s32.totalorder %s351, %s352
      %p364 = scmp.eq.s32.totalorder %s38, 1
      %p365 = por %p363, %p364
      %p367 = scmp.ne.s32.totalorder %s352, %s366
      %p368 = scmp.eq.s32.totalorder %s38, 0
      %p369 = por %p367, %p368
      %s371 = sadd.s32 %s370, 1
      %p374 = scmp.eq.s32.totalorder %s32, 1
      %p375 = scmp.ne.s32.totalorder %s370, %s372
      %p376 = scmp.eq.s32.totalorder %s32, 0
      %p377 = por %p375, %p376
      %p378 = scmp.ne.s32.totalorder %s370, %s372
      %p379 = scmp.eq.s32.totalorder %s37, 1
      %p380 = por %p378, %p379
      %p381 = scmp.ne.s32.totalorder %s372, %s373
      %p382 = scmp.eq.s32.totalorder %s37, 0
      %p383 = por %p381, %p382
      %p384 = scmp.ne.s32.totalorder %s372, %s373
      %p385 = scmp.eq.s32.totalorder %s38, 1
      %p386 = por %p384, %p385
      %p388 = scmp.ne.s32.totalorder %s373, %s387
      %p389 = scmp.eq.s32.totalorder %s38, 0
      %p390 = por %p388, %p389
      %s392 = sadd.s32 %s391, 1
      %p395 = scmp.eq.s32.totalorder %s32, 1
      %p396 = scmp.ne.s32.totalorder %s391, %s393
      %p397 = scmp.eq.s32.totalorder %s32, 0
      %p398 = por %p396, %p397
      %p399 = scmp.ne.s32.totalorder %s391, %s393
      %p400 = scmp.eq.s32.totalorder %s37, 1
      %p401 = por %p399, %p400
      %p402 = scmp.ne.s32.totalorder %s393, %s394
      %p403 = scmp.eq.s32.totalorder %s37, 0
      %p404 = por %p402, %p403
      %p405 = scmp.ne.s32.totalorder %s393, %s394
      %p406 = scmp.eq.s32.totalorder %s38, 1
      %p407 = por %p405, %p406
      %p409 = scmp.ne.s32.totalorder %s394, %s408
      %p410 = scmp.eq.s32.totalorder %s38, 0
      %p411 = por %p409, %p410
      %s413 = sadd.s32 %s412, 1
      %p416 = scmp.eq.s32.totalorder %s32, 1
      %p417 = scmp.ne.s32.totalorder %s412, %s414
      %p418 = scmp.eq.s32.totalorder %s32, 0
      %p419 = por %p417, %p418
      %p420 = scmp.ne.s32.totalorder %s412, %s414
      %p421 = scmp.eq.s32.totalorder %s37, 1
      %p422 = por %p420, %p421
      %p423 = scmp.ne.s32.totalorder %s414, %s415
      %p424 = scmp.eq.s32.totalorder %s37, 0
      %p425 = por %p423, %p424
      %p426 = scmp.ne.s32.totalorder %s414, %s415
      %p427 = scmp.eq.s32.totalorder %s38, 1
      %p428 = por %p426, %p427
      %p430 = scmp.ne.s32.totalorder %s415, %s429
      %p431 = scmp.eq.s32.totalorder %s38, 0
      %p432 = por %p430, %p431
      %s434 = sadd.s32 %s433, 1
      %p437 = scmp.eq.s32.totalorder %s32, 1
      %p438 = scmp.ne.s32.totalorder %s433, %s435
      %p439 = scmp.eq.s32.totalorder %s32, 0
      %p440 = por %p438, %p439
      %p441 = scmp.ne.s32.totalorder %s433, %s435
      %p442 = scmp.eq.s32.totalorder %s37, 1
      %p443 = por %p441, %p442
      %p444 = scmp.ne.s32.totalorder %s435, %s436
      %p445 = scmp.eq.s32.totalorder %s37, 0
      %p446 = por %p444, %p445
      %p447 = scmp.ne.s32.totalorder %s435, %s436
      %p448 = scmp.eq.s32.totalorder %s38, 1
      %p449 = por %p447, %p448
      %p451 = scmp.ne.s32.totalorder %s436, %s450
      %p452 = scmp.eq.s32.totalorder %s38, 0
      %p453 = por %p451, %p452
      %s455 = sadd.s32 %s454, 1
      %p458 = scmp.eq.s32.totalorder %s32, 1
      %p459 = scmp.ne.s32.totalorder %s454, %s456
      %p460 = scmp.eq.s32.totalorder %s32, 0
      %p461 = por %p459, %p460
      %p462 = scmp.ne.s32.totalorder %s454, %s456
      %p463 = scmp.eq.s32.totalorder %s37, 1
      %p464 = por %p462, %p463
      %p465 = scmp.ne.s32.totalorder %s456, %s457
      %p466 = scmp.eq.s32.totalorder %s37, 0
      %p467 = por %p465, %p466
      %p468 = scmp.ne.s32.totalorder %s456, %s457
      %p469 = scmp.eq.s32.totalorder %s38, 1
      %p470 = por %p468, %p469
      %p472 = scmp.ne.s32.totalorder %s457, %s471
      %p473 = scmp.eq.s32.totalorder %s38, 0
      %p474 = por %p472, %p473
      %s476 = sadd.s32 %s475, 1
      %p479 = scmp.eq.s32.totalorder %s32, 1
      %p480 = scmp.ne.s32.totalorder %s475, %s477
      %p481 = scmp.eq.s32.totalorder %s32, 0
      %p482 = por %p480, %p481
      %p483 = scmp.ne.s32.totalorder %s475, %s477
      %p484 = scmp.eq.s32.totalorder %s37, 1
      %p485 = por %p483, %p484
      %p486 = scmp.ne.s32.totalorder %s477, %s478
      %p487 = scmp.eq.s32.totalorder %s37, 0
      %p488 = por %p486, %p487
      %p489 = scmp.ne.s32.totalorder %s477, %s478
      %p490 = scmp.eq.s32.totalorder %s38, 1
      %p491 = por %p489, %p490
      %p493 = scmp.ne.s32.totalorder %s478, %s492
      %p494 = scmp.eq.s32.totalorder %s38, 0
      %p495 = por %p493, %p494
      %s497 = sadd.s32 %s496, 1
      %p500 = scmp.eq.s32.totalorder %s32, 1
      %p501 = scmp.ne.s32.totalorder %s496, %s498
      %p502 = scmp.eq.s32.totalorder %s32, 0
      %p503 = por %p501, %p502
      %p504 = scmp.ne.s32.totalorder %s496, %s498
      %p505 = scmp.eq.s32.totalorder %s37, 1
      %p506 = por %p504, %p505
      %p507 = scmp.ne.s32.totalorder %s498, %s499
      %p508 = scmp.eq.s32.totalorder %s37, 0
      %p509 = por %p507, %p508
      %p510 = scmp.ne.s32.totalorder %s498, %s499
      %p511 = scmp.eq.s32.totalorder %s38, 1
      %p512 = por %p510, %p511
      %p514 = scmp.ne.s32.totalorder %s499, %s513
      %p515 = scmp.eq.s32.totalorder %s38, 0
      %p516 = por %p514, %p515
      %s518 = sadd.s32 %s517, 1
      %p521 = scmp.eq.s32.totalorder %s32, 1
      %p522 = scmp.ne.s32.totalorder %s517, %s519
      %p523 = scmp.eq.s32.totalorder %s32, 0
      %p524 = por %p522, %p523
      %p525 = scmp.ne.s32.totalorder %s517, %s519
      %p526 = scmp.eq.s32.totalorder %s37, 1
      %p527 = por %p525, %p526
      %p528 = scmp.ne.s32.totalorder %s519, %s520
      %p529 = scmp.eq.s32.totalorder %s37, 0
      %p530 = por %p528, %p529
      %p531 = scmp.ne.s32.totalorder %s519, %s520
      %p532 = scmp.eq.s32.totalorder %s38, 1
      %p533 = por %p531, %p532
      %p535 = scmp.ne.s32.totalorder %s520, %s534
      %p536 = scmp.eq.s32.totalorder %s38, 0
      %p537 = por %p535, %p536
      %s538 = ssub.s32 %s32, %s39
      %p539 = scmp.eq.s32.totalorder %s538, 0
      %s541 = sadd.s32 %s540, 1
      %s542 = scalar_select %p539, %s540, %s541
      %p545 = pneg %p539
      %p546 = scmp.eq.s32.totalorder %s32, 1
      %p547 = por %p545, %p546
      %p548 = scmp.ne.s32.totalorder %s540, %s543
      %p549 = scmp.eq.s32.totalorder %s32, 0
      %p550 = por %p548, %p549
      %p551 = scmp.ne.s32.totalorder %s540, %s543
      %p552 = scmp.eq.s32.totalorder %s37, 1
      %p553 = por %p551, %p552
      %p554 = scmp.ne.s32.totalorder %s543, %s544
      %p555 = scmp.eq.s32.totalorder %s37, 0
      %p556 = por %p554, %p555
      %p557 = scmp.ne.s32.totalorder %s543, %s544
      %p558 = scmp.eq.s32.totalorder %s38, 1
      %p559 = por %p557, %p558
      %p561 = scmp.ne.s32.totalorder %s544, %s560
      %p562 = scmp.eq.s32.totalorder %s38, 0
      %p563 = por %p561, %p562
      %p564 = scmp.le.s32.totalorder 1, %s32
      %p565 = scmp.lt.s32.totalorder %s32, 3
      %p566 = pnand %p564, %p565
      %p567 = pneg %p566
      // Predicated region
      $region9: #{decoder_forward.1} parent=5 // pred_check
        _
      $region10: #{decoder_forward.1} parent=5 // pred_check_branch
        %569 = sbr.rel (%p566) target = $region12
      $region11: #{decoder_forward.1} parent=5 // pred_region
        %s570 = ssub.s32 %s32, 1
        // Predicated region
        $region13: #{decoder_forward.1} parent=11 // pred_check
          %p571 = pneg %p131
        $region14: #{decoder_forward.1} parent=11 // pred_check_branch
          %573 = sbr.rel (%p571) target = $region16
        $region15: #{decoder_forward.1} parent=11 // pred_region
          _
        $region16: #{decoder_forward.1} parent=11 // pred_fallthru
          _
        // Predicated region
        $region17: #{decoder_forward.1} parent=11 // pred_check
          %p574 = pneg %p152
        $region18: #{decoder_forward.1} parent=11 // pred_check_branch
          %576 = sbr.rel (%p574) target = $region20
        $region19: #{decoder_forward.1} parent=11 // pred_region
          _
        $region20: #{decoder_forward.1} parent=11 // pred_fallthru
          _
        // Predicated region
        $region21: #{decoder_forward.1} parent=11 // pred_check
          %p577 = pneg %p173
        $region22: #{decoder_forward.1} parent=11 // pred_check_branch
          %579 = sbr.rel (%p577) target = $region24
        $region23: #{decoder_forward.1} parent=11 // pred_region
          _
        $region24: #{decoder_forward.1} parent=11 // pred_fallthru
          _
        // Predicated region
        $region25: #{decoder_forward.1} parent=11 // pred_check
          %p580 = pneg %p194
        $region26: #{decoder_forward.1} parent=11 // pred_check_branch
          %582 = sbr.rel (%p580) target = $region28
        $region27: #{decoder_forward.1} parent=11 // pred_region
          _
        $region28: #{decoder_forward.1} parent=11 // pred_fallthru
          _
        // Predicated region
        $region29: #{decoder_forward.1} parent=11 // pred_check
          %p583 = pneg %p215
        $region30: #{decoder_forward.1} parent=11 // pred_check_branch
          %585 = sbr.rel (%p583) target = $region32
        $region31: #{decoder_forward.1} parent=11 // pred_region
          _
        $region32: #{decoder_forward.1} parent=11 // pred_fallthru
          _
        // Predicated region
        $region33: #{decoder_forward.1} parent=11 // pred_check
          %p586 = pneg %p236
        $region34: #{decoder_forward.1} parent=11 // pred_check_branch
          %588 = sbr.rel (%p586) target = $region36
        $region35: #{decoder_forward.1} parent=11 // pred_region
          _
        $region36: #{decoder_forward.1} parent=11 // pred_fallthru
          _
        // Predicated region
        $region37: #{decoder_forward.1} parent=11 // pred_check
          %p589 = pneg %p257
        $region38: #{decoder_forward.1} parent=11 // pred_check_branch
          %591 = sbr.rel (%p589) target = $region40
        $region39: #{decoder_forward.1} parent=11 // pred_region
          _
        $region40: #{decoder_forward.1} parent=11 // pred_fallthru
          _
        // Predicated region
        $region41: #{decoder_forward.1} parent=11 // pred_check
          %p592 = pneg %p278
        $region42: #{decoder_forward.1} parent=11 // pred_check_branch
          %594 = sbr.rel (%p592) target = $region44
        $region43: #{decoder_forward.1} parent=11 // pred_region
          _
        $region44: #{decoder_forward.1} parent=11 // pred_fallthru
          _
        // Predicated region
        $region45: #{decoder_forward.1} parent=11 // pred_check
          %p595 = pneg %p299
        $region46: #{decoder_forward.1} parent=11 // pred_check_branch
          %597 = sbr.rel (%p595) target = $region48
        $region47: #{decoder_forward.1} parent=11 // pred_region
          _
        $region48: #{decoder_forward.1} parent=11 // pred_fallthru
          _
        // Predicated region
        $region49: #{decoder_forward.1} parent=11 // pred_check
          %p598 = pneg %p320
        $region50: #{decoder_forward.1} parent=11 // pred_check_branch
          %600 = sbr.rel (%p598) target = $region52
        $region51: #{decoder_forward.1} parent=11 // pred_region
          _
        $region52: #{decoder_forward.1} parent=11 // pred_fallthru
          _
        // Predicated region
        $region53: #{decoder_forward.1} parent=11 // pred_check
          %p601 = pneg %p341
        $region54: #{decoder_forward.1} parent=11 // pred_check_branch
          %603 = sbr.rel (%p601) target = $region56
        $region55: #{decoder_forward.1} parent=11 // pred_region
          _
        $region56: #{decoder_forward.1} parent=11 // pred_fallthru
          _
        // Predicated region
        $region57: #{decoder_forward.1} parent=11 // pred_check
          %p604 = pneg %p362
        $region58: #{decoder_forward.1} parent=11 // pred_check_branch
          %606 = sbr.rel (%p604) target = $region60
        $region59: #{decoder_forward.1} parent=11 // pred_region
          _
        $region60: #{decoder_forward.1} parent=11 // pred_fallthru
          _
        // Predicated region
        $region61: #{decoder_forward.1} parent=11 // pred_check
          %p607 = pneg %p383
        $region62: #{decoder_forward.1} parent=11 // pred_check_branch
          %609 = sbr.rel (%p607) target = $region64
        $region63: #{decoder_forward.1} parent=11 // pred_region
          _
        $region64: #{decoder_forward.1} parent=11 // pred_fallthru
          _
        // Predicated region
        $region65: #{decoder_forward.1} parent=11 // pred_check
          %p610 = pneg %p404
        $region66: #{decoder_forward.1} parent=11 // pred_check_branch
          %612 = sbr.rel (%p610) target = $region68
        $region67: #{decoder_forward.1} parent=11 // pred_region
          _
        $region68: #{decoder_forward.1} parent=11 // pred_fallthru
          _
        // Predicated region
        $region69: #{decoder_forward.1} parent=11 // pred_check
          %p613 = pneg %p425
        $region70: #{decoder_forward.1} parent=11 // pred_check_branch
          %615 = sbr.rel (%p613) target = $region72
        $region71: #{decoder_forward.1} parent=11 // pred_region
          _
        $region72: #{decoder_forward.1} parent=11 // pred_fallthru
          _
        // Predicated region
        $region73: #{decoder_forward.1} parent=11 // pred_check
          %p616 = pneg %p446
        $region74: #{decoder_forward.1} parent=11 // pred_check_branch
          %618 = sbr.rel (%p616) target = $region76
        $region75: #{decoder_forward.1} parent=11 // pred_region
          _
        $region76: #{decoder_forward.1} parent=11 // pred_fallthru
          _
        // Predicated region
        $region77: #{decoder_forward.1} parent=11 // pred_check
          %p619 = pneg %p467
        $region78: #{decoder_forward.1} parent=11 // pred_check_branch
          %621 = sbr.rel (%p619) target = $region80
        $region79: #{decoder_forward.1} parent=11 // pred_region
          _
        $region80: #{decoder_forward.1} parent=11 // pred_fallthru
          _
        // Predicated region
        $region81: #{decoder_forward.1} parent=11 // pred_check
          %p622 = pneg %p488
        $region82: #{decoder_forward.1} parent=11 // pred_check_branch
          %624 = sbr.rel (%p622) target = $region84
        $region83: #{decoder_forward.1} parent=11 // pred_region
          _
        $region84: #{decoder_forward.1} parent=11 // pred_fallthru
          _
        // Predicated region
        $region85: #{decoder_forward.1} parent=11 // pred_check
          %p625 = pneg %p509
        $region86: #{decoder_forward.1} parent=11 // pred_check_branch
          %627 = sbr.rel (%p625) target = $region88
        $region87: #{decoder_forward.1} parent=11 // pred_region
          _
        $region88: #{decoder_forward.1} parent=11 // pred_fallthru
          _
        // Predicated region
        $region89: #{decoder_forward.1} parent=11 // pred_check
          %p628 = pneg %p530
        $region90: #{decoder_forward.1} parent=11 // pred_check_branch
          %630 = sbr.rel (%p628) target = $region92
        $region91: #{decoder_forward.1} parent=11 // pred_region
          _
        $region92: #{decoder_forward.1} parent=11 // pred_fallthru
          _
      $region12: #{decoder_forward.1} parent=5 // pred_fallthru
        _
      %p631 = scmp.lt.s32.totalorder %s32, 2
      // Predicated region
      $region93: #{decoder_forward.1} parent=5 // pred_check
        %p632 = pneg %p631
      $region94: #{decoder_forward.1} parent=5 // pred_check_branch
        %634 = sbr.rel (%p632) target = $region96
      $region95: #{decoder_forward.1} parent=5 // pred_region
        // Predicated region
        $region97: #{decoder_forward.1} parent=95 // pred_check
          %p635 = pneg %p52
        $region98: #{decoder_forward.1} parent=95 // pred_check_branch
          %637 = sbr.rel (%p635) target = $region100
        $region99: #{decoder_forward.1} parent=95 // pred_region
          %s638 = smul.u32 2, %s32
          %p639 = scmp.lt.s32.totalorder %s638, 3
          %s640 = scalar_select %p639, %s638, 3
          %s641 = smul.addr %s640, 4
          %s642 = scalar_lea.vmem %s0, %s641
          %s643 = smul.u32 2, %s32
        $region100: #{decoder_forward.1} parent=95 // pred_fallthru
          _
        // Predicated region
        $region101: #{decoder_forward.1} parent=95 // pred_check
          %p644 = pneg %p78
        $region102: #{decoder_forward.1} parent=95 // pred_check_branch
          %646 = sbr.rel (%p644) target = $region104
        $region103: #{decoder_forward.1} parent=95 // pred_region
          %s647 = smul.u32 2, %s32
          %p648 = scmp.lt.s32.totalorder %s647, 3
          %s649 = scalar_select %p648, %s647, 3
          %s650 = smul.addr %s649, 4
          %s651 = scalar_lea.vmem %s1, %s650
          %s652 = smul.u32 2, %s32
        $region104: #{decoder_forward.1} parent=95 // pred_fallthru
          _
        // Predicated region
        $region105: #{decoder_forward.1} parent=95 // pred_check
          %p653 = pneg %p104
        $region106: #{decoder_forward.1} parent=95 // pred_check_branch
          %655 = sbr.rel (%p653) target = $region108
        $region107: #{decoder_forward.1} parent=95 // pred_region
          %s656 = smul.u32 2, %s32
          %p657 = scmp.lt.s32.totalorder %s656, 3
          %s658 = scalar_select %p657, %s656, 3
          %s659 = scalar_lea.vmem %s2, %s658
          %s660 = smul.u32 2, %s32
        $region108: #{decoder_forward.1} parent=95 // pred_fallthru
          _
      $region96: #{decoder_forward.1} parent=5 // pred_fallthru
        _
      %p661 = scmp.le.s32.totalorder 1, %s32
      %p662 = scmp.lt.s32.totalorder %s32, 3
      %p663 = pnand %p661, %p662
      %p664 = pneg %p663
      // Predicated region
      $region109: #{decoder_forward.1} parent=5 // pred_check
        _
      $region110: #{decoder_forward.1} parent=5 // pred_check_branch
        %666 = sbr.rel (%p663) target = $region112
      $region111: #{decoder_forward.1} parent=5 // pred_region
        %s667 = ssub.s32 %s32, 1
        %s668 = smul.u32 2, %s37
        %p669 = scmp.lt.s32.totalorder %s668, 3
        %s670 = scalar_select %p669, %s668, 3
        %s671 = smul.addr %s670, 4
        %s672 = scalar_lea.vmem %s0, %s671
        %p673 = pneg %p58
        %p674 = pneg %p55
        %s675 = smul.u32 2, %s37
        %p676 = scmp.lt.s32.totalorder %s675, 3
        %s677 = scalar_select %p676, %s675, 3
        %s678 = smul.addr %s677, 4
        %s679 = scalar_lea.vmem %s1, %s678
        %p680 = pneg %p84
        %p681 = pneg %p81
        %s682 = smul.u32 2, %s37
        %p683 = scmp.lt.s32.totalorder %s682, 3
        %s684 = scalar_select %p683, %s682, 3
        %s685 = scalar_lea.vmem %s2, %s684
        %p686 = pneg %p110
        %p687 = pneg %p107
        %p688 = pneg %p131
        %p689 = pneg %p128
        %p690 = pneg %p152
        %p691 = pneg %p149
        %p692 = pneg %p173
        %p693 = pneg %p170
        %p694 = pneg %p194
        %p695 = pneg %p191
        %p696 = pneg %p215
        %p697 = pneg %p212
        %p698 = pneg %p236
        %p699 = pneg %p233
        %p700 = pneg %p257
        %p701 = pneg %p254
        %p702 = pneg %p278
        %p703 = pneg %p275
        %p704 = pneg %p299
        %p705 = pneg %p296
        %p706 = pneg %p320
        %p707 = pneg %p317
        %p708 = pneg %p341
        %p709 = pneg %p338
        %p710 = pneg %p362
        %p711 = pneg %p359
        %p712 = pneg %p383
        %p713 = pneg %p380
        %p714 = pneg %p404
        %p715 = pneg %p401
        %p716 = pneg %p425
        %p717 = pneg %p422
        %p718 = pneg %p446
        %p719 = pneg %p443
        %p720 = pneg %p467
        %p721 = pneg %p464
        %p722 = pneg %p488
        %p723 = pneg %p485
        %p724 = pneg %p509
        %p725 = pneg %p506
        %p726 = pneg %p530
        %p727 = pneg %p527
        %p728 = pneg %p556
        %p729 = pneg %p553
        %s730 = sand.u32 %s543, 1
        %s731 = scalar_lea.sflag [#allocation3], %s730
        %s732 = sand.u32 %s543, 1
        %s733 = smul.addr %s732, 16
        %s734 = scalar_lea.vmem [#allocation2], %s733
        %s735 = smul.u32 2, %s37
        %p736 = scmp.lt.s32.totalorder %s735, 3
        %s737 = scalar_select %p736, %s735, 3
        %s738 = smul.addr %s737, 4
        %s739 = scalar_lea.vmem %s0, %s738
        %s740 = smul.u32 2, %s37
        %s741 = smul.u32 2, %s37
        %p742 = scmp.lt.s32.totalorder %s741, 3
        %s743 = scalar_select %p742, %s741, 3
        %s744 = smul.addr %s743, 4
        %s745 = scalar_lea.vmem %s1, %s744
        %s746 = smul.u32 2, %s37
        %s747 = smul.u32 2, %s37
        %p748 = scmp.lt.s32.totalorder %s747, 3
        %s749 = scalar_select %p748, %s747, 3
        %s750 = scalar_lea.vmem %s2, %s749
        %s751 = smul.u32 2, %s37
        %s752 = smul.u32 2, %s37
        %v754 = vld [vmem:[%s739] sm:$0xf]
        %v755 = vld [vmem:[%s739 + $0x4] sm:$0xf]
        %v756 = vld [vmem:[%s745] sm:$0xf]
        %v757 = vld [vmem:[%s745 + $0x4] sm:$0xf]
        %v758 = vunpack.c.l.bf16 %v754
        %v759 = vunpack.c.l.bf16 %v755
        %v760 = vlaneseq
        %v761 = vshrl.u32 %v760, 7
        %v762 = vlaneseq
        %v763 = vand.u32 %v762, 127
        %vm764 = vcmp.le.s32.totalorder %v763, %v761
        %v765 = vsel %vm764, 0.0, -1e+09
        %v766 = vld [vmem:[%s750] sm:$0x1]
        %v767 = vld [vmem:[%s750 + $0x1] sm:$0x1]
        %v768 = vsub.f32 1.0, %v766
        %v769 = vsub.f32 1.0, %v767
        %v770 = vmul.f32 %v768, -1e+09
        %v771 = vmul.f32 %v769, -1e+09
        %v772 = vld [vmem:[%s3] sm:$0xf]
        %v773 = vld [vmem:[%s3 + $0x4] sm:$0xf]
        %v774 = vld [vmem:[%s3 + $0x8] sm:$0xf]
        %v775 = vld [vmem:[%s3 + $0xc] sm:$0xf]
        %v776 = vld [vmem:[%s4] sm:$0x1]
        %v778 = vlaneseq
        %v779 = vshrl.u32 %v778, 7
        %v780 = vsub.s32 0, %v779
        %v781 = vrot.slane %v776, %v780
        %v785 = vunpack.c.l.b16 %v754
        %v786 = vunpack.c.l.b16 %v755
        %v787 = vpack.c.b16 %v786, %v785
        %v792 = vunpack.c.l.b16 %v772
        %v793 = vunpack.c.l.b16 %v773
        %v794 = vunpack.c.l.b16 %v774
        %v795 = vunpack.c.l.b16 %v775
        %v796 = vpack.c.b16 %v793, %v792
        %v797 = vpack.c.b16 %v795, %v794
        %vm800 = vcmask 261120
        %v802 = vsel %vm800, %v787, 0
        %804 = vmatprep.subr.bf16.mxu0 0
        %805 = vmatpush1.bf16.msra.mxu0 %v796
        %806 = vmatprep.subr.bf16.mxu0 0
        %807 = vmatpush1.bf16.msra.mxu0 %v797
        %808 = vmatprep.subr.bf16.mxu0 0
        %809 = vmatpush1.bf16.msra.mxu0 0
        %810 = vmatprep.subr.bf16.mxu0 0
        %811 = vmatpush1.bf16.msra.mxu0 0
        %812 = vmatprep.subr.bf16.mxu0 0
        %813 = vmatpush1.bf16.msra.mxu0 0
        %814 = vmatprep.subr.bf16.mxu0 0
        %815 = vmatpush1.bf16.msra.mxu0 0
        %816 = vmatprep.subr.bf16.mxu0 0
        %817 = vmatpush1.bf16.msra.mxu0 0
        %818 = vmatprep.subr.bf16.mxu0 0
        %819 = vmatpush1.bf16.msra.mxu0 0
        %820 = vmatprep.subr.bf16.mxu0 0
        %821 = vmatpush1.bf16.msra.mxu0 0
        %822 = vmatprep.subr.bf16.mxu0 0
        %823 = vmatpush1.bf16.msra.mxu0 0
        %824 = vmatprep.subr.bf16.mxu0 0
        %825 = vmatpush1.bf16.msra.mxu0 0
        %826 = vmatprep.subr.bf16.mxu0 0
        %827 = vmatpush1.bf16.msra.mxu0 0
        %828 = vmatprep.subr.bf16.mxu0 0
        %829 = vmatpush1.bf16.msra.mxu0 0
        %830 = vmatprep.subr.bf16.mxu0 0
        %831 = vmatpush1.bf16.msra.mxu0 0
        %832 = vmatprep.subr.bf16.mxu0 0
        %833 = vmatpush1.bf16.msra.mxu0 0
        %834 = vmatprep.subr.bf16.mxu0 0
        %835 = vmatpush1.bf16.msra.mxu0 0
        %836 = vmatprep.mubr.bf16.mxu0 0
        %837 = vmatmul.mubr.bf16.gmra.mrb[0].mxu0 %v802
        %v838 = vpop.f32.mrb[0].mxu0
        %v839 = vadd.f32 %v781, %v838
        %v840 = vpop.f32.mrb[0].mxu0
        %v841 = vpop.f32.mrb[0].mxu0
        %v842 = vadd.f32 %v781, %v841
        %v843 = vpop.f32.mrb[0].mxu0
        %844 = vdwg.mxu0
        %v845 = vld [vmem:[%s5] sm:$0xf]
        %v846 = vld [vmem:[%s5 + $0x4] sm:$0xf]
        %v847 = vld [vmem:[%s5 + $0x8] sm:$0xf]
        %v848 = vld [vmem:[%s5 + $0xc] sm:$0xf]
        %v849 = vld [vmem:[%s6] sm:$0x1]
        %v850 = vpack.c.bf16 %v842, %v839
        %852 = vrot.lane.b32.xlu0 %v850, 120
        %v853 = vpop.permute.xlu0 %852
        %854 = vrot.lane.b32.xlu0 %v850, 112
        %v855 = vpop.permute.xlu0 %854
        %856 = vrot.lane.b32.xlu0 %v850, 104
        %v857 = vpop.permute.xlu0 %856
        %v860 = vpack.i.b16 %v853, %v850
        %v862 = vshrl.u32 %v850, 16
        %v863 = vshrl.u32 %v853, 16
        %v864 = vpack.i.b16 %v863, %v862
        %v868 = vpack.i.b16 %v857, %v855
        %v870 = vshrl.u32 %v855, 16
        %v871 = vshrl.u32 %v857, 16
        %v872 = vpack.i.b16 %v871, %v870
        %v875 = vpack.i.b16 0, 0
        %v877 = vshrl.u32 0, 16
        %v878 = vpack.i.b16 %v877, %v877
        %v880 = vcombine.high %v860, %v875
        %v882 = vunpack.c.l.s4 1983009808
        %v883 = vunpack.c.0.s8 %v882
        %v884 = vlaneseq
        %v885 = vshrl.u32 %v884, 7
        %v886 = vsub.s32 %v883, %v885
        %v887 = vrot.slane %v860, %v886
        %v889 = vunpack.c.l.s4 1983009808
        %v890 = vunpack.c.0.s8 %v889
        %v891 = vlaneseq
        %v892 = vshrl.u32 %v891, 7
        %v893 = vsub.s32 %v890, %v892
        %v894 = vrot.slane %v880, %v893
        %v895 = vcombine.high %v868, %v875
        %v897 = vunpack.c.l.s4 1983009808
        %v898 = vunpack.c.0.s8 %v897
        %v899 = vlaneseq
        %v900 = vshrl.u32 %v899, 7
        %v901 = vsub.s32 %v898, %v900
        %v902 = vrot.slane %v868, %v901
        %v904 = vunpack.c.l.s4 1983009808
        %v905 = vunpack.c.0.s8 %v904
        %v906 = vlaneseq
        %v907 = vshrl.u32 %v906, 7
        %v908 = vsub.s32 %v905, %v907
        %v909 = vrot.slane %v895, %v908
        %v910 = vcombine.low %v887, %v902
        %v911 = vcombine.high %v887, %v902
        %v913 = vunpack.c.l.s4 1934713408
        %v914 = vunpack.c.0.s8 %v913
        %v915 = vlaneseq
        %v916 = vshrl.u32 %v915, 7
        %v917 = vsub.s32 %v914, %v916
        %v918 = vrot.slane %v910, %v917
        %v920 = vunpack.c.l.s4 1934713408
        %v921 = vunpack.c.0.s8 %v920
        %v922 = vlaneseq
        %v923 = vshrl.u32 %v922, 7
        %v924 = vsub.s32 %v921, %v923
        %v925 = vrot.slane %v911, %v924
        %v926 = vcombine.low %v894, %v909
        %v927 = vcombine.high %v894, %v909
        %v929 = vunpack.c.l.s4 1934713408
        %v930 = vunpack.c.0.s8 %v929
        %v931 = vlaneseq
        %v932 = vshrl.u32 %v931, 7
        %v933 = vsub.s32 %v930, %v932
        %v934 = vrot.slane %v926, %v933
        %v936 = vunpack.c.l.s4 1934713408
        %v937 = vunpack.c.0.s8 %v936
        %v938 = vlaneseq
        %v939 = vshrl.u32 %v938, 7
        %v940 = vsub.s32 %v937, %v939
        %v941 = vrot.slane %v927, %v940
        %v942 = vcombine.high %v918, 0
        %v943 = vcombine.high %v925, 0
        %v944 = vcombine.high %v934, 0
        %v945 = vcombine.high %v941, 0
        %v946 = vcombine.high %v864, %v878
        %v948 = vunpack.c.l.s4 1983009808
        %v949 = vunpack.c.0.s8 %v948
        %v950 = vlaneseq
        %v951 = vshrl.u32 %v950, 7
        %v952 = vsub.s32 %v949, %v951
        %v953 = vrot.slane %v864, %v952
        %v955 = vunpack.c.l.s4 1983009808
        %v956 = vunpack.c.0.s8 %v955
        %v957 = vlaneseq
        %v958 = vshrl.u32 %v957, 7
        %v959 = vsub.s32 %v956, %v958
        %v960 = vrot.slane %v946, %v959
        %v961 = vcombine.high %v872, %v878
        %v963 = vunpack.c.l.s4 1983009808
        %v964 = vunpack.c.0.s8 %v963
        %v965 = vlaneseq
        %v966 = vshrl.u32 %v965, 7
        %v967 = vsub.s32 %v964, %v966
        %v968 = vrot.slane %v872, %v967
        %v970 = vunpack.c.l.s4 1983009808
        %v971 = vunpack.c.0.s8 %v970
        %v972 = vlaneseq
        %v973 = vshrl.u32 %v972, 7
        %v974 = vsub.s32 %v971, %v973
        %v975 = vrot.slane %v961, %v974
        %v976 = vcombine.low %v953, %v968
        %v977 = vcombine.high %v953, %v968
        %v979 = vunpack.c.l.s4 1934713408
        %v980 = vunpack.c.0.s8 %v979
        %v981 = vlaneseq
        %v982 = vshrl.u32 %v981, 7
        %v983 = vsub.s32 %v980, %v982
        %v984 = vrot.slane %v976, %v983
        %v986 = vunpack.c.l.s4 1934713408
        %v987 = vunpack.c.0.s8 %v986
        %v988 = vlaneseq
        %v989 = vshrl.u32 %v988, 7
        %v990 = vsub.s32 %v987, %v989
        %v991 = vrot.slane %v977, %v990
        %v992 = vcombine.low %v960, %v975
        %v993 = vcombine.high %v960, %v975
        %v995 = vunpack.c.l.s4 1934713408
        %v996 = vunpack.c.0.s8 %v995
        %v997 = vlaneseq
        %v998 = vshrl.u32 %v997, 7
        %v999 = vsub.s32 %v996, %v998
        %v1000 = vrot.slane %v992, %v999
        %v1002 = vunpack.c.l.s4 1934713408
        %v1003 = vunpack.c.0.s8 %v1002
        %v1004 = vlaneseq
        %v1005 = vshrl.u32 %v1004, 7
        %v1006 = vsub.s32 %v1003, %v1005
        %v1007 = vrot.slane %v993, %v1006
        %v1008 = vcombine.high %v984, 0
        %v1009 = vcombine.high %v991, 0
        %v1010 = vcombine.high %v1000, 0
        %v1011 = vcombine.high %v1007, 0
        %v1012 = vcombine.low %v918, %v925
        %v1014 = vunpack.c.l.s4 1983009808
        %v1015 = vunpack.c.0.s8 %v1014
        %v1016 = vlaneseq
        %v1017 = vshrl.u32 %v1016, 7
        %v1018 = vsub.s32 %v1015, %v1017
        %v1019 = vrot.slane %v1012, %v1018
        %v1020 = vcombine.low %v942, %v943
        %v1022 = vunpack.c.l.s4 1983009808
        %v1023 = vunpack.c.0.s8 %v1022
        %v1024 = vlaneseq
        %v1025 = vshrl.u32 %v1024, 7
        %v1026 = vsub.s32 %v1023, %v1025
        %v1027 = vrot.slane %v1020, %v1026
        %v1028 = vcombine.low %v1019, %v1027
        %v1030 = vunpack.c.l.s4 1934713408
        %v1031 = vunpack.c.0.s8 %v1030
        %v1032 = vlaneseq
        %v1033 = vshrl.u32 %v1032, 7
        %v1034 = vsub.s32 %v1031, %v1033
        %v1035 = vrot.slane %v1028, %v1034
        %v1036 = vcombine.high %v1035, 0
        %v1037 = vcombine.low %v984, %v991
        %v1039 = vunpack.c.l.s4 1983009808
        %v1040 = vunpack.c.0.s8 %v1039
        %v1041 = vlaneseq
        %v1042 = vshrl.u32 %v1041, 7
        %v1043 = vsub.s32 %v1040, %v1042
        %v1044 = vrot.slane %v1037, %v1043
        %v1045 = vcombine.low %v1008, %v1009
        %v1047 = vunpack.c.l.s4 1983009808
        %v1048 = vunpack.c.0.s8 %v1047
        %v1049 = vlaneseq
        %v1050 = vshrl.u32 %v1049, 7
        %v1051 = vsub.s32 %v1048, %v1050
        %v1052 = vrot.slane %v1045, %v1051
        %v1053 = vcombine.low %v1044, %v1052
        %v1055 = vunpack.c.l.s4 1934713408
        %v1056 = vunpack.c.0.s8 %v1055
        %v1057 = vlaneseq
        %v1058 = vshrl.u32 %v1057, 7
        %v1059 = vsub.s32 %v1056, %v1058
        %v1060 = vrot.slane %v1053, %v1059
        %v1061 = vcombine.high %v1060, 0
        %v1062 = vcombine.low %v934, %v941
        %v1064 = vunpack.c.l.s4 1983009808
        %v1065 = vunpack.c.0.s8 %v1064
        %v1066 = vlaneseq
        %v1067 = vshrl.u32 %v1066, 7
        %v1068 = vsub.s32 %v1065, %v1067
        %v1069 = vrot.slane %v1062, %v1068
        %v1070 = vcombine.low %v944, %v945
        %v1072 = vunpack.c.l.s4 1983009808
        %v1073 = vunpack.c.0.s8 %v1072
        %v1074 = vlaneseq
        %v1075 = vshrl.u32 %v1074, 7
        %v1076 = vsub.s32 %v1073, %v1075
        %v1077 = vrot.slane %v1070, %v1076
        %v1078 = vcombine.low %v1069, %v1077
        %v1080 = vunpack.c.l.s4 1934713408
        %v1081 = vunpack.c.0.s8 %v1080
        %v1082 = vlaneseq
        %v1083 = vshrl.u32 %v1082, 7
        %v1084 = vsub.s32 %v1081, %v1083
        %v1085 = vrot.slane %v1078, %v1084
        %v1086 = vcombine.high %v1085, 0
        %v1087 = vcombine.low %v1000, %v1007
        %v1089 = vunpack.c.l.s4 1983009808
        %v1090 = vunpack.c.0.s8 %v1089
        %v1091 = vlaneseq
        %v1092 = vshrl.u32 %v1091, 7
        %v1093 = vsub.s32 %v1090, %v1092
        %v1094 = vrot.slane %v1087, %v1093
        %v1095 = vcombine.low %v1010, %v1011
        %v1097 = vunpack.c.l.s4 1983009808
        %v1098 = vunpack.c.0.s8 %v1097
        %v1099 = vlaneseq
        %v1100 = vshrl.u32 %v1099, 7
        %v1101 = vsub.s32 %v1098, %v1100
        %v1102 = vrot.slane %v1095, %v1101
        %v1103 = vcombine.low %v1094, %v1102
        %v1105 = vunpack.c.l.s4 1934713408
        %v1106 = vunpack.c.0.s8 %v1105
        %v1107 = vlaneseq
        %v1108 = vshrl.u32 %v1107, 7
        %v1109 = vsub.s32 %v1106, %v1108
        %v1110 = vrot.slane %v1103, %v1109
        %v1111 = vcombine.high %v1110, 0
        %v1114 = vpack.i.b16 %v1060, %v1035
        %v1115 = vshrl.u32 %v1035, 16
        %v1116 = vshrl.u32 %v1060, 16
        %v1117 = vpack.i.b16 %v1116, %v1115
        %v1120 = vpack.i.b16 %v1061, %v1036
        %v1121 = vshrl.u32 %v1036, 16
        %v1122 = vshrl.u32 %v1061, 16
        %v1123 = vpack.i.b16 %v1122, %v1121
        %v1126 = vpack.i.b16 %v1110, %v1085
        %v1127 = vshrl.u32 %v1085, 16
        %v1128 = vshrl.u32 %v1110, 16
        %v1129 = vpack.i.b16 %v1128, %v1127
        %v1132 = vpack.i.b16 %v1111, %v1086
        %v1133 = vshrl.u32 %v1086, 16
        %v1134 = vshrl.u32 %v1111, 16
        %v1135 = vpack.i.b16 %v1134, %v1133
        %1136 = vrot.lane.b32.xlu0 %v850, 96
        %v1137 = vpop.permute.xlu0 %1136
        %1138 = vrot.lane.b32.xlu0 %v853, 96
        %v1139 = vpop.permute.xlu0 %1138
        %1140 = vrot.lane.b32.xlu0 %v855, 96
        %v1141 = vpop.permute.xlu0 %1140
        %1142 = vrot.lane.b32.xlu0 %v857, 96
        %v1143 = vpop.permute.xlu0 %1142
        %v1146 = vpack.i.b16 %v1139, %v1137
        %v1148 = vshrl.u32 %v1137, 16
        %v1149 = vshrl.u32 %v1139, 16
        %v1150 = vpack.i.b16 %v1149, %v1148
        %v1154 = vpack.i.b16 %v1143, %v1141
        %v1156 = vshrl.u32 %v1141, 16
        %v1157 = vshrl.u32 %v1143, 16
        %v1158 = vpack.i.b16 %v1157, %v1156
        %v1160 = vcombine.high %v1146, %v875
        %v1162 = vunpack.c.l.s4 1983009808
        %v1163 = vunpack.c.0.s8 %v1162
        %v1164 = vlaneseq
        %v1165 = vshrl.u32 %v1164, 7
        %v1166 = vsub.s32 %v1163, %v1165
        %v1167 = vrot.slane %v1146, %v1166
        %v1169 = vunpack.c.l.s4 1983009808
        %v1170 = vunpack.c.0.s8 %v1169
        %v1171 = vlaneseq
        %v1172 = vshrl.u32 %v1171, 7
        %v1173 = vsub.s32 %v1170, %v1172
        %v1174 = vrot.slane %v1160, %v1173
        %v1175 = vcombine.high %v1154, %v875
        %v1177 = vunpack.c.l.s4 1983009808
        %v1178 = vunpack.c.0.s8 %v1177
        %v1179 = vlaneseq
        %v1180 = vshrl.u32 %v1179, 7
        %v1181 = vsub.s32 %v1178, %v1180
        %v1182 = vrot.slane %v1154, %v1181
        %v1184 = vunpack.c.l.s4 1983009808
        %v1185 = vunpack.c.0.s8 %v1184
        %v1186 = vlaneseq
        %v1187 = vshrl.u32 %v1186, 7
        %v1188 = vsub.s32 %v1185, %v1187
        %v1189 = vrot.slane %v1175, %v1188
        %v1190 = vcombine.low %v1167, %v1182
        %v1191 = vcombine.high %v1167, %v1182
        %v1193 = vunpack.c.l.s4 1934713408
        %v1194 = vunpack.c.0.s8 %v1193
        %v1195 = vlaneseq
        %v1196 = vshrl.u32 %v1195, 7
        %v1197 = vsub.s32 %v1194, %v1196
        %v1198 = vrot.slane %v1190, %v1197
        %v1200 = vunpack.c.l.s4 1934713408
        %v1201 = vunpack.c.0.s8 %v1200
        %v1202 = vlaneseq
        %v1203 = vshrl.u32 %v1202, 7
        %v1204 = vsub.s32 %v1201, %v1203
        %v1205 = vrot.slane %v1191, %v1204
        %v1206 = vcombine.low %v1174, %v1189
        %v1207 = vcombine.high %v1174, %v1189
        %v1209 = vunpack.c.l.s4 1934713408
        %v1210 = vunpack.c.0.s8 %v1209
        %v1211 = vlaneseq
        %v1212 = vshrl.u32 %v1211, 7
        %v1213 = vsub.s32 %v1210, %v1212
        %v1214 = vrot.slane %v1206, %v1213
        %v1216 = vunpack.c.l.s4 1934713408
        %v1217 = vunpack.c.0.s8 %v1216
        %v1218 = vlaneseq
        %v1219 = vshrl.u32 %v1218, 7
        %v1220 = vsub.s32 %v1217, %v1219
        %v1221 = vrot.slane %v1207, %v1220
        %v1222 = vcombine.high %v1198, 0
        %v1223 = vcombine.high %v1205, 0
        %v1224 = vcombine.high %v1214, 0
        %v1225 = vcombine.high %v1221, 0
        %v1226 = vcombine.high %v1150, %v878
        %v1228 = vunpack.c.l.s4 1983009808
        %v1229 = vunpack.c.0.s8 %v1228
        %v1230 = vlaneseq
        %v1231 = vshrl.u32 %v1230, 7
        %v1232 = vsub.s32 %v1229, %v1231
        %v1233 = vrot.slane %v1150, %v1232
        %v1235 = vunpack.c.l.s4 1983009808
        %v1236 = vunpack.c.0.s8 %v1235
        %v1237 = vlaneseq
        %v1238 = vshrl.u32 %v1237, 7
        %v1239 = vsub.s32 %v1236, %v1238
        %v1240 = vrot.slane %v1226, %v1239
        %v1241 = vcombine.high %v1158, %v878
        %v1243 = vunpack.c.l.s4 1983009808
        %v1244 = vunpack.c.0.s8 %v1243
        %v1245 = vlaneseq
        %v1246 = vshrl.u32 %v1245, 7
        %v1247 = vsub.s32 %v1244, %v1246
        %v1248 = vrot.slane %v1158, %v1247
        %v1250 = vunpack.c.l.s4 1983009808
        %v1251 = vunpack.c.0.s8 %v1250
        %v1252 = vlaneseq
        %v1253 = vshrl.u32 %v1252, 7
        %v1254 = vsub.s32 %v1251, %v1253
        %v1255 = vrot.slane %v1241, %v1254
        %v1256 = vcombine.low %v1233, %v1248
        %v1257 = vcombine.high %v1233, %v1248
        %v1259 = vunpack.c.l.s4 1934713408
        %v1260 = vunpack.c.0.s8 %v1259
        %v1261 = vlaneseq
        %v1262 = vshrl.u32 %v1261, 7
        %v1263 = vsub.s32 %v1260, %v1262
        %v1264 = vrot.slane %v1256, %v1263
        %v1266 = vunpack.c.l.s4 1934713408
        %v1267 = vunpack.c.0.s8 %v1266
        %v1268 = vlaneseq
        %v1269 = vshrl.u32 %v1268, 7
        %v1270 = vsub.s32 %v1267, %v1269
        %v1271 = vrot.slane %v1257, %v1270
        %v1272 = vcombine.low %v1240, %v1255
        %v1273 = vcombine.high %v1240, %v1255
        %v1275 = vunpack.c.l.s4 1934713408
        %v1276 = vunpack.c.0.s8 %v1275
        %v1277 = vlaneseq
        %v1278 = vshrl.u32 %v1277, 7
        %v1279 = vsub.s32 %v1276, %v1278
        %v1280 = vrot.slane %v1272, %v1279
        %v1282 = vunpack.c.l.s4 1934713408
        %v1283 = vunpack.c.0.s8 %v1282
        %v1284 = vlaneseq
        %v1285 = vshrl.u32 %v1284, 7
        %v1286 = vsub.s32 %v1283, %v1285
        %v1287 = vrot.slane %v1273, %v1286
        %v1288 = vcombine.high %v1264, 0
        %v1289 = vcombine.high %v1271, 0
        %v1290 = vcombine.high %v1280, 0
        %v1291 = vcombine.high %v1287, 0
        %v1292 = vcombine.low %v1198, %v1205
        %v1294 = vunpack.c.l.s4 1983009808
        %v1295 = vunpack.c.0.s8 %v1294
        %v1296 = vlaneseq
        %v1297 = vshrl.u32 %v1296, 7
        %v1298 = vsub.s32 %v1295, %v1297
        %v1299 = vrot.slane %v1292, %v1298
        %v1300 = vcombine.low %v1222, %v1223
        %v1302 = vunpack.c.l.s4 1983009808
        %v1303 = vunpack.c.0.s8 %v1302
        %v1304 = vlaneseq
        %v1305 = vshrl.u32 %v1304, 7
        %v1306 = vsub.s32 %v1303, %v1305
        %v1307 = vrot.slane %v1300, %v1306
        %v1308 = vcombine.low %v1299, %v1307
        %v1310 = vunpack.c.l.s4 1934713408
        %v1311 = vunpack.c.0.s8 %v1310
        %v1312 = vlaneseq
        %v1313 = vshrl.u32 %v1312, 7
        %v1314 = vsub.s32 %v1311, %v1313
        %v1315 = vrot.slane %v1308, %v1314
        %v1316 = vcombine.high %v1315, 0
        %v1317 = vcombine.low %v1264, %v1271
        %v1319 = vunpack.c.l.s4 1983009808
        %v1320 = vunpack.c.0.s8 %v1319
        %v1321 = vlaneseq
        %v1322 = vshrl.u32 %v1321, 7
        %v1323 = vsub.s32 %v1320, %v1322
        %v1324 = vrot.slane %v1317, %v1323
        %v1325 = vcombine.low %v1288, %v1289
        %v1327 = vunpack.c.l.s4 1983009808
        %v1328 = vunpack.c.0.s8 %v1327
        %v1329 = vlaneseq
        %v1330 = vshrl.u32 %v1329, 7
        %v1331 = vsub.s32 %v1328, %v1330
        %v1332 = vrot.slane %v1325, %v1331
        %v1333 = vcombine.low %v1324, %v1332
        %v1335 = vunpack.c.l.s4 1934713408
        %v1336 = vunpack.c.0.s8 %v1335
        %v1337 = vlaneseq
        %v1338 = vshrl.u32 %v1337, 7
        %v1339 = vsub.s32 %v1336, %v1338
        %v1340 = vrot.slane %v1333, %v1339
        %v1341 = vcombine.high %v1340, 0
        %v1342 = vcombine.low %v1214, %v1221
        %v1344 = vunpack.c.l.s4 1983009808
        %v1345 = vunpack.c.0.s8 %v1344
        %v1346 = vlaneseq
        %v1347 = vshrl.u32 %v1346, 7
        %v1348 = vsub.s32 %v1345, %v1347
        %v1349 = vrot.slane %v1342, %v1348
        %v1350 = vcombine.low %v1224, %v1225
        %v1352 = vunpack.c.l.s4 1983009808
        %v1353 = vunpack.c.0.s8 %v1352
        %v1354 = vlaneseq
        %v1355 = vshrl.u32 %v1354, 7
        %v1356 = vsub.s32 %v1353, %v1355
        %v1357 = vrot.slane %v1350, %v1356
        %v1358 = vcombine.low %v1349, %v1357
        %v1360 = vunpack.c.l.s4 1934713408
        %v1361 = vunpack.c.0.s8 %v1360
        %v1362 = vlaneseq
        %v1363 = vshrl.u32 %v1362, 7
        %v1364 = vsub.s32 %v1361, %v1363
        %v1365 = vrot.slane %v1358, %v1364
        %v1366 = vcombine.high %v1365, 0
        %v1367 = vcombine.low %v1280, %v1287
        %v1369 = vunpack.c.l.s4 1983009808
        %v1370 = vunpack.c.0.s8 %v1369
        %v1371 = vlaneseq
        %v1372 = vshrl.u32 %v1371, 7
        %v1373 = vsub.s32 %v1370, %v1372
        %v1374 = vrot.slane %v1367, %v1373
        %v1375 = vcombine.low %v1290, %v1291
        %v1377 = vunpack.c.l.s4 1983009808
        %v1378 = vunpack.c.0.s8 %v1377
        %v1379 = vlaneseq
        %v1380 = vshrl.u32 %v1379, 7
        %v1381 = vsub.s32 %v1378, %v1380
        %v1382 = vrot.slane %v1375, %v1381
        %v1383 = vcombine.low %v1374, %v1382
        %v1385 = vunpack.c.l.s4 1934713408
        %v1386 = vunpack.c.0.s8 %v1385
        %v1387 = vlaneseq
        %v1388 = vshrl.u32 %v1387, 7
        %v1389 = vsub.s32 %v1386, %v1388
        %v1390 = vrot.slane %v1383, %v1389
        %v1391 = vcombine.high %v1390, 0
        %v1394 = vpack.i.b16 %v1340, %v1315
        %v1395 = vshrl.u32 %v1315, 16
        %v1396 = vshrl.u32 %v1340, 16
        %v1397 = vpack.i.b16 %v1396, %v1395
        %v1400 = vpack.i.b16 %v1341, %v1316
        %v1401 = vshrl.u32 %v1316, 16
        %v1402 = vshrl.u32 %v1341, 16
        %v1403 = vpack.i.b16 %v1402, %v1401
        %v1406 = vpack.i.b16 %v1390, %v1365
        %v1407 = vshrl.u32 %v1365, 16
        %v1408 = vshrl.u32 %v1390, 16
        %v1409 = vpack.i.b16 %v1408, %v1407
        %v1412 = vpack.i.b16 %v1391, %v1366
        %v1413 = vshrl.u32 %v1366, 16
        %v1414 = vshrl.u32 %v1391, 16
        %v1415 = vpack.i.b16 %v1414, %v1413
        %1416 = vrot.lane.b32.xlu0 %v850, 64
        %v1417 = vpop.permute.xlu0 %1416
        %1418 = vrot.lane.b32.xlu0 %v853, 64
        %v1419 = vpop.permute.xlu0 %1418
        %1420 = vrot.lane.b32.xlu0 %v855, 64
        %v1421 = vpop.permute.xlu0 %1420
        %1422 = vrot.lane.b32.xlu0 %v857, 64
        %v1423 = vpop.permute.xlu0 %1422
        %v1426 = vpack.i.b16 %v1419, %v1417
        %v1428 = vshrl.u32 %v1417, 16
        %v1429 = vshrl.u32 %v1419, 16
        %v1430 = vpack.i.b16 %v1429, %v1428
        %v1434 = vpack.i.b16 %v1423, %v1421
        %v1436 = vshrl.u32 %v1421, 16
        %v1437 = vshrl.u32 %v1423, 16
        %v1438 = vpack.i.b16 %v1437, %v1436
        %v1440 = vcombine.high %v1426, %v875
        %v1442 = vunpack.c.l.s4 1983009808
        %v1443 = vunpack.c.0.s8 %v1442
        %v1444 = vlaneseq
        %v1445 = vshrl.u32 %v1444, 7
        %v1446 = vsub.s32 %v1443, %v1445
        %v1447 = vrot.slane %v1426, %v1446
        %v1449 = vunpack.c.l.s4 1983009808
        %v1450 = vunpack.c.0.s8 %v1449
        %v1451 = vlaneseq
        %v1452 = vshrl.u32 %v1451, 7
        %v1453 = vsub.s32 %v1450, %v1452
        %v1454 = vrot.slane %v1440, %v1453
        %v1455 = vcombine.high %v1434, %v875
        %v1457 = vunpack.c.l.s4 1983009808
        %v1458 = vunpack.c.0.s8 %v1457
        %v1459 = vlaneseq
        %v1460 = vshrl.u32 %v1459, 7
        %v1461 = vsub.s32 %v1458, %v1460
        %v1462 = vrot.slane %v1434, %v1461
        %v1464 = vunpack.c.l.s4 1983009808
        %v1465 = vunpack.c.0.s8 %v1464
        %v1466 = vlaneseq
        %v1467 = vshrl.u32 %v1466, 7
        %v1468 = vsub.s32 %v1465, %v1467
        %v1469 = vrot.slane %v1455, %v1468
        %v1470 = vcombine.low %v1447, %v1462
        %v1471 = vcombine.high %v1447, %v1462
        %v1473 = vunpack.c.l.s4 1934713408
        %v1474 = vunpack.c.0.s8 %v1473
        %v1475 = vlaneseq
        %v1476 = vshrl.u32 %v1475, 7
        %v1477 = vsub.s32 %v1474, %v1476
        %v1478 = vrot.slane %v1470, %v1477
        %v1480 = vunpack.c.l.s4 1934713408
        %v1481 = vunpack.c.0.s8 %v1480
        %v1482 = vlaneseq
        %v1483 = vshrl.u32 %v1482, 7
        %v1484 = vsub.s32 %v1481, %v1483
        %v1485 = vrot.slane %v1471, %v1484
        %v1486 = vcombine.low %v1454, %v1469
        %v1487 = vcombine.high %v1454, %v1469
        %v1489 = vunpack.c.l.s4 1934713408
        %v1490 = vunpack.c.0.s8 %v1489
        %v1491 = vlaneseq
        %v1492 = vshrl.u32 %v1491, 7
        %v1493 = vsub.s32 %v1490, %v1492
        %v1494 = vrot.slane %v1486, %v1493
        %v1496 = vunpack.c.l.s4 1934713408
        %v1497 = vunpack.c.0.s8 %v1496
        %v1498 = vlaneseq
        %v1499 = vshrl.u32 %v1498, 7
        %v1500 = vsub.s32 %v1497, %v1499
        %v1501 = vrot.slane %v1487, %v1500
        %v1502 = vcombine.high %v1478, 0
        %v1503 = vcombine.high %v1485, 0
        %v1504 = vcombine.high %v1494, 0
        %v1505 = vcombine.high %v1501, 0
        %v1506 = vcombine.high %v1430, %v878
        %v1508 = vunpack.c.l.s4 1983009808
        %v1509 = vunpack.c.0.s8 %v1508
        %v1510 = vlaneseq
        %v1511 = vshrl.u32 %v1510, 7
        %v1512 = vsub.s32 %v1509, %v1511
        %v1513 = vrot.slane %v1430, %v1512
        %v1515 = vunpack.c.l.s4 1983009808
        %v1516 = vunpack.c.0.s8 %v1515
        %v1517 = vlaneseq
        %v1518 = vshrl.u32 %v1517, 7
        %v1519 = vsub.s32 %v1516, %v1518
        %v1520 = vrot.slane %v1506, %v1519
        %v1521 = vcombine.high %v1438, %v878
        %v1523 = vunpack.c.l.s4 1983009808
        %v1524 = vunpack.c.0.s8 %v1523
        %v1525 = vlaneseq
        %v1526 = vshrl.u32 %v1525, 7
        %v1527 = vsub.s32 %v1524, %v1526
        %v1528 = vrot.slane %v1438, %v1527
        %v1530 = vunpack.c.l.s4 1983009808
        %v1531 = vunpack.c.0.s8 %v1530
        %v1532 = vlaneseq
        %v1533 = vshrl.u32 %v1532, 7
        %v1534 = vsub.s32 %v1531, %v1533
        %v1535 = vrot.slane %v1521, %v1534
        %v1536 = vcombine.low %v1513, %v1528
        %v1537 = vcombine.high %v1513, %v1528
        %v1539 = vunpack.c.l.s4 1934713408
        %v1540 = vunpack.c.0.s8 %v1539
        %v1541 = vlaneseq
        %v1542 = vshrl.u32 %v1541, 7
        %v1543 = vsub.s32 %v1540, %v1542
        %v1544 = vrot.slane %v1536, %v1543
        %v1546 = vunpack.c.l.s4 1934713408
        %v1547 = vunpack.c.0.s8 %v1546
        %v1548 = vlaneseq
        %v1549 = vshrl.u32 %v1548, 7
        %v1550 = vsub.s32 %v1547, %v1549
        %v1551 = vrot.slane %v1537, %v1550
        %v1552 = vcombine.low %v1520, %v1535
        %v1553 = vcombine.high %v1520, %v1535
        %v1555 = vunpack.c.l.s4 1934713408
        %v1556 = vunpack.c.0.s8 %v1555
        %v1557 = vlaneseq
        %v1558 = vshrl.u32 %v1557, 7
        %v1559 = vsub.s32 %v1556, %v1558
        %v1560 = vrot.slane %v1552, %v1559
        %v1562 = vunpack.c.l.s4 1934713408
        %v1563 = vunpack.c.0.s8 %v1562
        %v1564 = vlaneseq
        %v1565 = vshrl.u32 %v1564, 7
        %v1566 = vsub.s32 %v1563, %v1565
        %v1567 = vrot.slane %v1553, %v1566
        %v1568 = vcombine.high %v1544, 0
        %v1569 = vcombine.high %v1551, 0
        %v1570 = vcombine.high %v1560, 0
        %v1571 = vcombine.high %v1567, 0
        %v1572 = vcombine.low %v1478, %v1485
        %v1574 = vunpack.c.l.s4 1983009808
        %v1575 = vunpack.c.0.s8 %v1574
        %v1576 = vlaneseq
        %v1577 = vshrl.u32 %v1576, 7
        %v1578 = vsub.s32 %v1575, %v1577
        %v1579 = vrot.slane %v1572, %v1578
        %v1580 = vcombine.low %v1502, %v1503
        %v1582 = vunpack.c.l.s4 1983009808
        %v1583 = vunpack.c.0.s8 %v1582
        %v1584 = vlaneseq
        %v1585 = vshrl.u32 %v1584, 7
        %v1586 = vsub.s32 %v1583, %v1585
        %v1587 = vrot.slane %v1580, %v1586
        %v1588 = vcombine.low %v1579, %v1587
        %v1590 = vunpack.c.l.s4 1934713408
        %v1591 = vunpack.c.0.s8 %v1590
        %v1592 = vlaneseq
        %v1593 = vshrl.u32 %v1592, 7
        %v1594 = vsub.s32 %v1591, %v1593
        %v1595 = vrot.slane %v1588, %v1594
        %v1596 = vcombine.high %v1595, 0
        %v1597 = vcombine.low %v1544, %v1551
        %v1599 = vunpack.c.l.s4 1983009808
        %v1600 = vunpack.c.0.s8 %v1599
        %v1601 = vlaneseq
        %v1602 = vshrl.u32 %v1601, 7
        %v1603 = vsub.s32 %v1600, %v1602
        %v1604 = vrot.slane %v1597, %v1603
        %v1605 = vcombine.low %v1568, %v1569
        %v1607 = vunpack.c.l.s4 1983009808
        %v1608 = vunpack.c.0.s8 %v1607
        %v1609 = vlaneseq
        %v1610 = vshrl.u32 %v1609, 7
        %v1611 = vsub.s32 %v1608, %v1610
        %v1612 = vrot.slane %v1605, %v1611
        %v1613 = vcombine.low %v1604, %v1612
        %v1615 = vunpack.c.l.s4 1934713408
        %v1616 = vunpack.c.0.s8 %v1615
        %v1617 = vlaneseq
        %v1618 = vshrl.u32 %v1617, 7
        %v1619 = vsub.s32 %v1616, %v1618
        %v1620 = vrot.slane %v1613, %v1619
        %v1621 = vcombine.high %v1620, 0
        %v1622 = vcombine.low %v1494, %v1501
        %v1624 = vunpack.c.l.s4 1983009808
        %v1625 = vunpack.c.0.s8 %v1624
        %v1626 = vlaneseq
        %v1627 = vshrl.u32 %v1626, 7
        %v1628 = vsub.s32 %v1625, %v1627
        %v1629 = vrot.slane %v1622, %v1628
        %v1630 = vcombine.low %v1504, %v1505
        %v1632 = vunpack.c.l.s4 1983009808
        %v1633 = vunpack.c.0.s8 %v1632
        %v1634 = vlaneseq
        %v1635 = vshrl.u32 %v1634, 7
        %v1636 = vsub.s32 %v1633, %v1635
        %v1637 = vrot.slane %v1630, %v1636
        %v1638 = vcombine.low %v1629, %v1637
        %v1640 = vunpack.c.l.s4 1934713408
        %v1641 = vunpack.c.0.s8 %v1640
        %v1642 = vlaneseq
        %v1643 = vshrl.u32 %v1642, 7
        %v1644 = vsub.s32 %v1641, %v1643
        %v1645 = vrot.slane %v1638, %v1644
        %v1646 = vcombine.high %v1645, 0
        %v1647 = vcombine.low %v1560, %v1567
        %v1649 = vunpack.c.l.s4 1983009808
        %v1650 = vunpack.c.0.s8 %v1649
        %v1651 = vlaneseq
        %v1652 = vshrl.u32 %v1651, 7
        %v1653 = vsub.s32 %v1650, %v1652
        %v1654 = vrot.slane %v1647, %v1653
        %v1655 = vcombine.low %v1570, %v1571
        %v1657 = vunpack.c.l.s4 1983009808
        %v1658 = vunpack.c.0.s8 %v1657
        %v1659 = vlaneseq
        %v1660 = vshrl.u32 %v1659, 7
        %v1661 = vsub.s32 %v1658, %v1660
        %v1662 = vrot.slane %v1655, %v1661
        %v1663 = vcombine.low %v1654, %v1662
        %v1665 = vunpack.c.l.s4 1934713408
        %v1666 = vunpack.c.0.s8 %v1665
        %v1667 = vlaneseq
        %v1668 = vshrl.u32 %v1667, 7
        %v1669 = vsub.s32 %v1666, %v1668
        %v1670 = vrot.slane %v1663, %v1669
        %v1671 = vcombine.high %v1670, 0
        %v1674 = vpack.i.b16 %v1620, %v1595
        %v1675 = vshrl.u32 %v1595, 16
        %v1676 = vshrl.u32 %v1620, 16
        %v1677 = vpack.i.b16 %v1676, %v1675
        %v1680 = vpack.i.b16 %v1621, %v1596
        %v1681 = vshrl.u32 %v1596, 16
        %v1682 = vshrl.u32 %v1621, 16
        %v1683 = vpack.i.b16 %v1682, %v1681
        %v1686 = vpack.i.b16 %v1670, %v1645
        %v1687 = vshrl.u32 %v1645, 16
        %v1688 = vshrl.u32 %v1670, 16
        %v1689 = vpack.i.b16 %v1688, %v1687
        %v1692 = vpack.i.b16 %v1671, %v1646
        %v1693 = vshrl.u32 %v1646, 16
        %v1694 = vshrl.u32 %v1671, 16
        %v1695 = vpack.i.b16 %v1694, %v1693
        %vm1696 = vcmask 64512
        %v1698 = vsel %vm1696, %v1114, 0
        %v1701 = vsel %vm1696, %v1394, 0
        %1703 = vmatprep.subr.bf16.mxu0 0
        %1704 = vmatpush1.bf16.xpose.msra.mxu0 %v1701
        %1705 = vmatprep.subr.bf16.mxu0 0
        %1706 = vmatpush1.bf16.xpose.msra.mxu0 0
        %1707 = vmatprep.subr.bf16.mxu0 0
        %1708 = vmatpush1.bf16.xpose.msra.mxu0 0
        %1709 = vmatprep.subr.bf16.mxu0 0
        %1710 = vmatpush1.bf16.xpose.msra.mxu0 0
        %1711 = vmatprep.subr.bf16.mxu0 0
        %1712 = vmatpush1.bf16.xpose.msra.mxu0 0
        %1713 = vmatprep.subr.bf16.mxu0 0
        %1714 = vmatpush1.bf16.xpose.msra.mxu0 0
        %1715 = vmatprep.subr.bf16.mxu0 0
        %1716 = vmatpush1.bf16.xpose.msra.mxu0 0
        %1717 = vmatprep.subr.bf16.mxu0 0
        %1718 = vmatpush1.bf16.xpose.msra.mxu0 0
        %1719 = vmatprep.subr.bf16.mxu0 0
        %1720 = vmatpush1.bf16.xpose.msra.mxu0 0
        %1721 = vmatprep.subr.bf16.mxu0 0
        %1722 = vmatpush1.bf16.xpose.msra.mxu0 0
        %1723 = vmatprep.subr.bf16.mxu0 0
        %1724 = vmatpush1.bf16.xpose.msra.mxu0 0
        %1725 = vmatprep.subr.bf16.mxu0 0
        %1726 = vmatpush1.bf16.xpose.msra.mxu0 0
        %1727 = vmatprep.subr.bf16.mxu0 0
        %1728 = vmatpush1.bf16.xpose.msra.mxu0 0
        %1729 = vmatprep.subr.bf16.mxu0 0
        %1730 = vmatpush1.bf16.xpose.msra.mxu0 0
        %1731 = vmatprep.subr.bf16.mxu0 0
        %1732 = vmatpush1.bf16.xpose.msra.mxu0 0
        %1733 = vmatprep.subr.bf16.mxu0 0
        %1734 = vmatpush1.bf16.xpose.msra.mxu0 0
        %1735 = vmatprep.mubr.bf16.mxu0 0
        %1736 = vmatmul.mubr.bf16.gmra.mrb[0].mxu0 %v1698
        %v1737 = vpop.f32.mrb[0].mxu0
        %v1738 = vadd.f32 0.0, %v1737
        %v1739 = vpop.f32.mrb[0].mxu0
        %v1740 = vpop.f32.mrb[0].mxu0
        %v1741 = vpop.f32.mrb[0].mxu0
        %1742 = vdwg.mxu0
        %v1744 = vsel %vm1696, %v1117, 0
        %v1747 = vsel %vm1696, %v1397, 0
        %1749 = vmatprep.subr.bf16.mxu0 0
        %1750 = vmatpush1.bf16.xpose.msra.mxu0 %v1747
        %1751 = vmatprep.subr.bf16.mxu0 0
        %1752 = vmatpush1.bf16.xpose.msra.mxu0 0
        %1753 = vmatprep.subr.bf16.mxu0 0
        %1754 = vmatpush1.bf16.xpose.msra.mxu0 0
        %1755 = vmatprep.subr.bf16.mxu0 0
        %1756 = vmatpush1.bf16.xpose.msra.mxu0 0
        %1757 = vmatprep.subr.bf16.mxu0 0
        %1758 = vmatpush1.bf16.xpose.msra.mxu0 0
        %1759 = vmatprep.subr.bf16.mxu0 0
        %1760 = vmatpush1.bf16.xpose.msra.mxu0 0
        %1761 = vmatprep.subr.bf16.mxu0 0
        %1762 = vmatpush1.bf16.xpose.msra.mxu0 0
        %1763 = vmatprep.subr.bf16.mxu0 0
        %1764 = vmatpush1.bf16.xpose.msra.mxu0 0
        %1765 = vmatprep.subr.bf16.mxu0 0
        %1766 = vmatpush1.bf16.xpose.msra.mxu0 0
        %1767 = vmatprep.subr.bf16.mxu0 0
        %1768 = vmatpush1.bf16.xpose.msra.mxu0 0
        %1769 = vmatprep.subr.bf16.mxu0 0
        %1770 = vmatpush1.bf16.xpose.msra.mxu0 0
        %1771 = vmatprep.subr.bf16.mxu0 0
        %1772 = vmatpush1.bf16.xpose.msra.mxu0 0
        %1773 = vmatprep.subr.bf16.mxu0 0
        %1774 = vmatpush1.bf16.xpose.msra.mxu0 0
        %1775 = vmatprep.subr.bf16.mxu0 0
        %1776 = vmatpush1.bf16.xpose.msra.mxu0 0
        %1777 = vmatprep.subr.bf16.mxu0 0
        %1778 = vmatpush1.bf16.xpose.msra.mxu0 0
        %1779 = vmatprep.subr.bf16.mxu0 0
        %1780 = vmatpush1.bf16.xpose.msra.mxu0 0
        %1781 = vmatprep.mubr.bf16.mxu0 0
        %1782 = vmatmul.mubr.bf16.gmra.mrb[0].mxu0 %v1744
        %v1783 = vpop.f32.mrb[0].mxu0
        %v1784 = vadd.f32 0.0, %v1783
        %v1785 = vpop.f32.mrb[0].mxu0
        %v1786 = vpop.f32.mrb[0].mxu0
        %v1787 = vpop.f32.mrb[0].mxu0
        %1788 = vdwg.mxu0
        %v1790 = vsel %vm1696, %v1120, 0
        %v1793 = vsel %vm1696, %v1400, 0
        %1795 = vmatprep.subr.bf16.mxu0 0
        %1796 = vmatpush1.bf16.xpose.msra.mxu0 %v1793
        %1797 = vmatprep.subr.bf16.mxu0 0
        %1798 = vmatpush1.bf16.xpose.msra.mxu0 0
        %1799 = vmatprep.subr.bf16.mxu0 0
        %1800 = vmatpush1.bf16.xpose.msra.mxu0 0
        %1801 = vmatprep.subr.bf16.mxu0 0
        %1802 = vmatpush1.bf16.xpose.msra.mxu0 0
        %1803 = vmatprep.subr.bf16.mxu0 0
        %1804 = vmatpush1.bf16.xpose.msra.mxu0 0
        %1805 = vmatprep.subr.bf16.mxu0 0
        %1806 = vmatpush1.bf16.xpose.msra.mxu0 0
        %1807 = vmatprep.subr.bf16.mxu0 0
        %1808 = vmatpush1.bf16.xpose.msra.mxu0 0
        %1809 = vmatprep.subr.bf16.mxu0 0
        %1810 = vmatpush1.bf16.xpose.msra.mxu0 0
        %1811 = vmatprep.subr.bf16.mxu0 0
        %1812 = vmatpush1.bf16.xpose.msra.mxu0 0
        %1813 = vmatprep.subr.bf16.mxu0 0
        %1814 = vmatpush1.bf16.xpose.msra.mxu0 0
        %1815 = vmatprep.subr.bf16.mxu0 0
        %1816 = vmatpush1.bf16.xpose.msra.mxu0 0
        %1817 = vmatprep.subr.bf16.mxu0 0
        %1818 = vmatpush1.bf16.xpose.msra.mxu0 0
        %1819 = vmatprep.subr.bf16.mxu0 0
        %1820 = vmatpush1.bf16.xpose.msra.mxu0 0
        %1821 = vmatprep.subr.bf16.mxu0 0
        %1822 = vmatpush1.bf16.xpose.msra.mxu0 0
        %1823 = vmatprep.subr.bf16.mxu0 0
        %1824 = vmatpush1.bf16.xpose.msra.mxu0 0
        %1825 = vmatprep.subr.bf16.mxu0 0
        %1826 = vmatpush1.bf16.xpose.msra.mxu0 0
        %1827 = vmatprep.mubr.bf16.mxu0 0
        %1828 = vmatmul.mubr.bf16.gmra.mrb[0].mxu0 %v1790
        %v1829 = vpop.f32.mrb[0].mxu0
        %v1830 = vadd.f32 0.0, %v1829
        %v1831 = vpop.f32.mrb[0].mxu0
        %v1832 = vpop.f32.mrb[0].mxu0
        %v1833 = vpop.f32.mrb[0].mxu0
        %1834 = vdwg.mxu0
        %v1836 = vsel %vm1696, %v1123, 0
        %v1839 = vsel %vm1696, %v1403, 0
        %1841 = vmatprep.subr.bf16.mxu0 0
        %1842 = vmatpush1.bf16.xpose.msra.mxu0 %v1839
        %1843 = vmatprep.subr.bf16.mxu0 0
        %1844 = vmatpush1.bf16.xpose.msra.mxu0 0
        %1845 = vmatprep.subr.bf16.mxu0 0
        %1846 = vmatpush1.bf16.xpose.msra.mxu0 0
        %1847 = vmatprep.subr.bf16.mxu0 0
        %1848 = vmatpush1.bf16.xpose.msra.mxu0 0
        %1849 = vmatprep.subr.bf16.mxu0 0
        %1850 = vmatpush1.bf16.xpose.msra.mxu0 0
        %1851 = vmatprep.subr.bf16.mxu0 0
        %1852 = vmatpush1.bf16.xpose.msra.mxu0 0
        %1853 = vmatprep.subr.bf16.mxu0 0
        %1854 = vmatpush1.bf16.xpose.msra.mxu0 0
        %1855 = vmatprep.subr.bf16.mxu0 0
        %1856 = vmatpush1.bf16.xpose.msra.mxu0 0
        %1857 = vmatprep.subr.bf16.mxu0 0
        %1858 = vmatpush1.bf16.xpose.msra.mxu0 0
        %1859 = vmatprep.subr.bf16.mxu0 0
        %1860 = vmatpush1.bf16.xpose.msra.mxu0 0
        %1861 = vmatprep.subr.bf16.mxu0 0
        %1862 = vmatpush1.bf16.xpose.msra.mxu0 0
        %1863 = vmatprep.subr.bf16.mxu0 0
        %1864 = vmatpush1.bf16.xpose.msra.mxu0 0
        %1865 = vmatprep.subr.bf16.mxu0 0
        %1866 = vmatpush1.bf16.xpose.msra.mxu0 0
        %1867 = vmatprep.subr.bf16.mxu0 0
        %1868 = vmatpush1.bf16.xpose.msra.mxu0 0
        %1869 = vmatprep.subr.bf16.mxu0 0
        %1870 = vmatpush1.bf16.xpose.msra.mxu0 0
        %1871 = vmatprep.subr.bf16.mxu0 0
        %1872 = vmatpush1.bf16.xpose.msra.mxu0 0
        %1873 = vmatprep.mubr.bf16.mxu0 0
        %1874 = vmatmul.mubr.bf16.gmra.mrb[0].mxu0 %v1836
        %v1875 = vpop.f32.mrb[0].mxu0
        %v1876 = vadd.f32 0.0, %v1875
        %v1877 = vpop.f32.mrb[0].mxu0
        %v1878 = vpop.f32.mrb[0].mxu0
        %v1879 = vpop.f32.mrb[0].mxu0
        %1880 = vdwg.mxu0
        %v1882 = vsel %vm1696, %v1126, 0
        %v1885 = vsel %vm1696, %v1406, 0
        %1887 = vmatprep.subr.bf16.mxu0 0
        %1888 = vmatpush1.bf16.xpose.msra.mxu0 %v1885
        %1889 = vmatprep.subr.bf16.mxu0 0
        %1890 = vmatpush1.bf16.xpose.msra.mxu0 0
        %1891 = vmatprep.subr.bf16.mxu0 0
        %1892 = vmatpush1.bf16.xpose.msra.mxu0 0
        %1893 = vmatprep.subr.bf16.mxu0 0
        %1894 = vmatpush1.bf16.xpose.msra.mxu0 0
        %1895 = vmatprep.subr.bf16.mxu0 0
        %1896 = vmatpush1.bf16.xpose.msra.mxu0 0
        %1897 = vmatprep.subr.bf16.mxu0 0
        %1898 = vmatpush1.bf16.xpose.msra.mxu0 0
        %1899 = vmatprep.subr.bf16.mxu0 0
        %1900 = vmatpush1.bf16.xpose.msra.mxu0 0
        %1901 = vmatprep.subr.bf16.mxu0 0
        %1902 = vmatpush1.bf16.xpose.msra.mxu0 0
        %1903 = vmatprep.subr.bf16.mxu0 0
        %1904 = vmatpush1.bf16.xpose.msra.mxu0 0
        %1905 = vmatprep.subr.bf16.mxu0 0
        %1906 = vmatpush1.bf16.xpose.msra.mxu0 0
        %1907 = vmatprep.subr.bf16.mxu0 0
        %1908 = vmatpush1.bf16.xpose.msra.mxu0 0
        %1909 = vmatprep.subr.bf16.mxu0 0
        %1910 = vmatpush1.bf16.xpose.msra.mxu0 0
        %1911 = vmatprep.subr.bf16.mxu0 0
        %1912 = vmatpush1.bf16.xpose.msra.mxu0 0
        %1913 = vmatprep.subr.bf16.mxu0 0
        %1914 = vmatpush1.bf16.xpose.msra.mxu0 0
        %1915 = vmatprep.subr.bf16.mxu0 0
        %1916 = vmatpush1.bf16.xpose.msra.mxu0 0
        %1917 = vmatprep.subr.bf16.mxu0 0
        %1918 = vmatpush1.bf16.xpose.msra.mxu0 0
        %1919 = vmatprep.mubr.bf16.mxu0 0
        %1920 = vmatmul.mubr.bf16.gmra.mrb[0].mxu0 %v1882
        %v1921 = vpop.f32.mrb[0].mxu0
        %v1922 = vadd.f32 0.0, %v1921
        %v1923 = vpop.f32.mrb[0].mxu0
        %v1924 = vpop.f32.mrb[0].mxu0
        %v1925 = vpop.f32.mrb[0].mxu0
        %1926 = vdwg.mxu0
        %v1928 = vsel %vm1696, %v1129, 0
        %v1931 = vsel %vm1696, %v1409, 0
        %1933 = vmatprep.subr.bf16.mxu0 0
        %1934 = vmatpush1.bf16.xpose.msra.mxu0 %v1931
        %1935 = vmatprep.subr.bf16.mxu0 0
        %1936 = vmatpush1.bf16.xpose.msra.mxu0 0
        %1937 = vmatprep.subr.bf16.mxu0 0
        %1938 = vmatpush1.bf16.xpose.msra.mxu0 0
        %1939 = vmatprep.subr.bf16.mxu0 0
        %1940 = vmatpush1.bf16.xpose.msra.mxu0 0
        %1941 = vmatprep.subr.bf16.mxu0 0
        %1942 = vmatpush1.bf16.xpose.msra.mxu0 0
        %1943 = vmatprep.subr.bf16.mxu0 0
        %1944 = vmatpush1.bf16.xpose.msra.mxu0 0
        %1945 = vmatprep.subr.bf16.mxu0 0
        %1946 = vmatpush1.bf16.xpose.msra.mxu0 0
        %1947 = vmatprep.subr.bf16.mxu0 0
        %1948 = vmatpush1.bf16.xpose.msra.mxu0 0
        %1949 = vmatprep.subr.bf16.mxu0 0
        %1950 = vmatpush1.bf16.xpose.msra.mxu0 0
        %1951 = vmatprep.subr.bf16.mxu0 0
        %1952 = vmatpush1.bf16.xpose.msra.mxu0 0
        %1953 = vmatprep.subr.bf16.mxu0 0
        %1954 = vmatpush1.bf16.xpose.msra.mxu0 0
        %1955 = vmatprep.subr.bf16.mxu0 0
        %1956 = vmatpush1.bf16.xpose.msra.mxu0 0
        %1957 = vmatprep.subr.bf16.mxu0 0
        %1958 = vmatpush1.bf16.xpose.msra.mxu0 0
        %1959 = vmatprep.subr.bf16.mxu0 0
        %1960 = vmatpush1.bf16.xpose.msra.mxu0 0
        %1961 = vmatprep.subr.bf16.mxu0 0
        %1962 = vmatpush1.bf16.xpose.msra.mxu0 0
        %1963 = vmatprep.subr.bf16.mxu0 0
        %1964 = vmatpush1.bf16.xpose.msra.mxu0 0
        %1965 = vmatprep.mubr.bf16.mxu0 0
        %1966 = vmatmul.mubr.bf16.gmra.mrb[0].mxu0 %v1928
        %v1967 = vpop.f32.mrb[0].mxu0
        %v1968 = vadd.f32 0.0, %v1967
        %v1969 = vpop.f32.mrb[0].mxu0
        %v1970 = vpop.f32.mrb[0].mxu0
        %v1971 = vpop.f32.mrb[0].mxu0
        %1972 = vdwg.mxu0
        %v1974 = vsel %vm1696, %v1132, 0
        %v1977 = vsel %vm1696, %v1412, 0
        %1979 = vmatprep.subr.bf16.mxu0 0
        %1980 = vmatpush1.bf16.xpose.msra.mxu0 %v1977
        %1981 = vmatprep.subr.bf16.mxu0 0
        %1982 = vmatpush1.bf16.xpose.msra.mxu0 0
        %1983 = vmatprep.subr.bf16.mxu0 0
        %1984 = vmatpush1.bf16.xpose.msra.mxu0 0
        %1985 = vmatprep.subr.bf16.mxu0 0
        %1986 = vmatpush1.bf16.xpose.msra.mxu0 0
        %1987 = vmatprep.subr.bf16.mxu0 0
        %1988 = vmatpush1.bf16.xpose.msra.mxu0 0
        %1989 = vmatprep.subr.bf16.mxu0 0
        %1990 = vmatpush1.bf16.xpose.msra.mxu0 0
        %1991 = vmatprep.subr.bf16.mxu0 0
        %1992 = vmatpush1.bf16.xpose.msra.mxu0 0
        %1993 = vmatprep.subr.bf16.mxu0 0
        %1994 = vmatpush1.bf16.xpose.msra.mxu0 0
        %1995 = vmatprep.subr.bf16.mxu0 0
        %1996 = vmatpush1.bf16.xpose.msra.mxu0 0
        %1997 = vmatprep.subr.bf16.mxu0 0
        %1998 = vmatpush1.bf16.xpose.msra.mxu0 0
        %1999 = vmatprep.subr.bf16.mxu0 0
        %2000 = vmatpush1.bf16.xpose.msra.mxu0 0
        %2001 = vmatprep.subr.bf16.mxu0 0
        %2002 = vmatpush1.bf16.xpose.msra.mxu0 0
        %2003 = vmatprep.subr.bf16.mxu0 0
        %2004 = vmatpush1.bf16.xpose.msra.mxu0 0
        %2005 = vmatprep.subr.bf16.mxu0 0
        %2006 = vmatpush1.bf16.xpose.msra.mxu0 0
        %2007 = vmatprep.subr.bf16.mxu0 0
        %2008 = vmatpush1.bf16.xpose.msra.mxu0 0
        %2009 = vmatprep.subr.bf16.mxu0 0
        %2010 = vmatpush1.bf16.xpose.msra.mxu0 0
        %2011 = vmatprep.mubr.bf16.mxu0 0
        %2012 = vmatmul.mubr.bf16.gmra.mrb[0].mxu0 %v1974
        %v2013 = vpop.f32.mrb[0].mxu0
        %v2014 = vadd.f32 0.0, %v2013
        %v2015 = vpop.f32.mrb[0].mxu0
        %v2016 = vpop.f32.mrb[0].mxu0
        %v2017 = vpop.f32.mrb[0].mxu0
        %2018 = vdwg.mxu0
        %v2020 = vsel %vm1696, %v1135, 0
        %v2023 = vsel %vm1696, %v1415, 0
        %2025 = vmatprep.subr.bf16.mxu0 0
        %2026 = vmatpush1.bf16.xpose.msra.mxu0 %v2023
        %2027 = vmatprep.subr.bf16.mxu0 0
        %2028 = vmatpush1.bf16.xpose.msra.mxu0 0
        %2029 = vmatprep.subr.bf16.mxu0 0
        %2030 = vmatpush1.bf16.xpose.msra.mxu0 0
        %2031 = vmatprep.subr.bf16.mxu0 0
        %2032 = vmatpush1.bf16.xpose.msra.mxu0 0
        %2033 = vmatprep.subr.bf16.mxu0 0
        %2034 = vmatpush1.bf16.xpose.msra.mxu0 0
        %2035 = vmatprep.subr.bf16.mxu0 0
        %2036 = vmatpush1.bf16.xpose.msra.mxu0 0
        %2037 = vmatprep.subr.bf16.mxu0 0
        %2038 = vmatpush1.bf16.xpose.msra.mxu0 0
        %2039 = vmatprep.subr.bf16.mxu0 0
        %2040 = vmatpush1.bf16.xpose.msra.mxu0 0
        %2041 = vmatprep.subr.bf16.mxu0 0
        %2042 = vmatpush1.bf16.xpose.msra.mxu0 0
        %2043 = vmatprep.subr.bf16.mxu0 0
        %2044 = vmatpush1.bf16.xpose.msra.mxu0 0
        %2045 = vmatprep.subr.bf16.mxu0 0
        %2046 = vmatpush1.bf16.xpose.msra.mxu0 0
        %2047 = vmatprep.subr.bf16.mxu0 0
        %2048 = vmatpush1.bf16.xpose.msra.mxu0 0
        %2049 = vmatprep.subr.bf16.mxu0 0
        %2050 = vmatpush1.bf16.xpose.msra.mxu0 0
        %2051 = vmatprep.subr.bf16.mxu0 0
        %2052 = vmatpush1.bf16.xpose.msra.mxu0 0
        %2053 = vmatprep.subr.bf16.mxu0 0
        %2054 = vmatpush1.bf16.xpose.msra.mxu0 0
        %2055 = vmatprep.subr.bf16.mxu0 0
        %2056 = vmatpush1.bf16.xpose.msra.mxu0 0
        %2057 = vmatprep.mubr.bf16.mxu0 0
        %2058 = vmatmul.mubr.bf16.gmra.mrb[0].mxu0 %v2020
        %v2059 = vpop.f32.mrb[0].mxu0
        %v2060 = vadd.f32 0.0, %v2059
        %v2061 = vpop.f32.mrb[0].mxu0
        %v2062 = vpop.f32.mrb[0].mxu0
        %v2063 = vpop.f32.mrb[0].mxu0
        %2064 = vdwg.mxu0
        %v2065 = vadd.f32 %v1738, %v765
        %v2066 = vadd.f32 %v1784, %v765
        %v2067 = vadd.f32 %v1830, %v765
        %v2068 = vadd.f32 %v1876, %v765
        %v2069 = vadd.f32 %v1922, %v765
        %v2070 = vadd.f32 %v1968, %v765
        %v2071 = vadd.f32 %v2014, %v765
        %v2072 = vadd.f32 %v2060, %v765
        %v2073 = vsel %vm1696, %v2065, -inf
        %2074 = vmax.xlane.f32.xlu0 %v2073
        %v2075 = vpop.xlane.xlu0 %2074
        %v2076 = vsel %vm1696, %v2066, -inf
        %2077 = vmax.xlane.f32.xlu0 %v2076
        %v2078 = vpop.xlane.xlu0 %2077
        %v2079 = vsel %vm1696, %v2067, -inf
        %2080 = vmax.xlane.f32.xlu0 %v2079
        %v2081 = vpop.xlane.xlu0 %2080
        %v2082 = vsel %vm1696, %v2068, -inf
        %2083 = vmax.xlane.f32.xlu0 %v2082
        %v2084 = vpop.xlane.xlu0 %2083
        %v2085 = vsel %vm1696, %v2069, -inf
        %2086 = vmax.xlane.f32.xlu0 %v2085
        %v2087 = vpop.xlane.xlu0 %2086
        %v2088 = vsel %vm1696, %v2070, -inf
        %2089 = vmax.xlane.f32.xlu0 %v2088
        %v2090 = vpop.xlane.xlu0 %2089
        %v2091 = vsel %vm1696, %v2071, -inf
        %2092 = vmax.xlane.f32.xlu0 %v2091
        %v2093 = vpop.xlane.xlu0 %2092
        %v2094 = vsel %vm1696, %v2072, -inf
        %2095 = vmax.xlane.f32.xlu0 %v2094
        %v2096 = vpop.xlane.xlu0 %2095
        %v2097 = vsub.f32 %v2065, %v2075
        %v2098 = vsub.f32 %v2066, %v2078
        %v2099 = vsub.f32 %v2067, %v2081
        %v2100 = vsub.f32 %v2068, %v2084
        %v2101 = vsub.f32 %v2069, %v2087
        %v2102 = vsub.f32 %v2070, %v2090
        %v2103 = vsub.f32 %v2071, %v2093
        %v2104 = vsub.f32 %v2072, %v2096
        %v2105 = vmul.f32 %v2097, 1.442695
        %v2106 = vpow.pop %v2105
        %v2107 = vmul.f32 %v2098, 1.442695
        %v2108 = vpow.pop %v2107
        %v2109 = vmul.f32 %v2099, 1.442695
        %v2110 = vpow.pop %v2109
        %v2111 = vmul.f32 %v2100, 1.442695
        %v2112 = vpow.pop %v2111
        %v2113 = vmul.f32 %v2101, 1.442695
        %v2114 = vpow.pop %v2113
        %v2115 = vmul.f32 %v2102, 1.442695
        %v2116 = vpow.pop %v2115
        %v2117 = vmul.f32 %v2103, 1.442695
        %v2118 = vpow.pop %v2117
        %v2119 = vmul.f32 %v2104, 1.442695
        %v2120 = vpow.pop %v2119
        %v2121 = vsel %vm1696, %v2106, 0.0
        %2122 = vadd.xlane.f32.xlu0 %v2121
        %v2123 = vpop.xlane.xlu0 %2122
        %v2124 = vsel %vm1696, %v2108, 0.0
        %2125 = vadd.xlane.f32.xlu0 %v2124
        %v2126 = vpop.xlane.xlu0 %2125
        %v2127 = vsel %vm1696, %v2110, 0.0
        %2128 = vadd.xlane.f32.xlu0 %v2127
        %v2129 = vpop.xlane.xlu0 %2128
        %v2130 = vsel %vm1696, %v2112, 0.0
        %2131 = vadd.xlane.f32.xlu0 %v2130
        %v2132 = vpop.xlane.xlu0 %2131
        %v2133 = vsel %vm1696, %v2114, 0.0
        %2134 = vadd.xlane.f32.xlu0 %v2133
        %v2135 = vpop.xlane.xlu0 %2134
        %v2136 = vsel %vm1696, %v2116, 0.0
        %2137 = vadd.xlane.f32.xlu0 %v2136
        %v2138 = vpop.xlane.xlu0 %2137
        %v2139 = vsel %vm1696, %v2118, 0.0
        %2140 = vadd.xlane.f32.xlu0 %v2139
        %v2141 = vpop.xlane.xlu0 %2140
        %v2142 = vsel %vm1696, %v2120, 0.0
        %2143 = vadd.xlane.f32.xlu0 %v2142
        %v2144 = vpop.xlane.xlu0 %2143
        %v2145 = vrcp.pop %v2123
        %v2146 = vrcp.pop %v2126
        %v2147 = vrcp.pop %v2129
        %v2148 = vrcp.pop %v2132
        %v2149 = vrcp.pop %v2135
        %v2150 = vrcp.pop %v2138
        %v2151 = vrcp.pop %v2141
        %v2152 = vrcp.pop %v2144
        %v2153 = vmul.f32 %v2106, %v2145
        %v2154 = vmul.f32 %v2108, %v2146
        %v2155 = vmul.f32 %v2110, %v2147
        %v2156 = vmul.f32 %v2112, %v2148
        %v2157 = vmul.f32 %v2114, %v2149
        %v2158 = vmul.f32 %v2116, %v2150
        %v2159 = vmul.f32 %v2118, %v2151
        %v2160 = vmul.f32 %v2120, %v2152
        %v2161 = vpack.c.bf16 %v2153, %v2153
        %v2162 = vpack.c.bf16 %v2154, %v2154
        %v2163 = vpack.c.bf16 %v2155, %v2155
        %v2164 = vpack.c.bf16 %v2156, %v2156
        %v2165 = vpack.c.bf16 %v2157, %v2157
        %v2166 = vpack.c.bf16 %v2158, %v2158
        %v2167 = vpack.c.bf16 %v2159, %v2159
        %v2168 = vpack.c.bf16 %v2160, %v2160
        %v2170 = vsel %vm1696, %v2161, 0
        %vm2172 = vcmask 1043456
        %v2174 = vsel %vm2172, %v1674, 0
        %2176 = vmatprep.subr.bf16.mxu0 0
        %2177 = vmatpush1.bf16.msra.mxu0 %v2174
        %2178 = vmatprep.subr.bf16.mxu0 0
        %2179 = vmatpush1.bf16.msra.mxu0 0
        %2180 = vmatprep.subr.bf16.mxu0 0
        %2181 = vmatpush1.bf16.msra.mxu0 0
        %2182 = vmatprep.subr.bf16.mxu0 0
        %2183 = vmatpush1.bf16.msra.mxu0 0
        %2184 = vmatprep.subr.bf16.mxu0 0
        %2185 = vmatpush1.bf16.msra.mxu0 0
        %2186 = vmatprep.subr.bf16.mxu0 0
        %2187 = vmatpush1.bf16.msra.mxu0 0
        %2188 = vmatprep.subr.bf16.mxu0 0
        %2189 = vmatpush1.bf16.msra.mxu0 0
        %2190 = vmatprep.subr.bf16.mxu0 0
        %2191 = vmatpush1.bf16.msra.mxu0 0
        %2192 = vmatprep.subr.bf16.mxu0 0
        %2193 = vmatpush1.bf16.msra.mxu0 0
        %2194 = vmatprep.subr.bf16.mxu0 0
        %2195 = vmatpush1.bf16.msra.mxu0 0
        %2196 = vmatprep.subr.bf16.mxu0 0
        %2197 = vmatpush1.bf16.msra.mxu0 0
        %2198 = vmatprep.subr.bf16.mxu0 0
        %2199 = vmatpush1.bf16.msra.mxu0 0
        %2200 = vmatprep.subr.bf16.mxu0 0
        %2201 = vmatpush1.bf16.msra.mxu0 0
        %2202 = vmatprep.subr.bf16.mxu0 0
        %2203 = vmatpush1.bf16.msra.mxu0 0
        %2204 = vmatprep.subr.bf16.mxu0 0
        %2205 = vmatpush1.bf16.msra.mxu0 0
        %2206 = vmatprep.subr.bf16.mxu0 0
        %2207 = vmatpush1.bf16.msra.mxu0 0
        %2208 = vmatprep.mubr.bf16.mxu0 0
        %2209 = vmatmul.mubr.bf16.gmra.mrb[0].mxu0 %v2170
        %v2210 = vpop.f32.mrb[0].mxu0
        %v2211 = vadd.f32 0.0, %v2210
        %v2212 = vpop.f32.mrb[0].mxu0
        %v2213 = vpop.f32.mrb[0].mxu0
        %v2214 = vpop.f32.mrb[0].mxu0
        %2215 = vdwg.mxu0
        %v2217 = vsel %vm1696, %v2162, 0
        %v2220 = vsel %vm2172, %v1677, 0
        %2222 = vmatprep.subr.bf16.mxu0 0
        %2223 = vmatpush1.bf16.msra.mxu0 %v2220
        %2224 = vmatprep.subr.bf16.mxu0 0
        %2225 = vmatpush1.bf16.msra.mxu0 0
        %2226 = vmatprep.subr.bf16.mxu0 0
        %2227 = vmatpush1.bf16.msra.mxu0 0
        %2228 = vmatprep.subr.bf16.mxu0 0
        %2229 = vmatpush1.bf16.msra.mxu0 0
        %2230 = vmatprep.subr.bf16.mxu0 0
        %2231 = vmatpush1.bf16.msra.mxu0 0
        %2232 = vmatprep.subr.bf16.mxu0 0
        %2233 = vmatpush1.bf16.msra.mxu0 0
        %2234 = vmatprep.subr.bf16.mxu0 0
        %2235 = vmatpush1.bf16.msra.mxu0 0
        %2236 = vmatprep.subr.bf16.mxu0 0
        %2237 = vmatpush1.bf16.msra.mxu0 0
        %2238 = vmatprep.subr.bf16.mxu0 0
        %2239 = vmatpush1.bf16.msra.mxu0 0
        %2240 = vmatprep.subr.bf16.mxu0 0
        %2241 = vmatpush1.bf16.msra.mxu0 0
        %2242 = vmatprep.subr.bf16.mxu0 0
        %2243 = vmatpush1.bf16.msra.mxu0 0
        %2244 = vmatprep.subr.bf16.mxu0 0
        %2245 = vmatpush1.bf16.msra.mxu0 0
        %2246 = vmatprep.subr.bf16.mxu0 0
        %2247 = vmatpush1.bf16.msra.mxu0 0
        %2248 = vmatprep.subr.bf16.mxu0 0
        %2249 = vmatpush1.bf16.msra.mxu0 0
        %2250 = vmatprep.subr.bf16.mxu0 0
        %2251 = vmatpush1.bf16.msra.mxu0 0
        %2252 = vmatprep.subr.bf16.mxu0 0
        %2253 = vmatpush1.bf16.msra.mxu0 0
        %2254 = vmatprep.mubr.bf16.mxu0 0
        %2255 = vmatmul.mubr.bf16.gmra.mrb[0].mxu0 %v2217
        %v2256 = vpop.f32.mrb[0].mxu0
        %v2257 = vadd.f32 0.0, %v2256
        %v2258 = vpop.f32.mrb[0].mxu0
        %v2259 = vpop.f32.mrb[0].mxu0
        %v2260 = vpop.f32.mrb[0].mxu0
        %2261 = vdwg.mxu0
        %v2263 = vsel %vm1696, %v2163, 0
        %v2266 = vsel %vm2172, %v1680, 0
        %2268 = vmatprep.subr.bf16.mxu0 0
        %2269 = vmatpush1.bf16.msra.mxu0 %v2266
        %2270 = vmatprep.subr.bf16.mxu0 0
        %2271 = vmatpush1.bf16.msra.mxu0 0
        %2272 = vmatprep.subr.bf16.mxu0 0
        %2273 = vmatpush1.bf16.msra.mxu0 0
        %2274 = vmatprep.subr.bf16.mxu0 0
        %2275 = vmatpush1.bf16.msra.mxu0 0
        %2276 = vmatprep.subr.bf16.mxu0 0
        %2277 = vmatpush1.bf16.msra.mxu0 0
        %2278 = vmatprep.subr.bf16.mxu0 0
        %2279 = vmatpush1.bf16.msra.mxu0 0
        %2280 = vmatprep.subr.bf16.mxu0 0
        %2281 = vmatpush1.bf16.msra.mxu0 0
        %2282 = vmatprep.subr.bf16.mxu0 0
        %2283 = vmatpush1.bf16.msra.mxu0 0
        %2284 = vmatprep.subr.bf16.mxu0 0
        %2285 = vmatpush1.bf16.msra.mxu0 0
        %2286 = vmatprep.subr.bf16.mxu0 0
        %2287 = vmatpush1.bf16.msra.mxu0 0
        %2288 = vmatprep.subr.bf16.mxu0 0
        %2289 = vmatpush1.bf16.msra.mxu0 0
        %2290 = vmatprep.subr.bf16.mxu0 0
        %2291 = vmatpush1.bf16.msra.mxu0 0
        %2292 = vmatprep.subr.bf16.mxu0 0
        %2293 = vmatpush1.bf16.msra.mxu0 0
        %2294 = vmatprep.subr.bf16.mxu0 0
        %2295 = vmatpush1.bf16.msra.mxu0 0
        %2296 = vmatprep.subr.bf16.mxu0 0
        %2297 = vmatpush1.bf16.msra.mxu0 0
        %2298 = vmatprep.subr.bf16.mxu0 0
        %2299 = vmatpush1.bf16.msra.mxu0 0
        %2300 = vmatprep.mubr.bf16.mxu0 0
        %2301 = vmatmul.mubr.bf16.gmra.mrb[0].mxu0 %v2263
        %v2302 = vpop.f32.mrb[0].mxu0
        %v2303 = vadd.f32 0.0, %v2302
        %v2304 = vpop.f32.mrb[0].mxu0
        %v2305 = vpop.f32.mrb[0].mxu0
        %v2306 = vpop.f32.mrb[0].mxu0
        %2307 = vdwg.mxu0
        %v2309 = vsel %vm1696, %v2164, 0
        %v2312 = vsel %vm2172, %v1683, 0
        %2314 = vmatprep.subr.bf16.mxu0 0
        %2315 = vmatpush1.bf16.msra.mxu0 %v2312
        %2316 = vmatprep.subr.bf16.mxu0 0
        %2317 = vmatpush1.bf16.msra.mxu0 0
        %2318 = vmatprep.subr.bf16.mxu0 0
        %2319 = vmatpush1.bf16.msra.mxu0 0
        %2320 = vmatprep.subr.bf16.mxu0 0
        %2321 = vmatpush1.bf16.msra.mxu0 0
        %2322 = vmatprep.subr.bf16.mxu0 0
        %2323 = vmatpush1.bf16.msra.mxu0 0
        %2324 = vmatprep.subr.bf16.mxu0 0
        %2325 = vmatpush1.bf16.msra.mxu0 0
        %2326 = vmatprep.subr.bf16.mxu0 0
        %2327 = vmatpush1.bf16.msra.mxu0 0
        %2328 = vmatprep.subr.bf16.mxu0 0
        %2329 = vmatpush1.bf16.msra.mxu0 0
        %2330 = vmatprep.subr.bf16.mxu0 0
        %2331 = vmatpush1.bf16.msra.mxu0 0
        %2332 = vmatprep.subr.bf16.mxu0 0
        %2333 = vmatpush1.bf16.msra.mxu0 0
        %2334 = vmatprep.subr.bf16.mxu0 0
        %2335 = vmatpush1.bf16.msra.mxu0 0
        %2336 = vmatprep.subr.bf16.mxu0 0
        %2337 = vmatpush1.bf16.msra.mxu0 0
        %2338 = vmatprep.subr.bf16.mxu0 0
        %2339 = vmatpush1.bf16.msra.mxu0 0
        %2340 = vmatprep.subr.bf16.mxu0 0
        %2341 = vmatpush1.bf16.msra.mxu0 0
        %2342 = vmatprep.subr.bf16.mxu0 0
        %2343 = vmatpush1.bf16.msra.mxu0 0
        %2344 = vmatprep.subr.bf16.mxu0 0
        %2345 = vmatpush1.bf16.msra.mxu0 0
        %2346 = vmatprep.mubr.bf16.mxu0 0
        %2347 = vmatmul.mubr.bf16.gmra.mrb[0].mxu0 %v2309
        %v2348 = vpop.f32.mrb[0].mxu0
        %v2349 = vadd.f32 0.0, %v2348
        %v2350 = vpop.f32.mrb[0].mxu0
        %v2351 = vpop.f32.mrb[0].mxu0
        %v2352 = vpop.f32.mrb[0].mxu0
        %2353 = vdwg.mxu0
        %v2355 = vsel %vm1696, %v2165, 0
        %v2358 = vsel %vm2172, %v1686, 0
        %2360 = vmatprep.subr.bf16.mxu0 0
        %2361 = vmatpush1.bf16.msra.mxu0 %v2358
        %2362 = vmatprep.subr.bf16.mxu0 0
        %2363 = vmatpush1.bf16.msra.mxu0 0
        %2364 = vmatprep.subr.bf16.mxu0 0
        %2365 = vmatpush1.bf16.msra.mxu0 0
        %2366 = vmatprep.subr.bf16.mxu0 0
        %2367 = vmatpush1.bf16.msra.mxu0 0
        %2368 = vmatprep.subr.bf16.mxu0 0
        %2369 = vmatpush1.bf16.msra.mxu0 0
        %2370 = vmatprep.subr.bf16.mxu0 0
        %2371 = vmatpush1.bf16.msra.mxu0 0
        %2372 = vmatprep.subr.bf16.mxu0 0
        %2373 = vmatpush1.bf16.msra.mxu0 0
        %2374 = vmatprep.subr.bf16.mxu0 0
        %2375 = vmatpush1.bf16.msra.mxu0 0
        %2376 = vmatprep.subr.bf16.mxu0 0
        %2377 = vmatpush1.bf16.msra.mxu0 0
        %2378 = vmatprep.subr.bf16.mxu0 0
        %2379 = vmatpush1.bf16.msra.mxu0 0
        %2380 = vmatprep.subr.bf16.mxu0 0
        %2381 = vmatpush1.bf16.msra.mxu0 0
        %2382 = vmatprep.subr.bf16.mxu0 0
        %2383 = vmatpush1.bf16.msra.mxu0 0
        %2384 = vmatprep.subr.bf16.mxu0 0
        %2385 = vmatpush1.bf16.msra.mxu0 0
        %2386 = vmatprep.subr.bf16.mxu0 0
        %2387 = vmatpush1.bf16.msra.mxu0 0
        %2388 = vmatprep.subr.bf16.mxu0 0
        %2389 = vmatpush1.bf16.msra.mxu0 0
        %2390 = vmatprep.subr.bf16.mxu0 0
        %2391 = vmatpush1.bf16.msra.mxu0 0
        %2392 = vmatprep.mubr.bf16.mxu0 0
        %2393 = vmatmul.mubr.bf16.gmra.mrb[0].mxu0 %v2355
        %v2394 = vpop.f32.mrb[0].mxu0
        %v2395 = vadd.f32 0.0, %v2394
        %v2396 = vpop.f32.mrb[0].mxu0
        %v2397 = vpop.f32.mrb[0].mxu0
        %v2398 = vpop.f32.mrb[0].mxu0
        %2399 = vdwg.mxu0
        %v2401 = vsel %vm1696, %v2166, 0
        %v2404 = vsel %vm2172, %v1689, 0
        %2406 = vmatprep.subr.bf16.mxu0 0
        %2407 = vmatpush1.bf16.msra.mxu0 %v2404
        %2408 = vmatprep.subr.bf16.mxu0 0
        %2409 = vmatpush1.bf16.msra.mxu0 0
        %2410 = vmatprep.subr.bf16.mxu0 0
        %2411 = vmatpush1.bf16.msra.mxu0 0
        %2412 = vmatprep.subr.bf16.mxu0 0
        %2413 = vmatpush1.bf16.msra.mxu0 0
        %2414 = vmatprep.subr.bf16.mxu0 0
        %2415 = vmatpush1.bf16.msra.mxu0 0
        %2416 = vmatprep.subr.bf16.mxu0 0
        %2417 = vmatpush1.bf16.msra.mxu0 0
        %2418 = vmatprep.subr.bf16.mxu0 0
        %2419 = vmatpush1.bf16.msra.mxu0 0
        %2420 = vmatprep.subr.bf16.mxu0 0
        %2421 = vmatpush1.bf16.msra.mxu0 0
        %2422 = vmatprep.subr.bf16.mxu0 0
        %2423 = vmatpush1.bf16.msra.mxu0 0
        %2424 = vmatprep.subr.bf16.mxu0 0
        %2425 = vmatpush1.bf16.msra.mxu0 0
        %2426 = vmatprep.subr.bf16.mxu0 0
        %2427 = vmatpush1.bf16.msra.mxu0 0
        %2428 = vmatprep.subr.bf16.mxu0 0
        %2429 = vmatpush1.bf16.msra.mxu0 0
        %2430 = vmatprep.subr.bf16.mxu0 0
        %2431 = vmatpush1.bf16.msra.mxu0 0
        %2432 = vmatprep.subr.bf16.mxu0 0
        %2433 = vmatpush1.bf16.msra.mxu0 0
        %2434 = vmatprep.subr.bf16.mxu0 0
        %2435 = vmatpush1.bf16.msra.mxu0 0
        %2436 = vmatprep.subr.bf16.mxu0 0
        %2437 = vmatpush1.bf16.msra.mxu0 0
        %2438 = vmatprep.mubr.bf16.mxu0 0
        %2439 = vmatmul.mubr.bf16.gmra.mrb[0].mxu0 %v2401
        %v2440 = vpop.f32.mrb[0].mxu0
        %v2441 = vadd.f32 0.0, %v2440
        %v2442 = vpop.f32.mrb[0].mxu0
        %v2443 = vpop.f32.mrb[0].mxu0
        %v2444 = vpop.f32.mrb[0].mxu0
        %2445 = vdwg.mxu0
        %v2447 = vsel %vm1696, %v2167, 0
        %v2450 = vsel %vm2172, %v1692, 0
        %2452 = vmatprep.subr.bf16.mxu0 0
        %2453 = vmatpush1.bf16.msra.mxu0 %v2450
        %2454 = vmatprep.subr.bf16.mxu0 0
        %2455 = vmatpush1.bf16.msra.mxu0 0
        %2456 = vmatprep.subr.bf16.mxu0 0
        %2457 = vmatpush1.bf16.msra.mxu0 0
        %2458 = vmatprep.subr.bf16.mxu0 0
        %2459 = vmatpush1.bf16.msra.mxu0 0
        %2460 = vmatprep.subr.bf16.mxu0 0
        %2461 = vmatpush1.bf16.msra.mxu0 0
        %2462 = vmatprep.subr.bf16.mxu0 0
        %2463 = vmatpush1.bf16.msra.mxu0 0
        %2464 = vmatprep.subr.bf16.mxu0 0
        %2465 = vmatpush1.bf16.msra.mxu0 0
        %2466 = vmatprep.subr.bf16.mxu0 0
        %2467 = vmatpush1.bf16.msra.mxu0 0
        %2468 = vmatprep.subr.bf16.mxu0 0
        %2469 = vmatpush1.bf16.msra.mxu0 0
        %2470 = vmatprep.subr.bf16.mxu0 0
        %2471 = vmatpush1.bf16.msra.mxu0 0
        %2472 = vmatprep.subr.bf16.mxu0 0
        %2473 = vmatpush1.bf16.msra.mxu0 0
        %2474 = vmatprep.subr.bf16.mxu0 0
        %2475 = vmatpush1.bf16.msra.mxu0 0
        %2476 = vmatprep.subr.bf16.mxu0 0
        %2477 = vmatpush1.bf16.msra.mxu0 0
        %2478 = vmatprep.subr.bf16.mxu0 0
        %2479 = vmatpush1.bf16.msra.mxu0 0
        %2480 = vmatprep.subr.bf16.mxu0 0
        %2481 = vmatpush1.bf16.msra.mxu0 0
        %2482 = vmatprep.subr.bf16.mxu0 0
        %2483 = vmatpush1.bf16.msra.mxu0 0
        %2484 = vmatprep.mubr.bf16.mxu0 0
        %2485 = vmatmul.mubr.bf16.gmra.mrb[0].mxu0 %v2447
        %v2486 = vpop.f32.mrb[0].mxu0
        %v2487 = vadd.f32 0.0, %v2486
        %v2488 = vpop.f32.mrb[0].mxu0
        %v2489 = vpop.f32.mrb[0].mxu0
        %v2490 = vpop.f32.mrb[0].mxu0
        %2491 = vdwg.mxu0
        %v2493 = vsel %vm1696, %v2168, 0
        %v2496 = vsel %vm2172, %v1695, 0
        %2498 = vmatprep.subr.bf16.mxu0 0
        %2499 = vmatpush1.bf16.msra.mxu0 %v2496
        %2500 = vmatprep.subr.bf16.mxu0 0
        %2501 = vmatpush1.bf16.msra.mxu0 0
        %2502 = vmatprep.subr.bf16.mxu0 0
        %2503 = vmatpush1.bf16.msra.mxu0 0
        %2504 = vmatprep.subr.bf16.mxu0 0
        %2505 = vmatpush1.bf16.msra.mxu0 0
        %2506 = vmatprep.subr.bf16.mxu0 0
        %2507 = vmatpush1.bf16.msra.mxu0 0
        %2508 = vmatprep.subr.bf16.mxu0 0
        %2509 = vmatpush1.bf16.msra.mxu0 0
        %2510 = vmatprep.subr.bf16.mxu0 0
        %2511 = vmatpush1.bf16.msra.mxu0 0
        %2512 = vmatprep.subr.bf16.mxu0 0
        %2513 = vmatpush1.bf16.msra.mxu0 0
        %2514 = vmatprep.subr.bf16.mxu0 0
        %2515 = vmatpush1.bf16.msra.mxu0 0
        %2516 = vmatprep.subr.bf16.mxu0 0
        %2517 = vmatpush1.bf16.msra.mxu0 0
        %2518 = vmatprep.subr.bf16.mxu0 0
        %2519 = vmatpush1.bf16.msra.mxu0 0
        %2520 = vmatprep.subr.bf16.mxu0 0
        %2521 = vmatpush1.bf16.msra.mxu0 0
        %2522 = vmatprep.subr.bf16.mxu0 0
        %2523 = vmatpush1.bf16.msra.mxu0 0
        %2524 = vmatprep.subr.bf16.mxu0 0
        %2525 = vmatpush1.bf16.msra.mxu0 0
        %2526 = vmatprep.subr.bf16.mxu0 0
        %2527 = vmatpush1.bf16.msra.mxu0 0
        %2528 = vmatprep.subr.bf16.mxu0 0
        %2529 = vmatpush1.bf16.msra.mxu0 0
        %2530 = vmatprep.mubr.bf16.mxu0 0
        %2531 = vmatmul.mubr.bf16.gmra.mrb[0].mxu0 %v2493
        %v2532 = vpop.f32.mrb[0].mxu0
        %v2533 = vadd.f32 0.0, %v2532
        %v2534 = vpop.f32.mrb[0].mxu0
        %v2535 = vpop.f32.mrb[0].mxu0
        %v2536 = vpop.f32.mrb[0].mxu0
        %2537 = vdwg.mxu0
        %v2538 = vpack.c.bf16 %v2211, %v2211
        %v2540 = vunpack.c.l.s4 1983009808
        %v2541 = vunpack.c.0.s8 %v2540
        %v2542 = vlaneseq
        %v2543 = vshrl.u32 %v2542, 7
        %v2544 = vsub.s32 %v2541, %v2543
        %v2545 = vrot.slane %v2538, %v2544
        %v2546 = vpack.c.bf16 %v2303, %v2303
        %v2548 = vunpack.c.l.s4 1983009808
        %v2549 = vunpack.c.0.s8 %v2548
        %v2550 = vlaneseq
        %v2551 = vshrl.u32 %v2550, 7
        %v2552 = vsub.s32 %v2549, %v2551
        %v2553 = vrot.slane %v2546, %v2552
        %v2554 = vcombine.low %v2545, %v2553
        %v2555 = vcombine.high %v2545, %v2553
        %v2557 = vunpack.c.l.s4 1934713408
        %v2558 = vunpack.c.0.s8 %v2557
        %v2559 = vlaneseq
        %v2560 = vshrl.u32 %v2559, 7
        %v2561 = vsub.s32 %v2558, %v2560
        %v2562 = vrot.slane %v2554, %v2561
        %v2564 = vunpack.c.l.s4 1934713408
        %v2565 = vunpack.c.0.s8 %v2564
        %v2566 = vlaneseq
        %v2567 = vshrl.u32 %v2566, 7
        %v2568 = vsub.s32 %v2565, %v2567
        %v2569 = vrot.slane %v2555, %v2568
        %v2570 = vcombine.high %v2562, 0
        %v2571 = vcombine.high %v2569, 0
        %v2572 = vpack.c.bf16 %v2257, %v2257
        %v2574 = vunpack.c.l.s4 1983009808
        %v2575 = vunpack.c.0.s8 %v2574
        %v2576 = vlaneseq
        %v2577 = vshrl.u32 %v2576, 7
        %v2578 = vsub.s32 %v2575, %v2577
        %v2579 = vrot.slane %v2572, %v2578
        %v2580 = vpack.c.bf16 %v2349, %v2349
        %v2582 = vunpack.c.l.s4 1983009808
        %v2583 = vunpack.c.0.s8 %v2582
        %v2584 = vlaneseq
        %v2585 = vshrl.u32 %v2584, 7
        %v2586 = vsub.s32 %v2583, %v2585
        %v2587 = vrot.slane %v2580, %v2586
        %v2588 = vcombine.low %v2579, %v2587
        %v2589 = vcombine.high %v2579, %v2587
        %v2591 = vunpack.c.l.s4 1934713408
        %v2592 = vunpack.c.0.s8 %v2591
        %v2593 = vlaneseq
        %v2594 = vshrl.u32 %v2593, 7
        %v2595 = vsub.s32 %v2592, %v2594
        %v2596 = vrot.slane %v2588, %v2595
        %v2598 = vunpack.c.l.s4 1934713408
        %v2599 = vunpack.c.0.s8 %v2598
        %v2600 = vlaneseq
        %v2601 = vshrl.u32 %v2600, 7
        %v2602 = vsub.s32 %v2599, %v2601
        %v2603 = vrot.slane %v2589, %v2602
        %v2604 = vcombine.high %v2596, 0
        %v2605 = vcombine.high %v2603, 0
        %v2606 = vpack.c.bf16 %v2395, %v2395
        %v2608 = vunpack.c.l.s4 1983009808
        %v2609 = vunpack.c.0.s8 %v2608
        %v2610 = vlaneseq
        %v2611 = vshrl.u32 %v2610, 7
        %v2612 = vsub.s32 %v2609, %v2611
        %v2613 = vrot.slane %v2606, %v2612
        %v2614 = vpack.c.bf16 %v2487, %v2487
        %v2616 = vunpack.c.l.s4 1983009808
        %v2617 = vunpack.c.0.s8 %v2616
        %v2618 = vlaneseq
        %v2619 = vshrl.u32 %v2618, 7
        %v2620 = vsub.s32 %v2617, %v2619
        %v2621 = vrot.slane %v2614, %v2620
        %v2622 = vcombine.low %v2613, %v2621
        %v2623 = vcombine.high %v2613, %v2621
        %v2625 = vunpack.c.l.s4 1934713408
        %v2626 = vunpack.c.0.s8 %v2625
        %v2627 = vlaneseq
        %v2628 = vshrl.u32 %v2627, 7
        %v2629 = vsub.s32 %v2626, %v2628
        %v2630 = vrot.slane %v2622, %v2629
        %v2632 = vunpack.c.l.s4 1934713408
        %v2633 = vunpack.c.0.s8 %v2632
        %v2634 = vlaneseq
        %v2635 = vshrl.u32 %v2634, 7
        %v2636 = vsub.s32 %v2633, %v2635
        %v2637 = vrot.slane %v2623, %v2636
        %v2638 = vcombine.high %v2630, 0
        %v2639 = vcombine.high %v2637, 0
        %v2640 = vpack.c.bf16 %v2441, %v2441
        %v2642 = vunpack.c.l.s4 1983009808
        %v2643 = vunpack.c.0.s8 %v2642
        %v2644 = vlaneseq
        %v2645 = vshrl.u32 %v2644, 7
        %v2646 = vsub.s32 %v2643, %v2645
        %v2647 = vrot.slane %v2640, %v2646
        %v2648 = vpack.c.bf16 %v2533, %v2533
        %v2650 = vunpack.c.l.s4 1983009808
        %v2651 = vunpack.c.0.s8 %v2650
        %v2652 = vlaneseq
        %v2653 = vshrl.u32 %v2652, 7
        %v2654 = vsub.s32 %v2651, %v2653
        %v2655 = vrot.slane %v2648, %v2654
        %v2656 = vcombine.low %v2647, %v2655
        %v2657 = vcombine.high %v2647, %v2655
        %v2659 = vunpack.c.l.s4 1934713408
        %v2660 = vunpack.c.0.s8 %v2659
        %v2661 = vlaneseq
        %v2662 = vshrl.u32 %v2661, 7
        %v2663 = vsub.s32 %v2660, %v2662
        %v2664 = vrot.slane %v2656, %v2663
        %v2666 = vunpack.c.l.s4 1934713408
        %v2667 = vunpack.c.0.s8 %v2666
        %v2668 = vlaneseq
        %v2669 = vshrl.u32 %v2668, 7
        %v2670 = vsub.s32 %v2667, %v2669
        %v2671 = vrot.slane %v2657, %v2670
        %v2672 = vcombine.high %v2664, 0
        %v2673 = vcombine.high %v2671, 0
        %v2676 = vpack.i.b16 %v2596, %v2562
        %v2678 = vshrl.u32 %v2562, 16
        %v2679 = vshrl.u32 %v2596, 16
        %v2680 = vpack.i.b16 %v2679, %v2678
        %v2684 = vpack.i.b16 %v2604, %v2570
        %v2686 = vshrl.u32 %v2570, 16
        %v2687 = vshrl.u32 %v2604, 16
        %v2688 = vpack.i.b16 %v2687, %v2686
        %v2692 = vpack.i.b16 %v2603, %v2569
        %v2694 = vshrl.u32 %v2569, 16
        %v2695 = vshrl.u32 %v2603, 16
        %v2696 = vpack.i.b16 %v2695, %v2694
        %v2700 = vpack.i.b16 %v2605, %v2571
        %v2702 = vshrl.u32 %v2571, 16
        %v2703 = vshrl.u32 %v2605, 16
        %v2704 = vpack.i.b16 %v2703, %v2702
        %v2708 = vpack.i.b16 %v2664, %v2630
        %v2710 = vshrl.u32 %v2630, 16
        %v2711 = vshrl.u32 %v2664, 16
        %v2712 = vpack.i.b16 %v2711, %v2710
        %v2716 = vpack.i.b16 %v2672, %v2638
        %v2718 = vshrl.u32 %v2638, 16
        %v2719 = vshrl.u32 %v2672, 16
        %v2720 = vpack.i.b16 %v2719, %v2718
        %v2724 = vpack.i.b16 %v2671, %v2637
        %v2726 = vshrl.u32 %v2637, 16
        %v2727 = vshrl.u32 %v2671, 16
        %v2728 = vpack.i.b16 %v2727, %v2726
        %v2732 = vpack.i.b16 %v2673, %v2639
        %v2734 = vshrl.u32 %v2639, 16
        %v2735 = vshrl.u32 %v2673, 16
        %v2736 = vpack.i.b16 %v2735, %v2734
        %v2738 = vcombine.low %v2676, %v2692
        %v2740 = vunpack.c.l.s4 1983009808
        %v2741 = vunpack.c.0.s8 %v2740
        %v2742 = vlaneseq
        %v2743 = vshrl.u32 %v2742, 7
        %v2744 = vsub.s32 %v2741, %v2743
        %v2745 = vrot.slane %v2738, %v2744
        %v2746 = vcombine.low %v2684, %v2700
        %v2748 = vunpack.c.l.s4 1983009808
        %v2749 = vunpack.c.0.s8 %v2748
        %v2750 = vlaneseq
        %v2751 = vshrl.u32 %v2750, 7
        %v2752 = vsub.s32 %v2749, %v2751
        %v2753 = vrot.slane %v2746, %v2752
        %v2754 = vcombine.low %v2708, %v2724
        %v2756 = vunpack.c.l.s4 1983009808
        %v2757 = vunpack.c.0.s8 %v2756
        %v2758 = vlaneseq
        %v2759 = vshrl.u32 %v2758, 7
        %v2760 = vsub.s32 %v2757, %v2759
        %v2761 = vrot.slane %v2754, %v2760
        %v2762 = vcombine.low %v2716, %v2732
        %v2764 = vunpack.c.l.s4 1983009808
        %v2765 = vunpack.c.0.s8 %v2764
        %v2766 = vlaneseq
        %v2767 = vshrl.u32 %v2766, 7
        %v2768 = vsub.s32 %v2765, %v2767
        %v2769 = vrot.slane %v2762, %v2768
        %v2770 = vcombine.low %v2745, %v2753
        %v2772 = vunpack.c.l.s4 1934713408
        %v2773 = vunpack.c.0.s8 %v2772
        %v2774 = vlaneseq
        %v2775 = vshrl.u32 %v2774, 7
        %v2776 = vsub.s32 %v2773, %v2775
        %v2777 = vrot.slane %v2770, %v2776
        %v2778 = vcombine.low %v2761, %v2769
        %v2780 = vunpack.c.l.s4 1934713408
        %v2781 = vunpack.c.0.s8 %v2780
        %v2782 = vlaneseq
        %v2783 = vshrl.u32 %v2782, 7
        %v2784 = vsub.s32 %v2781, %v2783
        %v2785 = vrot.slane %v2778, %v2784
        %v2786 = vcombine.low %v2777, %v2785
        %v2787 = vcombine.high %v2777, %v2785
        %v2788 = vcombine.low %v2680, %v2696
        %v2790 = vunpack.c.l.s4 1983009808
        %v2791 = vunpack.c.0.s8 %v2790
        %v2792 = vlaneseq
        %v2793 = vshrl.u32 %v2792, 7
        %v2794 = vsub.s32 %v2791, %v2793
        %v2795 = vrot.slane %v2788, %v2794
        %v2796 = vcombine.low %v2688, %v2704
        %v2798 = vunpack.c.l.s4 1983009808
        %v2799 = vunpack.c.0.s8 %v2798
        %v2800 = vlaneseq
        %v2801 = vshrl.u32 %v2800, 7
        %v2802 = vsub.s32 %v2799, %v2801
        %v2803 = vrot.slane %v2796, %v2802
        %v2804 = vcombine.low %v2712, %v2728
        %v2806 = vunpack.c.l.s4 1983009808
        %v2807 = vunpack.c.0.s8 %v2806
        %v2808 = vlaneseq
        %v2809 = vshrl.u32 %v2808, 7
        %v2810 = vsub.s32 %v2807, %v2809
        %v2811 = vrot.slane %v2804, %v2810
        %v2812 = vcombine.low %v2720, %v2736
        %v2814 = vunpack.c.l.s4 1983009808
        %v2815 = vunpack.c.0.s8 %v2814
        %v2816 = vlaneseq
        %v2817 = vshrl.u32 %v2816, 7
        %v2818 = vsub.s32 %v2815, %v2817
        %v2819 = vrot.slane %v2812, %v2818
        %v2820 = vcombine.low %v2795, %v2803
        %v2822 = vunpack.c.l.s4 1934713408
        %v2823 = vunpack.c.0.s8 %v2822
        %v2824 = vlaneseq
        %v2825 = vshrl.u32 %v2824, 7
        %v2826 = vsub.s32 %v2823, %v2825
        %v2827 = vrot.slane %v2820, %v2826
        %v2828 = vcombine.low %v2811, %v2819
        %v2830 = vunpack.c.l.s4 1934713408
        %v2831 = vunpack.c.0.s8 %v2830
        %v2832 = vlaneseq
        %v2833 = vshrl.u32 %v2832, 7
        %v2834 = vsub.s32 %v2831, %v2833
        %v2835 = vrot.slane %v2828, %v2834
        %v2836 = vcombine.low %v2827, %v2835
        %v2837 = vcombine.high %v2827, %v2835
        %v2840 = vpack.i.b16 %v2836, %v2786
        %v2841 = vshrl.u32 %v2786, 16
        %v2842 = vshrl.u32 %v2836, 16
        %v2843 = vpack.i.b16 %v2842, %v2841
        %v2846 = vpack.i.b16 %v2837, %v2787
        %v2847 = vshrl.u32 %v2787, 16
        %v2848 = vshrl.u32 %v2837, 16
        %v2849 = vpack.i.b16 %v2848, %v2847
        %2850 = vrot.lane.b32.xlu0 %v2843, 8
        %v2851 = vpop.permute.xlu0 %2850
        %2852 = vrot.lane.b32.xlu0 %v2846, 16
        %v2853 = vpop.permute.xlu0 %2852
        %2854 = vrot.lane.b32.xlu0 %v2849, 24
        %v2855 = vpop.permute.xlu0 %2854
        %v2858 = vsel %vm1696, %v2840, %v2851
        %vm2859 = vcmask 130048
        %v2861 = vsel %vm2859, %v2858, %v2853
        %vm2862 = vcmask 195584
        %v2864 = vsel %vm2862, %v2861, %v2855
        %v2866 = vlaneseq
        %v2867 = vshrl.u32 %v2866, 7
        %v2868 = vsub.s32 0, %v2867
        %v2869 = vrot.slane %v849, %v2868
        %v2875 = vunpack.c.l.b16 %v845
        %v2876 = vunpack.c.l.b16 %v846
        %v2877 = vunpack.c.l.b16 %v847
        %v2878 = vunpack.c.l.b16 %v848
        %v2879 = vpack.c.b16 %v2876, %v2875
        %v2880 = vpack.c.b16 %v2878, %v2877
        %v2883 = vsel %vm800, %v2864, 0
        %2885 = vmatprep.subr.bf16.mxu0 0
        %2886 = vmatpush1.bf16.msra.mxu0 %v2879
        %2887 = vmatprep.subr.bf16.mxu0 0
        %2888 = vmatpush1.bf16.msra.mxu0 %v2880
        %2889 = vmatprep.subr.bf16.mxu0 0
        %2890 = vmatpush1.bf16.msra.mxu0 0
        %2891 = vmatprep.subr.bf16.mxu0 0
        %2892 = vmatpush1.bf16.msra.mxu0 0
        %2893 = vmatprep.subr.bf16.mxu0 0
        %2894 = vmatpush1.bf16.msra.mxu0 0
        %2895 = vmatprep.subr.bf16.mxu0 0
        %2896 = vmatpush1.bf16.msra.mxu0 0
        %2897 = vmatprep.subr.bf16.mxu0 0
        %2898 = vmatpush1.bf16.msra.mxu0 0
        %2899 = vmatprep.subr.bf16.mxu0 0
        %2900 = vmatpush1.bf16.msra.mxu0 0
        %2901 = vmatprep.subr.bf16.mxu0 0
        %2902 = vmatpush1.bf16.msra.mxu0 0
        %2903 = vmatprep.subr.bf16.mxu0 0
        %2904 = vmatpush1.bf16.msra.mxu0 0
        %2905 = vmatprep.subr.bf16.mxu0 0
        %2906 = vmatpush1.bf16.msra.mxu0 0
        %2907 = vmatprep.subr.bf16.mxu0 0
        %2908 = vmatpush1.bf16.msra.mxu0 0
        %2909 = vmatprep.subr.bf16.mxu0 0
        %2910 = vmatpush1.bf16.msra.mxu0 0
        %2911 = vmatprep.subr.bf16.mxu0 0
        %2912 = vmatpush1.bf16.msra.mxu0 0
        %2913 = vmatprep.subr.bf16.mxu0 0
        %2914 = vmatpush1.bf16.msra.mxu0 0
        %2915 = vmatprep.subr.bf16.mxu0 0
        %2916 = vmatpush1.bf16.msra.mxu0 0
        %2917 = vmatprep.mubr.bf16.mxu0 0
        %2918 = vmatmul.mubr.bf16.gmra.mrb[0].mxu0 %v2883
        %v2919 = vpop.f32.mrb[0].mxu0
        %v2920 = vadd.f32 %v2869, %v2919
        %v2921 = vpop.f32.mrb[0].mxu0
        %v2922 = vpop.f32.mrb[0].mxu0
        %v2923 = vadd.f32 %v2869, %v2922
        %v2924 = vpop.f32.mrb[0].mxu0
        %2925 = vdwg.mxu0
        %v2926 = vld [vmem:[%s7] sm:$0x1]
        %v2927 = vld [vmem:[%s8] sm:$0x1]
        %v2928 = vadd.f32 %v758, %v2920
        %v2929 = vadd.f32 %v759, %v2923
        %v2930 = vsel %vm800, %v2928, 0.0
        %2931 = vadd.xlane.f32.xlu0 %v2930
        %v2932 = vpop.xlane.xlu0 %2931
        %v2933 = vsel %vm800, %v2929, 0.0
        %2934 = vadd.xlane.f32.xlu0 %v2933
        %v2935 = vpop.xlane.xlu0 %2934
        %v2936 = vrcp.pop 32.0
        %v2937 = vmul.f32 %v2932, %v2936
        %v2938 = vmul.f32 %v2935, %v2936
        %v2939 = vmul.f32 %v2928, %v2928
        %v2940 = vmul.f32 %v2929, %v2929
        %v2941 = vsel %vm800, %v2939, 0.0
        %2942 = vadd.xlane.f32.xlu0 %v2941
        %v2943 = vpop.xlane.xlu0 %2942
        %v2944 = vsel %vm800, %v2940, 0.0
        %2945 = vadd.xlane.f32.xlu0 %v2944
        %v2946 = vpop.xlane.xlu0 %2945
        %v2947 = vmul.f32 %v2943, %v2936
        %v2948 = vmul.f32 %v2946, %v2936
        %v2949 = vmul.f32 %v2937, %v2937
        %v2950 = vmul.f32 %v2938, %v2938
        %v2951 = vsub.f32 %v2947, %v2949
        %v2952 = vsub.f32 %v2948, %v2950
        %v2953 = vsub.f32 %v2928, %v2937
        %v2954 = vsub.f32 %v2929, %v2938
        %v2956 = vlaneseq
        %v2957 = vshrl.u32 %v2956, 7
        %v2958 = vsub.s32 0, %v2957
        %v2959 = vrot.slane %v2926, %v2958
        %v2961 = vmul.f32 %v2959, %v2953
        %v2962 = vmul.f32 %v2959, %v2954
        %v2963 = vadd.f32 %v2951, 1e-06
        %v2964 = vadd.f32 %v2952, 1e-06
        %v2965 = vrsqrt.pop %v2963
        %v2966 = vrsqrt.pop %v2964
        %v2967 = vmul.f32 %v2961, %v2965
        %v2968 = vmul.f32 %v2962, %v2966
        %v2970 = vlaneseq
        %v2971 = vshrl.u32 %v2970, 7
        %v2972 = vsub.s32 0, %v2971
        %v2973 = vrot.slane %v2927, %v2972
        %v2975 = vadd.f32 %v2967, %v2973
        %v2976 = vadd.f32 %v2968, %v2973
        %v2977 = vpack.c.bf16 %v2976, %v2975
        %v2978 = vld [vmem:[%s9] sm:$0xf]
        %v2979 = vld [vmem:[%s9 + $0x4] sm:$0xf]
        %v2980 = vld [vmem:[%s9 + $0x8] sm:$0xf]
        %v2981 = vld [vmem:[%s9 + $0xc] sm:$0xf]
        %v2982 = vld [vmem:[%s10] sm:$0x1]
        %v2984 = vlaneseq
        %v2985 = vshrl.u32 %v2984, 7
        %v2986 = vsub.s32 0, %v2985
        %v2987 = vrot.slane %v2982, %v2986
        %v2991 = vunpack.c.l.b16 %v756
        %v2992 = vunpack.c.l.b16 %v757
        %v2993 = vpack.c.b16 %v2992, %v2991
        %v2998 = vunpack.c.l.b16 %v2978
        %v2999 = vunpack.c.l.b16 %v2979
        %v3000 = vunpack.c.l.b16 %v2980
        %v3001 = vunpack.c.l.b16 %v2981
        %v3002 = vpack.c.b16 %v2999, %v2998
        %v3003 = vpack.c.b16 %v3001, %v3000
        %v3007 = vsel %vm800, %v2993, 0
        %3009 = vmatprep.subr.bf16.mxu0 0
        %3010 = vmatpush1.bf16.msra.mxu0 %v3002
        %3011 = vmatprep.subr.bf16.mxu0 0
        %3012 = vmatpush1.bf16.msra.mxu0 %v3003
        %3013 = vmatprep.subr.bf16.mxu0 0
        %3014 = vmatpush1.bf16.msra.mxu0 0
        %3015 = vmatprep.subr.bf16.mxu0 0
        %3016 = vmatpush1.bf16.msra.mxu0 0
        %3017 = vmatprep.subr.bf16.mxu0 0
        %3018 = vmatpush1.bf16.msra.mxu0 0
        %3019 = vmatprep.subr.bf16.mxu0 0
        %3020 = vmatpush1.bf16.msra.mxu0 0
        %3021 = vmatprep.subr.bf16.mxu0 0
        %3022 = vmatpush1.bf16.msra.mxu0 0
        %3023 = vmatprep.subr.bf16.mxu0 0
        %3024 = vmatpush1.bf16.msra.mxu0 0
        %3025 = vmatprep.subr.bf16.mxu0 0
        %3026 = vmatpush1.bf16.msra.mxu0 0
        %3027 = vmatprep.subr.bf16.mxu0 0
        %3028 = vmatpush1.bf16.msra.mxu0 0
        %3029 = vmatprep.subr.bf16.mxu0 0
        %3030 = vmatpush1.bf16.msra.mxu0 0
        %3031 = vmatprep.subr.bf16.mxu0 0
        %3032 = vmatpush1.bf16.msra.mxu0 0
        %3033 = vmatprep.subr.bf16.mxu0 0
        %3034 = vmatpush1.bf16.msra.mxu0 0
        %3035 = vmatprep.subr.bf16.mxu0 0
        %3036 = vmatpush1.bf16.msra.mxu0 0
        %3037 = vmatprep.subr.bf16.mxu0 0
        %3038 = vmatpush1.bf16.msra.mxu0 0
        %3039 = vmatprep.subr.bf16.mxu0 0
        %3040 = vmatpush1.bf16.msra.mxu0 0
        %3041 = vmatprep.mubr.bf16.mxu0 0
        %3042 = vmatmul.mubr.bf16.gmra.mrb[0].mxu0 %v3007
        %v3043 = vpop.f32.mrb[0].mxu0
        %v3044 = vadd.f32 %v2987, %v3043
        %v3045 = vpop.f32.mrb[0].mxu0
        %v3046 = vpop.f32.mrb[0].mxu0
        %v3047 = vadd.f32 %v2987, %v3046
        %v3048 = vpop.f32.mrb[0].mxu0
        %3049 = vdwg.mxu0
        %v3050 = vld [vmem:[%s11] sm:$0xf]
        %v3051 = vld [vmem:[%s11 + $0x4] sm:$0xf]
        %v3052 = vld [vmem:[%s11 + $0x8] sm:$0xf]
        %v3053 = vld [vmem:[%s11 + $0xc] sm:$0xf]
        %v3054 = vld [vmem:[%s12] sm:$0x1]
        %v3056 = vlaneseq
        %v3057 = vshrl.u32 %v3056, 7
        %v3058 = vsub.s32 0, %v3057
        %v3059 = vrot.slane %v3054, %v3058
        %v3065 = vunpack.c.l.b16 %v3050
        %v3066 = vunpack.c.l.b16 %v3051
        %v3067 = vunpack.c.l.b16 %v3052
        %v3068 = vunpack.c.l.b16 %v3053
        %v3069 = vpack.c.b16 %v3066, %v3065
        %v3070 = vpack.c.b16 %v3068, %v3067
        %v3074 = vsel %vm800, %v2977, 0
        %3076 = vmatprep.subr.bf16.mxu0 0
        %3077 = vmatpush1.bf16.msra.mxu0 %v3069
        %3078 = vmatprep.subr.bf16.mxu0 0
        %3079 = vmatpush1.bf16.msra.mxu0 %v3070
        %3080 = vmatprep.subr.bf16.mxu0 0
        %3081 = vmatpush1.bf16.msra.mxu0 0
        %3082 = vmatprep.subr.bf16.mxu0 0
        %3083 = vmatpush1.bf16.msra.mxu0 0
        %3084 = vmatprep.subr.bf16.mxu0 0
        %3085 = vmatpush1.bf16.msra.mxu0 0
        %3086 = vmatprep.subr.bf16.mxu0 0
        %3087 = vmatpush1.bf16.msra.mxu0 0
        %3088 = vmatprep.subr.bf16.mxu0 0
        %3089 = vmatpush1.bf16.msra.mxu0 0
        %3090 = vmatprep.subr.bf16.mxu0 0
        %3091 = vmatpush1.bf16.msra.mxu0 0
        %3092 = vmatprep.subr.bf16.mxu0 0
        %3093 = vmatpush1.bf16.msra.mxu0 0
        %3094 = vmatprep.subr.bf16.mxu0 0
        %3095 = vmatpush1.bf16.msra.mxu0 0
        %3096 = vmatprep.subr.bf16.mxu0 0
        %3097 = vmatpush1.bf16.msra.mxu0 0
        %3098 = vmatprep.subr.bf16.mxu0 0
        %3099 = vmatpush1.bf16.msra.mxu0 0
        %3100 = vmatprep.subr.bf16.mxu0 0
        %3101 = vmatpush1.bf16.msra.mxu0 0
        %3102 = vmatprep.subr.bf16.mxu0 0
        %3103 = vmatpush1.bf16.msra.mxu0 0
        %3104 = vmatprep.subr.bf16.mxu0 0
        %3105 = vmatpush1.bf16.msra.mxu0 0
        %3106 = vmatprep.subr.bf16.mxu0 0
        %3107 = vmatpush1.bf16.msra.mxu0 0
        %3108 = vmatprep.mubr.bf16.mxu0 0
        %3109 = vmatmul.mubr.bf16.gmra.mrb[0].mxu0 %v3074
        %v3110 = vpop.f32.mrb[0].mxu0
        %v3111 = vadd.f32 %v3059, %v3110
        %v3112 = vpop.f32.mrb[0].mxu0
        %v3113 = vpop.f32.mrb[0].mxu0
        %v3114 = vadd.f32 %v3059, %v3113
        %v3115 = vpop.f32.mrb[0].mxu0
        %3116 = vdwg.mxu0
        %v3117 = vld [vmem:[%s13] sm:$0xf]
        %v3118 = vld [vmem:[%s13 + $0x4] sm:$0xf]
        %v3119 = vld [vmem:[%s13 + $0x8] sm:$0xf]
        %v3120 = vld [vmem:[%s13 + $0xc] sm:$0xf]
        %v3121 = vld [vmem:[%s14] sm:$0x1]
        %v3122 = vpack.c.bf16 %v3047, %v3044
        %3124 = vrot.lane.b32.xlu0 %v3122, 120
        %v3125 = vpop.permute.xlu0 %3124
        %3126 = vrot.lane.b32.xlu0 %v3122, 112
        %v3127 = vpop.permute.xlu0 %3126
        %3128 = vrot.lane.b32.xlu0 %v3122, 104
        %v3129 = vpop.permute.xlu0 %3128
        %v3132 = vpack.i.b16 %v3125, %v3122
        %v3134 = vshrl.u32 %v3122, 16
        %v3135 = vshrl.u32 %v3125, 16
        %v3136 = vpack.i.b16 %v3135, %v3134
        %v3140 = vpack.i.b16 %v3129, %v3127
        %v3142 = vshrl.u32 %v3127, 16
        %v3143 = vshrl.u32 %v3129, 16
        %v3144 = vpack.i.b16 %v3143, %v3142
        %v3146 = vcombine.high %v3132, %v875
        %v3148 = vunpack.c.l.s4 1983009808
        %v3149 = vunpack.c.0.s8 %v3148
        %v3150 = vlaneseq
        %v3151 = vshrl.u32 %v3150, 7
        %v3152 = vsub.s32 %v3149, %v3151
        %v3153 = vrot.slane %v3132, %v3152
        %v3155 = vunpack.c.l.s4 1983009808
        %v3156 = vunpack.c.0.s8 %v3155
        %v3157 = vlaneseq
        %v3158 = vshrl.u32 %v3157, 7
        %v3159 = vsub.s32 %v3156, %v3158
        %v3160 = vrot.slane %v3146, %v3159
        %v3161 = vcombine.high %v3140, %v875
        %v3163 = vunpack.c.l.s4 1983009808
        %v3164 = vunpack.c.0.s8 %v3163
        %v3165 = vlaneseq
        %v3166 = vshrl.u32 %v3165, 7
        %v3167 = vsub.s32 %v3164, %v3166
        %v3168 = vrot.slane %v3140, %v3167
        %v3170 = vunpack.c.l.s4 1983009808
        %v3171 = vunpack.c.0.s8 %v3170
        %v3172 = vlaneseq
        %v3173 = vshrl.u32 %v3172, 7
        %v3174 = vsub.s32 %v3171, %v3173
        %v3175 = vrot.slane %v3161, %v3174
        %v3176 = vcombine.low %v3153, %v3168
        %v3177 = vcombine.high %v3153, %v3168
        %v3179 = vunpack.c.l.s4 1934713408
        %v3180 = vunpack.c.0.s8 %v3179
        %v3181 = vlaneseq
        %v3182 = vshrl.u32 %v3181, 7
        %v3183 = vsub.s32 %v3180, %v3182
        %v3184 = vrot.slane %v3176, %v3183
        %v3186 = vunpack.c.l.s4 1934713408
        %v3187 = vunpack.c.0.s8 %v3186
        %v3188 = vlaneseq
        %v3189 = vshrl.u32 %v3188, 7
        %v3190 = vsub.s32 %v3187, %v3189
        %v3191 = vrot.slane %v3177, %v3190
        %v3192 = vcombine.low %v3160, %v3175
        %v3193 = vcombine.high %v3160, %v3175
        %v3195 = vunpack.c.l.s4 1934713408
        %v3196 = vunpack.c.0.s8 %v3195
        %v3197 = vlaneseq
        %v3198 = vshrl.u32 %v3197, 7
        %v3199 = vsub.s32 %v3196, %v3198
        %v3200 = vrot.slane %v3192, %v3199
        %v3202 = vunpack.c.l.s4 1934713408
        %v3203 = vunpack.c.0.s8 %v3202
        %v3204 = vlaneseq
        %v3205 = vshrl.u32 %v3204, 7
        %v3206 = vsub.s32 %v3203, %v3205
        %v3207 = vrot.slane %v3193, %v3206
        %v3208 = vcombine.high %v3184, 0
        %v3209 = vcombine.high %v3191, 0
        %v3210 = vcombine.high %v3200, 0
        %v3211 = vcombine.high %v3207, 0
        %v3212 = vcombine.high %v3136, %v878
        %v3214 = vunpack.c.l.s4 1983009808
        %v3215 = vunpack.c.0.s8 %v3214
        %v3216 = vlaneseq
        %v3217 = vshrl.u32 %v3216, 7
        %v3218 = vsub.s32 %v3215, %v3217
        %v3219 = vrot.slane %v3136, %v3218
        %v3221 = vunpack.c.l.s4 1983009808
        %v3222 = vunpack.c.0.s8 %v3221
        %v3223 = vlaneseq
        %v3224 = vshrl.u32 %v3223, 7
        %v3225 = vsub.s32 %v3222, %v3224
        %v3226 = vrot.slane %v3212, %v3225
        %v3227 = vcombine.high %v3144, %v878
        %v3229 = vunpack.c.l.s4 1983009808
        %v3230 = vunpack.c.0.s8 %v3229
        %v3231 = vlaneseq
        %v3232 = vshrl.u32 %v3231, 7
        %v3233 = vsub.s32 %v3230, %v3232
        %v3234 = vrot.slane %v3144, %v3233
        %v3236 = vunpack.c.l.s4 1983009808
        %v3237 = vunpack.c.0.s8 %v3236
        %v3238 = vlaneseq
        %v3239 = vshrl.u32 %v3238, 7
        %v3240 = vsub.s32 %v3237, %v3239
        %v3241 = vrot.slane %v3227, %v3240
        %v3242 = vcombine.low %v3219, %v3234
        %v3243 = vcombine.high %v3219, %v3234
        %v3245 = vunpack.c.l.s4 1934713408
        %v3246 = vunpack.c.0.s8 %v3245
        %v3247 = vlaneseq
        %v3248 = vshrl.u32 %v3247, 7
        %v3249 = vsub.s32 %v3246, %v3248
        %v3250 = vrot.slane %v3242, %v3249
        %v3252 = vunpack.c.l.s4 1934713408
        %v3253 = vunpack.c.0.s8 %v3252
        %v3254 = vlaneseq
        %v3255 = vshrl.u32 %v3254, 7
        %v3256 = vsub.s32 %v3253, %v3255
        %v3257 = vrot.slane %v3243, %v3256
        %v3258 = vcombine.low %v3226, %v3241
        %v3259 = vcombine.high %v3226, %v3241
        %v3261 = vunpack.c.l.s4 1934713408
        %v3262 = vunpack.c.0.s8 %v3261
        %v3263 = vlaneseq
        %v3264 = vshrl.u32 %v3263, 7
        %v3265 = vsub.s32 %v3262, %v3264
        %v3266 = vrot.slane %v3258, %v3265
        %v3268 = vunpack.c.l.s4 1934713408
        %v3269 = vunpack.c.0.s8 %v3268
        %v3270 = vlaneseq
        %v3271 = vshrl.u32 %v3270, 7
        %v3272 = vsub.s32 %v3269, %v3271
        %v3273 = vrot.slane %v3259, %v3272
        %v3274 = vcombine.high %v3250, 0
        %v3275 = vcombine.high %v3257, 0
        %v3276 = vcombine.high %v3266, 0
        %v3277 = vcombine.high %v3273, 0
        %v3278 = vcombine.low %v3184, %v3191
        %v3280 = vunpack.c.l.s4 1983009808
        %v3281 = vunpack.c.0.s8 %v3280
        %v3282 = vlaneseq
        %v3283 = vshrl.u32 %v3282, 7
        %v3284 = vsub.s32 %v3281, %v3283
        %v3285 = vrot.slane %v3278, %v3284
        %v3286 = vcombine.low %v3208, %v3209
        %v3288 = vunpack.c.l.s4 1983009808
        %v3289 = vunpack.c.0.s8 %v3288
        %v3290 = vlaneseq
        %v3291 = vshrl.u32 %v3290, 7
        %v3292 = vsub.s32 %v3289, %v3291
        %v3293 = vrot.slane %v3286, %v3292
        %v3294 = vcombine.low %v3285, %v3293
        %v3296 = vunpack.c.l.s4 1934713408
        %v3297 = vunpack.c.0.s8 %v3296
        %v3298 = vlaneseq
        %v3299 = vshrl.u32 %v3298, 7
        %v3300 = vsub.s32 %v3297, %v3299
        %v3301 = vrot.slane %v3294, %v3300
        %v3302 = vcombine.high %v3301, 0
        %v3303 = vcombine.low %v3250, %v3257
        %v3305 = vunpack.c.l.s4 1983009808
        %v3306 = vunpack.c.0.s8 %v3305
        %v3307 = vlaneseq
        %v3308 = vshrl.u32 %v3307, 7
        %v3309 = vsub.s32 %v3306, %v3308
        %v3310 = vrot.slane %v3303, %v3309
        %v3311 = vcombine.low %v3274, %v3275
        %v3313 = vunpack.c.l.s4 1983009808
        %v3314 = vunpack.c.0.s8 %v3313
        %v3315 = vlaneseq
        %v3316 = vshrl.u32 %v3315, 7
        %v3317 = vsub.s32 %v3314, %v3316
        %v3318 = vrot.slane %v3311, %v3317
        %v3319 = vcombine.low %v3310, %v3318
        %v3321 = vunpack.c.l.s4 1934713408
        %v3322 = vunpack.c.0.s8 %v3321
        %v3323 = vlaneseq
        %v3324 = vshrl.u32 %v3323, 7
        %v3325 = vsub.s32 %v3322, %v3324
        %v3326 = vrot.slane %v3319, %v3325
        %v3327 = vcombine.high %v3326, 0
        %v3328 = vcombine.low %v3200, %v3207
        %v3330 = vunpack.c.l.s4 1983009808
        %v3331 = vunpack.c.0.s8 %v3330
        %v3332 = vlaneseq
        %v3333 = vshrl.u32 %v3332, 7
        %v3334 = vsub.s32 %v3331, %v3333
        %v3335 = vrot.slane %v3328, %v3334
        %v3336 = vcombine.low %v3210, %v3211
        %v3338 = vunpack.c.l.s4 1983009808
        %v3339 = vunpack.c.0.s8 %v3338
        %v3340 = vlaneseq
        %v3341 = vshrl.u32 %v3340, 7
        %v3342 = vsub.s32 %v3339, %v3341
        %v3343 = vrot.slane %v3336, %v3342
        %v3344 = vcombine.low %v3335, %v3343
        %v3346 = vunpack.c.l.s4 1934713408
        %v3347 = vunpack.c.0.s8 %v3346
        %v3348 = vlaneseq
        %v3349 = vshrl.u32 %v3348, 7
        %v3350 = vsub.s32 %v3347, %v3349
        %v3351 = vrot.slane %v3344, %v3350
        %v3352 = vcombine.high %v3351, 0
        %v3353 = vcombine.low %v3266, %v3273
        %v3355 = vunpack.c.l.s4 1983009808
        %v3356 = vunpack.c.0.s8 %v3355
        %v3357 = vlaneseq
        %v3358 = vshrl.u32 %v3357, 7
        %v3359 = vsub.s32 %v3356, %v3358
        %v3360 = vrot.slane %v3353, %v3359
        %v3361 = vcombine.low %v3276, %v3277
        %v3363 = vunpack.c.l.s4 1983009808
        %v3364 = vunpack.c.0.s8 %v3363
        %v3365 = vlaneseq
        %v3366 = vshrl.u32 %v3365, 7
        %v3367 = vsub.s32 %v3364, %v3366
        %v3368 = vrot.slane %v3361, %v3367
        %v3369 = vcombine.low %v3360, %v3368
        %v3371 = vunpack.c.l.s4 1934713408
        %v3372 = vunpack.c.0.s8 %v3371
        %v3373 = vlaneseq
        %v3374 = vshrl.u32 %v3373, 7
        %v3375 = vsub.s32 %v3372, %v3374
        %v3376 = vrot.slane %v3369, %v3375
        %v3377 = vcombine.high %v3376, 0
        %v3380 = vpack.i.b16 %v3326, %v3301
        %v3381 = vshrl.u32 %v3301, 16
        %v3382 = vshrl.u32 %v3326, 16
        %v3383 = vpack.i.b16 %v3382, %v3381
        %v3386 = vpack.i.b16 %v3327, %v3302
        %v3387 = vshrl.u32 %v3302, 16
        %v3388 = vshrl.u32 %v3327, 16
        %v3389 = vpack.i.b16 %v3388, %v3387
        %v3392 = vpack.i.b16 %v3376, %v3351
        %v3393 = vshrl.u32 %v3351, 16
        %v3394 = vshrl.u32 %v3376, 16
        %v3395 = vpack.i.b16 %v3394, %v3393
        %v3398 = vpack.i.b16 %v3377, %v3352
        %v3399 = vshrl.u32 %v3352, 16
        %v3400 = vshrl.u32 %v3377, 16
        %v3401 = vpack.i.b16 %v3400, %v3399
        %v3402 = vpack.c.bf16 %v3114, %v3111
        %3404 = vrot.lane.b32.xlu0 %v3402, 120
        %v3405 = vpop.permute.xlu0 %3404
        %3406 = vrot.lane.b32.xlu0 %v3402, 112
        %v3407 = vpop.permute.xlu0 %3406
        %3408 = vrot.lane.b32.xlu0 %v3402, 104
        %v3409 = vpop.permute.xlu0 %3408
        %v3412 = vpack.i.b16 %v3405, %v3402
        %v3414 = vshrl.u32 %v3402, 16
        %v3415 = vshrl.u32 %v3405, 16
        %v3416 = vpack.i.b16 %v3415, %v3414
        %v3420 = vpack.i.b16 %v3409, %v3407
        %v3422 = vshrl.u32 %v3407, 16
        %v3423 = vshrl.u32 %v3409, 16
        %v3424 = vpack.i.b16 %v3423, %v3422
        %v3426 = vcombine.high %v3412, %v875
        %v3428 = vunpack.c.l.s4 1983009808
        %v3429 = vunpack.c.0.s8 %v3428
        %v3430 = vlaneseq
        %v3431 = vshrl.u32 %v3430, 7
        %v3432 = vsub.s32 %v3429, %v3431
        %v3433 = vrot.slane %v3412, %v3432
        %v3435 = vunpack.c.l.s4 1983009808
        %v3436 = vunpack.c.0.s8 %v3435
        %v3437 = vlaneseq
        %v3438 = vshrl.u32 %v3437, 7
        %v3439 = vsub.s32 %v3436, %v3438
        %v3440 = vrot.slane %v3426, %v3439
        %v3441 = vcombine.high %v3420, %v875
        %v3443 = vunpack.c.l.s4 1983009808
        %v3444 = vunpack.c.0.s8 %v3443
        %v3445 = vlaneseq
        %v3446 = vshrl.u32 %v3445, 7
        %v3447 = vsub.s32 %v3444, %v3446
        %v3448 = vrot.slane %v3420, %v3447
        %v3450 = vunpack.c.l.s4 1983009808
        %v3451 = vunpack.c.0.s8 %v3450
        %v3452 = vlaneseq
        %v3453 = vshrl.u32 %v3452, 7
        %v3454 = vsub.s32 %v3451, %v3453
        %v3455 = vrot.slane %v3441, %v3454
        %v3456 = vcombine.low %v3433, %v3448
        %v3457 = vcombine.high %v3433, %v3448
        %v3459 = vunpack.c.l.s4 1934713408
        %v3460 = vunpack.c.0.s8 %v3459
        %v3461 = vlaneseq
        %v3462 = vshrl.u32 %v3461, 7
        %v3463 = vsub.s32 %v3460, %v3462
        %v3464 = vrot.slane %v3456, %v3463
        %v3466 = vunpack.c.l.s4 1934713408
        %v3467 = vunpack.c.0.s8 %v3466
        %v3468 = vlaneseq
        %v3469 = vshrl.u32 %v3468, 7
        %v3470 = vsub.s32 %v3467, %v3469
        %v3471 = vrot.slane %v3457, %v3470
        %v3472 = vcombine.low %v3440, %v3455
        %v3473 = vcombine.high %v3440, %v3455
        %v3475 = vunpack.c.l.s4 1934713408
        %v3476 = vunpack.c.0.s8 %v3475
        %v3477 = vlaneseq
        %v3478 = vshrl.u32 %v3477, 7
        %v3479 = vsub.s32 %v3476, %v3478
        %v3480 = vrot.slane %v3472, %v3479
        %v3482 = vunpack.c.l.s4 1934713408
        %v3483 = vunpack.c.0.s8 %v3482
        %v3484 = vlaneseq
        %v3485 = vshrl.u32 %v3484, 7
        %v3486 = vsub.s32 %v3483, %v3485
        %v3487 = vrot.slane %v3473, %v3486
        %v3488 = vcombine.high %v3464, 0
        %v3489 = vcombine.high %v3471, 0
        %v3490 = vcombine.high %v3480, 0
        %v3491 = vcombine.high %v3487, 0
        %v3492 = vcombine.high %v3416, %v878
        %v3494 = vunpack.c.l.s4 1983009808
        %v3495 = vunpack.c.0.s8 %v3494
        %v3496 = vlaneseq
        %v3497 = vshrl.u32 %v3496, 7
        %v3498 = vsub.s32 %v3495, %v3497
        %v3499 = vrot.slane %v3416, %v3498
        %v3501 = vunpack.c.l.s4 1983009808
        %v3502 = vunpack.c.0.s8 %v3501
        %v3503 = vlaneseq
        %v3504 = vshrl.u32 %v3503, 7
        %v3505 = vsub.s32 %v3502, %v3504
        %v3506 = vrot.slane %v3492, %v3505
        %v3507 = vcombine.high %v3424, %v878
        %v3509 = vunpack.c.l.s4 1983009808
        %v3510 = vunpack.c.0.s8 %v3509
        %v3511 = vlaneseq
        %v3512 = vshrl.u32 %v3511, 7
        %v3513 = vsub.s32 %v3510, %v3512
        %v3514 = vrot.slane %v3424, %v3513
        %v3516 = vunpack.c.l.s4 1983009808
        %v3517 = vunpack.c.0.s8 %v3516
        %v3518 = vlaneseq
        %v3519 = vshrl.u32 %v3518, 7
        %v3520 = vsub.s32 %v3517, %v3519
        %v3521 = vrot.slane %v3507, %v3520
        %v3522 = vcombine.low %v3499, %v3514
        %v3523 = vcombine.high %v3499, %v3514
        %v3525 = vunpack.c.l.s4 1934713408
        %v3526 = vunpack.c.0.s8 %v3525
        %v3527 = vlaneseq
        %v3528 = vshrl.u32 %v3527, 7
        %v3529 = vsub.s32 %v3526, %v3528
        %v3530 = vrot.slane %v3522, %v3529
        %v3532 = vunpack.c.l.s4 1934713408
        %v3533 = vunpack.c.0.s8 %v3532
        %v3534 = vlaneseq
        %v3535 = vshrl.u32 %v3534, 7
        %v3536 = vsub.s32 %v3533, %v3535
        %v3537 = vrot.slane %v3523, %v3536
        %v3538 = vcombine.low %v3506, %v3521
        %v3539 = vcombine.high %v3506, %v3521
        %v3541 = vunpack.c.l.s4 1934713408
        %v3542 = vunpack.c.0.s8 %v3541
        %v3543 = vlaneseq
        %v3544 = vshrl.u32 %v3543, 7
        %v3545 = vsub.s32 %v3542, %v3544
        %v3546 = vrot.slane %v3538, %v3545
        %v3548 = vunpack.c.l.s4 1934713408
        %v3549 = vunpack.c.0.s8 %v3548
        %v3550 = vlaneseq
        %v3551 = vshrl.u32 %v3550, 7
        %v3552 = vsub.s32 %v3549, %v3551
        %v3553 = vrot.slane %v3539, %v3552
        %v3554 = vcombine.high %v3530, 0
        %v3555 = vcombine.high %v3537, 0
        %v3556 = vcombine.high %v3546, 0
        %v3557 = vcombine.high %v3553, 0
        %v3558 = vcombine.low %v3464, %v3471
        %v3560 = vunpack.c.l.s4 1983009808
        %v3561 = vunpack.c.0.s8 %v3560
        %v3562 = vlaneseq
        %v3563 = vshrl.u32 %v3562, 7
        %v3564 = vsub.s32 %v3561, %v3563
        %v3565 = vrot.slane %v3558, %v3564
        %v3566 = vcombine.low %v3488, %v3489
        %v3568 = vunpack.c.l.s4 1983009808
        %v3569 = vunpack.c.0.s8 %v3568
        %v3570 = vlaneseq
        %v3571 = vshrl.u32 %v3570, 7
        %v3572 = vsub.s32 %v3569, %v3571
        %v3573 = vrot.slane %v3566, %v3572
        %v3574 = vcombine.low %v3565, %v3573
        %v3576 = vunpack.c.l.s4 1934713408
        %v3577 = vunpack.c.0.s8 %v3576
        %v3578 = vlaneseq
        %v3579 = vshrl.u32 %v3578, 7
        %v3580 = vsub.s32 %v3577, %v3579
        %v3581 = vrot.slane %v3574, %v3580
        %v3582 = vcombine.high %v3581, 0
        %v3583 = vcombine.low %v3530, %v3537
        %v3585 = vunpack.c.l.s4 1983009808
        %v3586 = vunpack.c.0.s8 %v3585
        %v3587 = vlaneseq
        %v3588 = vshrl.u32 %v3587, 7
        %v3589 = vsub.s32 %v3586, %v3588
        %v3590 = vrot.slane %v3583, %v3589
        %v3591 = vcombine.low %v3554, %v3555
        %v3593 = vunpack.c.l.s4 1983009808
        %v3594 = vunpack.c.0.s8 %v3593
        %v3595 = vlaneseq
        %v3596 = vshrl.u32 %v3595, 7
        %v3597 = vsub.s32 %v3594, %v3596
        %v3598 = vrot.slane %v3591, %v3597
        %v3599 = vcombine.low %v3590, %v3598
        %v3601 = vunpack.c.l.s4 1934713408
        %v3602 = vunpack.c.0.s8 %v3601
        %v3603 = vlaneseq
        %v3604 = vshrl.u32 %v3603, 7
        %v3605 = vsub.s32 %v3602, %v3604
        %v3606 = vrot.slane %v3599, %v3605
        %v3607 = vcombine.high %v3606, 0
        %v3608 = vcombine.low %v3480, %v3487
        %v3610 = vunpack.c.l.s4 1983009808
        %v3611 = vunpack.c.0.s8 %v3610
        %v3612 = vlaneseq
        %v3613 = vshrl.u32 %v3612, 7
        %v3614 = vsub.s32 %v3611, %v3613
        %v3615 = vrot.slane %v3608, %v3614
        %v3616 = vcombine.low %v3490, %v3491
        %v3618 = vunpack.c.l.s4 1983009808
        %v3619 = vunpack.c.0.s8 %v3618
        %v3620 = vlaneseq
        %v3621 = vshrl.u32 %v3620, 7
        %v3622 = vsub.s32 %v3619, %v3621
        %v3623 = vrot.slane %v3616, %v3622
        %v3624 = vcombine.low %v3615, %v3623
        %v3626 = vunpack.c.l.s4 1934713408
        %v3627 = vunpack.c.0.s8 %v3626
        %v3628 = vlaneseq
        %v3629 = vshrl.u32 %v3628, 7
        %v3630 = vsub.s32 %v3627, %v3629
        %v3631 = vrot.slane %v3624, %v3630
        %v3632 = vcombine.high %v3631, 0
        %v3633 = vcombine.low %v3546, %v3553
        %v3635 = vunpack.c.l.s4 1983009808
        %v3636 = vunpack.c.0.s8 %v3635
        %v3637 = vlaneseq
        %v3638 = vshrl.u32 %v3637, 7
        %v3639 = vsub.s32 %v3636, %v3638
        %v3640 = vrot.slane %v3633, %v3639
        %v3641 = vcombine.low %v3556, %v3557
        %v3643 = vunpack.c.l.s4 1983009808
        %v3644 = vunpack.c.0.s8 %v3643
        %v3645 = vlaneseq
        %v3646 = vshrl.u32 %v3645, 7
        %v3647 = vsub.s32 %v3644, %v3646
        %v3648 = vrot.slane %v3641, %v3647
        %v3649 = vcombine.low %v3640, %v3648
        %v3651 = vunpack.c.l.s4 1934713408
        %v3652 = vunpack.c.0.s8 %v3651
        %v3653 = vlaneseq
        %v3654 = vshrl.u32 %v3653, 7
        %v3655 = vsub.s32 %v3652, %v3654
        %v3656 = vrot.slane %v3649, %v3655
        %v3657 = vcombine.high %v3656, 0
        %v3660 = vpack.i.b16 %v3606, %v3581
        %v3661 = vshrl.u32 %v3581, 16
        %v3662 = vshrl.u32 %v3606, 16
        %v3663 = vpack.i.b16 %v3662, %v3661
        %v3666 = vpack.i.b16 %v3607, %v3582
        %v3667 = vshrl.u32 %v3582, 16
        %v3668 = vshrl.u32 %v3607, 16
        %v3669 = vpack.i.b16 %v3668, %v3667
        %v3672 = vpack.i.b16 %v3656, %v3631
        %v3673 = vshrl.u32 %v3631, 16
        %v3674 = vshrl.u32 %v3656, 16
        %v3675 = vpack.i.b16 %v3674, %v3673
        %v3678 = vpack.i.b16 %v3657, %v3632
        %v3679 = vshrl.u32 %v3632, 16
        %v3680 = vshrl.u32 %v3657, 16
        %v3681 = vpack.i.b16 %v3680, %v3679
        %3682 = vrot.lane.b32.xlu0 %v3402, 96
        %v3683 = vpop.permute.xlu0 %3682
        %3684 = vrot.lane.b32.xlu0 %v3405, 96
        %v3685 = vpop.permute.xlu0 %3684
        %3686 = vrot.lane.b32.xlu0 %v3407, 96
        %v3687 = vpop.permute.xlu0 %3686
        %3688 = vrot.lane.b32.xlu0 %v3409, 96
        %v3689 = vpop.permute.xlu0 %3688
        %v3692 = vpack.i.b16 %v3685, %v3683
        %v3694 = vshrl.u32 %v3683, 16
        %v3695 = vshrl.u32 %v3685, 16
        %v3696 = vpack.i.b16 %v3695, %v3694
        %v3700 = vpack.i.b16 %v3689, %v3687
        %v3702 = vshrl.u32 %v3687, 16
        %v3703 = vshrl.u32 %v3689, 16
        %v3704 = vpack.i.b16 %v3703, %v3702
        %v3706 = vcombine.high %v3692, %v875
        %v3708 = vunpack.c.l.s4 1983009808
        %v3709 = vunpack.c.0.s8 %v3708
        %v3710 = vlaneseq
        %v3711 = vshrl.u32 %v3710, 7
        %v3712 = vsub.s32 %v3709, %v3711
        %v3713 = vrot.slane %v3692, %v3712
        %v3715 = vunpack.c.l.s4 1983009808
        %v3716 = vunpack.c.0.s8 %v3715
        %v3717 = vlaneseq
        %v3718 = vshrl.u32 %v3717, 7
        %v3719 = vsub.s32 %v3716, %v3718
        %v3720 = vrot.slane %v3706, %v3719
        %v3721 = vcombine.high %v3700, %v875
        %v3723 = vunpack.c.l.s4 1983009808
        %v3724 = vunpack.c.0.s8 %v3723
        %v3725 = vlaneseq
        %v3726 = vshrl.u32 %v3725, 7
        %v3727 = vsub.s32 %v3724, %v3726
        %v3728 = vrot.slane %v3700, %v3727
        %v3730 = vunpack.c.l.s4 1983009808
        %v3731 = vunpack.c.0.s8 %v3730
        %v3732 = vlaneseq
        %v3733 = vshrl.u32 %v3732, 7
        %v3734 = vsub.s32 %v3731, %v3733
        %v3735 = vrot.slane %v3721, %v3734
        %v3736 = vcombine.low %v3713, %v3728
        %v3737 = vcombine.high %v3713, %v3728
        %v3739 = vunpack.c.l.s4 1934713408
        %v3740 = vunpack.c.0.s8 %v3739
        %v3741 = vlaneseq
        %v3742 = vshrl.u32 %v3741, 7
        %v3743 = vsub.s32 %v3740, %v3742
        %v3744 = vrot.slane %v3736, %v3743
        %v3746 = vunpack.c.l.s4 1934713408
        %v3747 = vunpack.c.0.s8 %v3746
        %v3748 = vlaneseq
        %v3749 = vshrl.u32 %v3748, 7
        %v3750 = vsub.s32 %v3747, %v3749
        %v3751 = vrot.slane %v3737, %v3750
        %v3752 = vcombine.low %v3720, %v3735
        %v3753 = vcombine.high %v3720, %v3735
        %v3755 = vunpack.c.l.s4 1934713408
        %v3756 = vunpack.c.0.s8 %v3755
        %v3757 = vlaneseq
        %v3758 = vshrl.u32 %v3757, 7
        %v3759 = vsub.s32 %v3756, %v3758
        %v3760 = vrot.slane %v3752, %v3759
        %v3762 = vunpack.c.l.s4 1934713408
        %v3763 = vunpack.c.0.s8 %v3762
        %v3764 = vlaneseq
        %v3765 = vshrl.u32 %v3764, 7
        %v3766 = vsub.s32 %v3763, %v3765
        %v3767 = vrot.slane %v3753, %v3766
        %v3768 = vcombine.high %v3744, 0
        %v3769 = vcombine.high %v3751, 0
        %v3770 = vcombine.high %v3760, 0
        %v3771 = vcombine.high %v3767, 0
        %v3772 = vcombine.high %v3696, %v878
        %v3774 = vunpack.c.l.s4 1983009808
        %v3775 = vunpack.c.0.s8 %v3774
        %v3776 = vlaneseq
        %v3777 = vshrl.u32 %v3776, 7
        %v3778 = vsub.s32 %v3775, %v3777
        %v3779 = vrot.slane %v3696, %v3778
        %v3781 = vunpack.c.l.s4 1983009808
        %v3782 = vunpack.c.0.s8 %v3781
        %v3783 = vlaneseq
        %v3784 = vshrl.u32 %v3783, 7
        %v3785 = vsub.s32 %v3782, %v3784
        %v3786 = vrot.slane %v3772, %v3785
        %v3787 = vcombine.high %v3704, %v878
        %v3789 = vunpack.c.l.s4 1983009808
        %v3790 = vunpack.c.0.s8 %v3789
        %v3791 = vlaneseq
        %v3792 = vshrl.u32 %v3791, 7
        %v3793 = vsub.s32 %v3790, %v3792
        %v3794 = vrot.slane %v3704, %v3793
        %v3796 = vunpack.c.l.s4 1983009808
        %v3797 = vunpack.c.0.s8 %v3796
        %v3798 = vlaneseq
        %v3799 = vshrl.u32 %v3798, 7
        %v3800 = vsub.s32 %v3797, %v3799
        %v3801 = vrot.slane %v3787, %v3800
        %v3802 = vcombine.low %v3779, %v3794
        %v3803 = vcombine.high %v3779, %v3794
        %v3805 = vunpack.c.l.s4 1934713408
        %v3806 = vunpack.c.0.s8 %v3805
        %v3807 = vlaneseq
        %v3808 = vshrl.u32 %v3807, 7
        %v3809 = vsub.s32 %v3806, %v3808
        %v3810 = vrot.slane %v3802, %v3809
        %v3812 = vunpack.c.l.s4 1934713408
        %v3813 = vunpack.c.0.s8 %v3812
        %v3814 = vlaneseq
        %v3815 = vshrl.u32 %v3814, 7
        %v3816 = vsub.s32 %v3813, %v3815
        %v3817 = vrot.slane %v3803, %v3816
        %v3818 = vcombine.low %v3786, %v3801
        %v3819 = vcombine.high %v3786, %v3801
        %v3821 = vunpack.c.l.s4 1934713408
        %v3822 = vunpack.c.0.s8 %v3821
        %v3823 = vlaneseq
        %v3824 = vshrl.u32 %v3823, 7
        %v3825 = vsub.s32 %v3822, %v3824
        %v3826 = vrot.slane %v3818, %v3825
        %v3828 = vunpack.c.l.s4 1934713408
        %v3829 = vunpack.c.0.s8 %v3828
        %v3830 = vlaneseq
        %v3831 = vshrl.u32 %v3830, 7
        %v3832 = vsub.s32 %v3829, %v3831
        %v3833 = vrot.slane %v3819, %v3832
        %v3834 = vcombine.high %v3810, 0
        %v3835 = vcombine.high %v3817, 0
        %v3836 = vcombine.high %v3826, 0
        %v3837 = vcombine.high %v3833, 0
        %v3838 = vcombine.low %v3744, %v3751
        %v3840 = vunpack.c.l.s4 1983009808
        %v3841 = vunpack.c.0.s8 %v3840
        %v3842 = vlaneseq
        %v3843 = vshrl.u32 %v3842, 7
        %v3844 = vsub.s32 %v3841, %v3843
        %v3845 = vrot.slane %v3838, %v3844
        %v3846 = vcombine.low %v3768, %v3769
        %v3848 = vunpack.c.l.s4 1983009808
        %v3849 = vunpack.c.0.s8 %v3848
        %v3850 = vlaneseq
        %v3851 = vshrl.u32 %v3850, 7
        %v3852 = vsub.s32 %v3849, %v3851
        %v3853 = vrot.slane %v3846, %v3852
        %v3854 = vcombine.low %v3845, %v3853
        %v3856 = vunpack.c.l.s4 1934713408
        %v3857 = vunpack.c.0.s8 %v3856
        %v3858 = vlaneseq
        %v3859 = vshrl.u32 %v3858, 7
        %v3860 = vsub.s32 %v3857, %v3859
        %v3861 = vrot.slane %v3854, %v3860
        %v3862 = vcombine.high %v3861, 0
        %v3863 = vcombine.low %v3810, %v3817
        %v3865 = vunpack.c.l.s4 1983009808
        %v3866 = vunpack.c.0.s8 %v3865
        %v3867 = vlaneseq
        %v3868 = vshrl.u32 %v3867, 7
        %v3869 = vsub.s32 %v3866, %v3868
        %v3870 = vrot.slane %v3863, %v3869
        %v3871 = vcombine.low %v3834, %v3835
        %v3873 = vunpack.c.l.s4 1983009808
        %v3874 = vunpack.c.0.s8 %v3873
        %v3875 = vlaneseq
        %v3876 = vshrl.u32 %v3875, 7
        %v3877 = vsub.s32 %v3874, %v3876
        %v3878 = vrot.slane %v3871, %v3877
        %v3879 = vcombine.low %v3870, %v3878
        %v3881 = vunpack.c.l.s4 1934713408
        %v3882 = vunpack.c.0.s8 %v3881
        %v3883 = vlaneseq
        %v3884 = vshrl.u32 %v3883, 7
        %v3885 = vsub.s32 %v3882, %v3884
        %v3886 = vrot.slane %v3879, %v3885
        %v3887 = vcombine.high %v3886, 0
        %v3888 = vcombine.low %v3760, %v3767
        %v3890 = vunpack.c.l.s4 1983009808
        %v3891 = vunpack.c.0.s8 %v3890
        %v3892 = vlaneseq
        %v3893 = vshrl.u32 %v3892, 7
        %v3894 = vsub.s32 %v3891, %v3893
        %v3895 = vrot.slane %v3888, %v3894
        %v3896 = vcombine.low %v3770, %v3771
        %v3898 = vunpack.c.l.s4 1983009808
        %v3899 = vunpack.c.0.s8 %v3898
        %v3900 = vlaneseq
        %v3901 = vshrl.u32 %v3900, 7
        %v3902 = vsub.s32 %v3899, %v3901
        %v3903 = vrot.slane %v3896, %v3902
        %v3904 = vcombine.low %v3895, %v3903
        %v3906 = vunpack.c.l.s4 1934713408
        %v3907 = vunpack.c.0.s8 %v3906
        %v3908 = vlaneseq
        %v3909 = vshrl.u32 %v3908, 7
        %v3910 = vsub.s32 %v3907, %v3909
        %v3911 = vrot.slane %v3904, %v3910
        %v3912 = vcombine.high %v3911, 0
        %v3913 = vcombine.low %v3826, %v3833
        %v3915 = vunpack.c.l.s4 1983009808
        %v3916 = vunpack.c.0.s8 %v3915
        %v3917 = vlaneseq
        %v3918 = vshrl.u32 %v3917, 7
        %v3919 = vsub.s32 %v3916, %v3918
        %v3920 = vrot.slane %v3913, %v3919
        %v3921 = vcombine.low %v3836, %v3837
        %v3923 = vunpack.c.l.s4 1983009808
        %v3924 = vunpack.c.0.s8 %v3923
        %v3925 = vlaneseq
        %v3926 = vshrl.u32 %v3925, 7
        %v3927 = vsub.s32 %v3924, %v3926
        %v3928 = vrot.slane %v3921, %v3927
        %v3929 = vcombine.low %v3920, %v3928
        %v3931 = vunpack.c.l.s4 1934713408
        %v3932 = vunpack.c.0.s8 %v3931
        %v3933 = vlaneseq
        %v3934 = vshrl.u32 %v3933, 7
        %v3935 = vsub.s32 %v3932, %v3934
        %v3936 = vrot.slane %v3929, %v3935
        %v3937 = vcombine.high %v3936, 0
        %v3940 = vpack.i.b16 %v3886, %v3861
        %v3941 = vshrl.u32 %v3861, 16
        %v3942 = vshrl.u32 %v3886, 16
        %v3943 = vpack.i.b16 %v3942, %v3941
        %v3946 = vpack.i.b16 %v3887, %v3862
        %v3947 = vshrl.u32 %v3862, 16
        %v3948 = vshrl.u32 %v3887, 16
        %v3949 = vpack.i.b16 %v3948, %v3947
        %v3952 = vpack.i.b16 %v3936, %v3911
        %v3953 = vshrl.u32 %v3911, 16
        %v3954 = vshrl.u32 %v3936, 16
        %v3955 = vpack.i.b16 %v3954, %v3953
        %v3958 = vpack.i.b16 %v3937, %v3912
        %v3959 = vshrl.u32 %v3912, 16
        %v3960 = vshrl.u32 %v3937, 16
        %v3961 = vpack.i.b16 %v3960, %v3959
        %v3963 = vsel %vm1696, %v3380, 0
        %v3966 = vsel %vm1696, %v3660, 0
        %3968 = vmatprep.subr.bf16.mxu0 0
        %3969 = vmatpush1.bf16.xpose.msra.mxu0 %v3966
        %3970 = vmatprep.subr.bf16.mxu0 0
        %3971 = vmatpush1.bf16.xpose.msra.mxu0 0
        %3972 = vmatprep.subr.bf16.mxu0 0
        %3973 = vmatpush1.bf16.xpose.msra.mxu0 0
        %3974 = vmatprep.subr.bf16.mxu0 0
        %3975 = vmatpush1.bf16.xpose.msra.mxu0 0
        %3976 = vmatprep.subr.bf16.mxu0 0
        %3977 = vmatpush1.bf16.xpose.msra.mxu0 0
        %3978 = vmatprep.subr.bf16.mxu0 0
        %3979 = vmatpush1.bf16.xpose.msra.mxu0 0
        %3980 = vmatprep.subr.bf16.mxu0 0
        %3981 = vmatpush1.bf16.xpose.msra.mxu0 0
        %3982 = vmatprep.subr.bf16.mxu0 0
        %3983 = vmatpush1.bf16.xpose.msra.mxu0 0
        %3984 = vmatprep.subr.bf16.mxu0 0
        %3985 = vmatpush1.bf16.xpose.msra.mxu0 0
        %3986 = vmatprep.subr.bf16.mxu0 0
        %3987 = vmatpush1.bf16.xpose.msra.mxu0 0
        %3988 = vmatprep.subr.bf16.mxu0 0
        %3989 = vmatpush1.bf16.xpose.msra.mxu0 0
        %3990 = vmatprep.subr.bf16.mxu0 0
        %3991 = vmatpush1.bf16.xpose.msra.mxu0 0
        %3992 = vmatprep.subr.bf16.mxu0 0
        %3993 = vmatpush1.bf16.xpose.msra.mxu0 0
        %3994 = vmatprep.subr.bf16.mxu0 0
        %3995 = vmatpush1.bf16.xpose.msra.mxu0 0
        %3996 = vmatprep.subr.bf16.mxu0 0
        %3997 = vmatpush1.bf16.xpose.msra.mxu0 0
        %3998 = vmatprep.subr.bf16.mxu0 0
        %3999 = vmatpush1.bf16.xpose.msra.mxu0 0
        %4000 = vmatprep.mubr.bf16.mxu0 0
        %4001 = vmatmul.mubr.bf16.gmra.mrb[0].mxu0 %v3963
        %v4002 = vpop.f32.mrb[0].mxu0
        %v4003 = vadd.f32 0.0, %v4002
        %v4004 = vpop.f32.mrb[0].mxu0
        %v4005 = vpop.f32.mrb[0].mxu0
        %v4006 = vpop.f32.mrb[0].mxu0
        %4007 = vdwg.mxu0
        %v4009 = vsel %vm1696, %v3383, 0
        %v4012 = vsel %vm1696, %v3663, 0
        %4014 = vmatprep.subr.bf16.mxu0 0
        %4015 = vmatpush1.bf16.xpose.msra.mxu0 %v4012
        %4016 = vmatprep.subr.bf16.mxu0 0
        %4017 = vmatpush1.bf16.xpose.msra.mxu0 0
        %4018 = vmatprep.subr.bf16.mxu0 0
        %4019 = vmatpush1.bf16.xpose.msra.mxu0 0
        %4020 = vmatprep.subr.bf16.mxu0 0
        %4021 = vmatpush1.bf16.xpose.msra.mxu0 0
        %4022 = vmatprep.subr.bf16.mxu0 0
        %4023 = vmatpush1.bf16.xpose.msra.mxu0 0
        %4024 = vmatprep.subr.bf16.mxu0 0
        %4025 = vmatpush1.bf16.xpose.msra.mxu0 0
        %4026 = vmatprep.subr.bf16.mxu0 0
        %4027 = vmatpush1.bf16.xpose.msra.mxu0 0
        %4028 = vmatprep.subr.bf16.mxu0 0
        %4029 = vmatpush1.bf16.xpose.msra.mxu0 0
        %4030 = vmatprep.subr.bf16.mxu0 0
        %4031 = vmatpush1.bf16.xpose.msra.mxu0 0
        %4032 = vmatprep.subr.bf16.mxu0 0
        %4033 = vmatpush1.bf16.xpose.msra.mxu0 0
        %4034 = vmatprep.subr.bf16.mxu0 0
        %4035 = vmatpush1.bf16.xpose.msra.mxu0 0
        %4036 = vmatprep.subr.bf16.mxu0 0
        %4037 = vmatpush1.bf16.xpose.msra.mxu0 0
        %4038 = vmatprep.subr.bf16.mxu0 0
        %4039 = vmatpush1.bf16.xpose.msra.mxu0 0
        %4040 = vmatprep.subr.bf16.mxu0 0
        %4041 = vmatpush1.bf16.xpose.msra.mxu0 0
        %4042 = vmatprep.subr.bf16.mxu0 0
        %4043 = vmatpush1.bf16.xpose.msra.mxu0 0
        %4044 = vmatprep.subr.bf16.mxu0 0
        %4045 = vmatpush1.bf16.xpose.msra.mxu0 0
        %4046 = vmatprep.mubr.bf16.mxu0 0
        %4047 = vmatmul.mubr.bf16.gmra.mrb[0].mxu0 %v4009
        %v4048 = vpop.f32.mrb[0].mxu0
        %v4049 = vadd.f32 0.0, %v4048
        %v4050 = vpop.f32.mrb[0].mxu0
        %v4051 = vpop.f32.mrb[0].mxu0
        %v4052 = vpop.f32.mrb[0].mxu0
        %4053 = vdwg.mxu0
        %v4055 = vsel %vm1696, %v3386, 0
        %v4058 = vsel %vm1696, %v3666, 0
        %4060 = vmatprep.subr.bf16.mxu0 0
        %4061 = vmatpush1.bf16.xpose.msra.mxu0 %v4058
        %4062 = vmatprep.subr.bf16.mxu0 0
        %4063 = vmatpush1.bf16.xpose.msra.mxu0 0
        %4064 = vmatprep.subr.bf16.mxu0 0
        %4065 = vmatpush1.bf16.xpose.msra.mxu0 0
        %4066 = vmatprep.subr.bf16.mxu0 0
        %4067 = vmatpush1.bf16.xpose.msra.mxu0 0
        %4068 = vmatprep.subr.bf16.mxu0 0
        %4069 = vmatpush1.bf16.xpose.msra.mxu0 0
        %4070 = vmatprep.subr.bf16.mxu0 0
        %4071 = vmatpush1.bf16.xpose.msra.mxu0 0
        %4072 = vmatprep.subr.bf16.mxu0 0
        %4073 = vmatpush1.bf16.xpose.msra.mxu0 0
        %4074 = vmatprep.subr.bf16.mxu0 0
        %4075 = vmatpush1.bf16.xpose.msra.mxu0 0
        %4076 = vmatprep.subr.bf16.mxu0 0
        %4077 = vmatpush1.bf16.xpose.msra.mxu0 0
        %4078 = vmatprep.subr.bf16.mxu0 0
        %4079 = vmatpush1.bf16.xpose.msra.mxu0 0
        %4080 = vmatprep.subr.bf16.mxu0 0
        %4081 = vmatpush1.bf16.xpose.msra.mxu0 0
        %4082 = vmatprep.subr.bf16.mxu0 0
        %4083 = vmatpush1.bf16.xpose.msra.mxu0 0
        %4084 = vmatprep.subr.bf16.mxu0 0
        %4085 = vmatpush1.bf16.xpose.msra.mxu0 0
        %4086 = vmatprep.subr.bf16.mxu0 0
        %4087 = vmatpush1.bf16.xpose.msra.mxu0 0
        %4088 = vmatprep.subr.bf16.mxu0 0
        %4089 = vmatpush1.bf16.xpose.msra.mxu0 0
        %4090 = vmatprep.subr.bf16.mxu0 0
        %4091 = vmatpush1.bf16.xpose.msra.mxu0 0
        %4092 = vmatprep.mubr.bf16.mxu0 0
        %4093 = vmatmul.mubr.bf16.gmra.mrb[0].mxu0 %v4055
        %v4094 = vpop.f32.mrb[0].mxu0
        %v4095 = vadd.f32 0.0, %v4094
        %v4096 = vpop.f32.mrb[0].mxu0
        %v4097 = vpop.f32.mrb[0].mxu0
        %v4098 = vpop.f32.mrb[0].mxu0
        %4099 = vdwg.mxu0
        %v4101 = vsel %vm1696, %v3389, 0
        %v4104 = vsel %vm1696, %v3669, 0
        %4106 = vmatprep.subr.bf16.mxu0 0
        %4107 = vmatpush1.bf16.xpose.msra.mxu0 %v4104
        %4108 = vmatprep.subr.bf16.mxu0 0
        %4109 = vmatpush1.bf16.xpose.msra.mxu0 0
        %4110 = vmatprep.subr.bf16.mxu0 0
        %4111 = vmatpush1.bf16.xpose.msra.mxu0 0
        %4112 = vmatprep.subr.bf16.mxu0 0
        %4113 = vmatpush1.bf16.xpose.msra.mxu0 0
        %4114 = vmatprep.subr.bf16.mxu0 0
        %4115 = vmatpush1.bf16.xpose.msra.mxu0 0
        %4116 = vmatprep.subr.bf16.mxu0 0
        %4117 = vmatpush1.bf16.xpose.msra.mxu0 0
        %4118 = vmatprep.subr.bf16.mxu0 0
        %4119 = vmatpush1.bf16.xpose.msra.mxu0 0
        %4120 = vmatprep.subr.bf16.mxu0 0
        %4121 = vmatpush1.bf16.xpose.msra.mxu0 0
        %4122 = vmatprep.subr.bf16.mxu0 0
        %4123 = vmatpush1.bf16.xpose.msra.mxu0 0
        %4124 = vmatprep.subr.bf16.mxu0 0
        %4125 = vmatpush1.bf16.xpose.msra.mxu0 0
        %4126 = vmatprep.subr.bf16.mxu0 0
        %4127 = vmatpush1.bf16.xpose.msra.mxu0 0
        %4128 = vmatprep.subr.bf16.mxu0 0
        %4129 = vmatpush1.bf16.xpose.msra.mxu0 0
        %4130 = vmatprep.subr.bf16.mxu0 0
        %4131 = vmatpush1.bf16.xpose.msra.mxu0 0
        %4132 = vmatprep.subr.bf16.mxu0 0
        %4133 = vmatpush1.bf16.xpose.msra.mxu0 0
        %4134 = vmatprep.subr.bf16.mxu0 0
        %4135 = vmatpush1.bf16.xpose.msra.mxu0 0
        %4136 = vmatprep.subr.bf16.mxu0 0
        %4137 = vmatpush1.bf16.xpose.msra.mxu0 0
        %4138 = vmatprep.mubr.bf16.mxu0 0
        %4139 = vmatmul.mubr.bf16.gmra.mrb[0].mxu0 %v4101
        %v4140 = vpop.f32.mrb[0].mxu0
        %v4141 = vadd.f32 0.0, %v4140
        %v4142 = vpop.f32.mrb[0].mxu0
        %v4143 = vpop.f32.mrb[0].mxu0
        %v4144 = vpop.f32.mrb[0].mxu0
        %4145 = vdwg.mxu0
        %v4147 = vsel %vm1696, %v3392, 0
        %v4150 = vsel %vm1696, %v3672, 0
        %4152 = vmatprep.subr.bf16.mxu0 0
        %4153 = vmatpush1.bf16.xpose.msra.mxu0 %v4150
        %4154 = vmatprep.subr.bf16.mxu0 0
        %4155 = vmatpush1.bf16.xpose.msra.mxu0 0
        %4156 = vmatprep.subr.bf16.mxu0 0
        %4157 = vmatpush1.bf16.xpose.msra.mxu0 0
        %4158 = vmatprep.subr.bf16.mxu0 0
        %4159 = vmatpush1.bf16.xpose.msra.mxu0 0
        %4160 = vmatprep.subr.bf16.mxu0 0
        %4161 = vmatpush1.bf16.xpose.msra.mxu0 0
        %4162 = vmatprep.subr.bf16.mxu0 0
        %4163 = vmatpush1.bf16.xpose.msra.mxu0 0
        %4164 = vmatprep.subr.bf16.mxu0 0
        %4165 = vmatpush1.bf16.xpose.msra.mxu0 0
        %4166 = vmatprep.subr.bf16.mxu0 0
        %4167 = vmatpush1.bf16.xpose.msra.mxu0 0
        %4168 = vmatprep.subr.bf16.mxu0 0
        %4169 = vmatpush1.bf16.xpose.msra.mxu0 0
        %4170 = vmatprep.subr.bf16.mxu0 0
        %4171 = vmatpush1.bf16.xpose.msra.mxu0 0
        %4172 = vmatprep.subr.bf16.mxu0 0
        %4173 = vmatpush1.bf16.xpose.msra.mxu0 0
        %4174 = vmatprep.subr.bf16.mxu0 0
        %4175 = vmatpush1.bf16.xpose.msra.mxu0 0
        %4176 = vmatprep.subr.bf16.mxu0 0
        %4177 = vmatpush1.bf16.xpose.msra.mxu0 0
        %4178 = vmatprep.subr.bf16.mxu0 0
        %4179 = vmatpush1.bf16.xpose.msra.mxu0 0
        %4180 = vmatprep.subr.bf16.mxu0 0
        %4181 = vmatpush1.bf16.xpose.msra.mxu0 0
        %4182 = vmatprep.subr.bf16.mxu0 0
        %4183 = vmatpush1.bf16.xpose.msra.mxu0 0
        %4184 = vmatprep.mubr.bf16.mxu0 0
        %4185 = vmatmul.mubr.bf16.gmra.mrb[0].mxu0 %v4147
        %v4186 = vpop.f32.mrb[0].mxu0
        %v4187 = vadd.f32 0.0, %v4186
        %v4188 = vpop.f32.mrb[0].mxu0
        %v4189 = vpop.f32.mrb[0].mxu0
        %v4190 = vpop.f32.mrb[0].mxu0
        %4191 = vdwg.mxu0
        %v4193 = vsel %vm1696, %v3395, 0
        %v4196 = vsel %vm1696, %v3675, 0
        %4198 = vmatprep.subr.bf16.mxu0 0
        %4199 = vmatpush1.bf16.xpose.msra.mxu0 %v4196
        %4200 = vmatprep.subr.bf16.mxu0 0
        %4201 = vmatpush1.bf16.xpose.msra.mxu0 0
        %4202 = vmatprep.subr.bf16.mxu0 0
        %4203 = vmatpush1.bf16.xpose.msra.mxu0 0
        %4204 = vmatprep.subr.bf16.mxu0 0
        %4205 = vmatpush1.bf16.xpose.msra.mxu0 0
        %4206 = vmatprep.subr.bf16.mxu0 0
        %4207 = vmatpush1.bf16.xpose.msra.mxu0 0
        %4208 = vmatprep.subr.bf16.mxu0 0
        %4209 = vmatpush1.bf16.xpose.msra.mxu0 0
        %4210 = vmatprep.subr.bf16.mxu0 0
        %4211 = vmatpush1.bf16.xpose.msra.mxu0 0
        %4212 = vmatprep.subr.bf16.mxu0 0
        %4213 = vmatpush1.bf16.xpose.msra.mxu0 0
        %4214 = vmatprep.subr.bf16.mxu0 0
        %4215 = vmatpush1.bf16.xpose.msra.mxu0 0
        %4216 = vmatprep.subr.bf16.mxu0 0
        %4217 = vmatpush1.bf16.xpose.msra.mxu0 0
        %4218 = vmatprep.subr.bf16.mxu0 0
        %4219 = vmatpush1.bf16.xpose.msra.mxu0 0
        %4220 = vmatprep.subr.bf16.mxu0 0
        %4221 = vmatpush1.bf16.xpose.msra.mxu0 0
        %4222 = vmatprep.subr.bf16.mxu0 0
        %4223 = vmatpush1.bf16.xpose.msra.mxu0 0
        %4224 = vmatprep.subr.bf16.mxu0 0
        %4225 = vmatpush1.bf16.xpose.msra.mxu0 0
        %4226 = vmatprep.subr.bf16.mxu0 0
        %4227 = vmatpush1.bf16.xpose.msra.mxu0 0
        %4228 = vmatprep.subr.bf16.mxu0 0
        %4229 = vmatpush1.bf16.xpose.msra.mxu0 0
        %4230 = vmatprep.mubr.bf16.mxu0 0
        %4231 = vmatmul.mubr.bf16.gmra.mrb[0].mxu0 %v4193
        %v4232 = vpop.f32.mrb[0].mxu0
        %v4233 = vadd.f32 0.0, %v4232
        %v4234 = vpop.f32.mrb[0].mxu0
        %v4235 = vpop.f32.mrb[0].mxu0
        %v4236 = vpop.f32.mrb[0].mxu0
        %4237 = vdwg.mxu0
        %v4239 = vsel %vm1696, %v3398, 0
        %v4242 = vsel %vm1696, %v3678, 0
        %4244 = vmatprep.subr.bf16.mxu0 0
        %4245 = vmatpush1.bf16.xpose.msra.mxu0 %v4242
        %4246 = vmatprep.subr.bf16.mxu0 0
        %4247 = vmatpush1.bf16.xpose.msra.mxu0 0
        %4248 = vmatprep.subr.bf16.mxu0 0
        %4249 = vmatpush1.bf16.xpose.msra.mxu0 0
        %4250 = vmatprep.subr.bf16.mxu0 0
        %4251 = vmatpush1.bf16.xpose.msra.mxu0 0
        %4252 = vmatprep.subr.bf16.mxu0 0
        %4253 = vmatpush1.bf16.xpose.msra.mxu0 0
        %4254 = vmatprep.subr.bf16.mxu0 0
        %4255 = vmatpush1.bf16.xpose.msra.mxu0 0
        %4256 = vmatprep.subr.bf16.mxu0 0
        %4257 = vmatpush1.bf16.xpose.msra.mxu0 0
        %4258 = vmatprep.subr.bf16.mxu0 0
        %4259 = vmatpush1.bf16.xpose.msra.mxu0 0
        %4260 = vmatprep.subr.bf16.mxu0 0
        %4261 = vmatpush1.bf16.xpose.msra.mxu0 0
        %4262 = vmatprep.subr.bf16.mxu0 0
        %4263 = vmatpush1.bf16.xpose.msra.mxu0 0
        %4264 = vmatprep.subr.bf16.mxu0 0
        %4265 = vmatpush1.bf16.xpose.msra.mxu0 0
        %4266 = vmatprep.subr.bf16.mxu0 0
        %4267 = vmatpush1.bf16.xpose.msra.mxu0 0
        %4268 = vmatprep.subr.bf16.mxu0 0
        %4269 = vmatpush1.bf16.xpose.msra.mxu0 0
        %4270 = vmatprep.subr.bf16.mxu0 0
        %4271 = vmatpush1.bf16.xpose.msra.mxu0 0
        %4272 = vmatprep.subr.bf16.mxu0 0
        %4273 = vmatpush1.bf16.xpose.msra.mxu0 0
        %4274 = vmatprep.subr.bf16.mxu0 0
        %4275 = vmatpush1.bf16.xpose.msra.mxu0 0
        %4276 = vmatprep.mubr.bf16.mxu0 0
        %4277 = vmatmul.mubr.bf16.gmra.mrb[0].mxu0 %v4239
        %v4278 = vpop.f32.mrb[0].mxu0
        %v4279 = vadd.f32 0.0, %v4278
        %v4280 = vpop.f32.mrb[0].mxu0
        %v4281 = vpop.f32.mrb[0].mxu0
        %v4282 = vpop.f32.mrb[0].mxu0
        %4283 = vdwg.mxu0
        %v4285 = vsel %vm1696, %v3401, 0
        %v4288 = vsel %vm1696, %v3681, 0
        %4290 = vmatprep.subr.bf16.mxu0 0
        %4291 = vmatpush1.bf16.xpose.msra.mxu0 %v4288
        %4292 = vmatprep.subr.bf16.mxu0 0
        %4293 = vmatpush1.bf16.xpose.msra.mxu0 0
        %4294 = vmatprep.subr.bf16.mxu0 0
        %4295 = vmatpush1.bf16.xpose.msra.mxu0 0
        %4296 = vmatprep.subr.bf16.mxu0 0
        %4297 = vmatpush1.bf16.xpose.msra.mxu0 0
        %4298 = vmatprep.subr.bf16.mxu0 0
        %4299 = vmatpush1.bf16.xpose.msra.mxu0 0
        %4300 = vmatprep.subr.bf16.mxu0 0
        %4301 = vmatpush1.bf16.xpose.msra.mxu0 0
        %4302 = vmatprep.subr.bf16.mxu0 0
        %4303 = vmatpush1.bf16.xpose.msra.mxu0 0
        %4304 = vmatprep.subr.bf16.mxu0 0
        %4305 = vmatpush1.bf16.xpose.msra.mxu0 0
        %4306 = vmatprep.subr.bf16.mxu0 0
        %4307 = vmatpush1.bf16.xpose.msra.mxu0 0
        %4308 = vmatprep.subr.bf16.mxu0 0
        %4309 = vmatpush1.bf16.xpose.msra.mxu0 0
        %4310 = vmatprep.subr.bf16.mxu0 0
        %4311 = vmatpush1.bf16.xpose.msra.mxu0 0
        %4312 = vmatprep.subr.bf16.mxu0 0
        %4313 = vmatpush1.bf16.xpose.msra.mxu0 0
        %4314 = vmatprep.subr.bf16.mxu0 0
        %4315 = vmatpush1.bf16.xpose.msra.mxu0 0
        %4316 = vmatprep.subr.bf16.mxu0 0
        %4317 = vmatpush1.bf16.xpose.msra.mxu0 0
        %4318 = vmatprep.subr.bf16.mxu0 0
        %4319 = vmatpush1.bf16.xpose.msra.mxu0 0
        %4320 = vmatprep.subr.bf16.mxu0 0
        %4321 = vmatpush1.bf16.xpose.msra.mxu0 0
        %4322 = vmatprep.mubr.bf16.mxu0 0
        %4323 = vmatmul.mubr.bf16.gmra.mrb[0].mxu0 %v4285
        %v4324 = vpop.f32.mrb[0].mxu0
        %v4325 = vadd.f32 0.0, %v4324
        %v4326 = vpop.f32.mrb[0].mxu0
        %v4327 = vpop.f32.mrb[0].mxu0
        %v4328 = vpop.f32.mrb[0].mxu0
        %4329 = vdwg.mxu0
        %v4332 = vlaneseq
        %v4333 = vshrl.u32 %v4332, 7
        %v4334 = vsub.s32 0, %v4333
        %v4335 = vrot.slane %v770, %v4334
        %v4336 = vlaneseq
        %v4337 = vshrl.u32 %v4336, 7
        %v4338 = vsub.s32 0, %v4337
        %v4339 = vrot.slane %v771, %v4338
        %v4342 = vadd.f32 %v4003, %v4335
        %v4343 = vadd.f32 %v4049, %v4335
        %v4344 = vadd.f32 %v4095, %v4335
        %v4345 = vadd.f32 %v4141, %v4335
        %v4346 = vadd.f32 %v4187, %v4339
        %v4347 = vadd.f32 %v4233, %v4339
        %v4348 = vadd.f32 %v4279, %v4339
        %v4349 = vadd.f32 %v4325, %v4339
        %v4350 = vsel %vm1696, %v4342, -inf
        %4351 = vmax.xlane.f32.xlu0 %v4350
        %v4352 = vpop.xlane.xlu0 %4351
        %v4353 = vsel %vm1696, %v4343, -inf
        %4354 = vmax.xlane.f32.xlu0 %v4353
        %v4355 = vpop.xlane.xlu0 %4354
        %v4356 = vsel %vm1696, %v4344, -inf
        %4357 = vmax.xlane.f32.xlu0 %v4356
        %v4358 = vpop.xlane.xlu0 %4357
        %v4359 = vsel %vm1696, %v4345, -inf
        %4360 = vmax.xlane.f32.xlu0 %v4359
        %v4361 = vpop.xlane.xlu0 %4360
        %v4362 = vsel %vm1696, %v4346, -inf
        %4363 = vmax.xlane.f32.xlu0 %v4362
        %v4364 = vpop.xlane.xlu0 %4363
        %v4365 = vsel %vm1696, %v4347, -inf
        %4366 = vmax.xlane.f32.xlu0 %v4365
        %v4367 = vpop.xlane.xlu0 %4366
        %v4368 = vsel %vm1696, %v4348, -inf
        %4369 = vmax.xlane.f32.xlu0 %v4368
        %v4370 = vpop.xlane.xlu0 %4369
        %v4371 = vsel %vm1696, %v4349, -inf
        %4372 = vmax.xlane.f32.xlu0 %v4371
        %v4373 = vpop.xlane.xlu0 %4372
        %v4374 = vsub.f32 %v4342, %v4352
        %v4375 = vsub.f32 %v4343, %v4355
        %v4376 = vsub.f32 %v4344, %v4358
        %v4377 = vsub.f32 %v4345, %v4361
        %v4378 = vsub.f32 %v4346, %v4364
        %v4379 = vsub.f32 %v4347, %v4367
        %v4380 = vsub.f32 %v4348, %v4370
        %v4381 = vsub.f32 %v4349, %v4373
        %v4382 = vmul.f32 %v4374, 1.442695
        %v4383 = vpow.pop %v4382
        %v4384 = vmul.f32 %v4375, 1.442695
        %v4385 = vpow.pop %v4384
        %v4386 = vmul.f32 %v4376, 1.442695
        %v4387 = vpow.pop %v4386
        %v4388 = vmul.f32 %v4377, 1.442695
        %v4389 = vpow.pop %v4388
        %v4390 = vmul.f32 %v4378, 1.442695
        %v4391 = vpow.pop %v4390
        %v4392 = vmul.f32 %v4379, 1.442695
        %v4393 = vpow.pop %v4392
        %v4394 = vmul.f32 %v4380, 1.442695
        %v4395 = vpow.pop %v4394
        %v4396 = vmul.f32 %v4381, 1.442695
        %v4397 = vpow.pop %v4396
        %v4398 = vsel %vm1696, %v4383, 0.0
        %4399 = vadd.xlane.f32.xlu0 %v4398
        %v4400 = vpop.xlane.xlu0 %4399
        %v4401 = vsel %vm1696, %v4385, 0.0
        %4402 = vadd.xlane.f32.xlu0 %v4401
        %v4403 = vpop.xlane.xlu0 %4402
        %v4404 = vsel %vm1696, %v4387, 0.0
        %4405 = vadd.xlane.f32.xlu0 %v4404
        %v4406 = vpop.xlane.xlu0 %4405
        %v4407 = vsel %vm1696, %v4389, 0.0
        %4408 = vadd.xlane.f32.xlu0 %v4407
        %v4409 = vpop.xlane.xlu0 %4408
        %v4410 = vsel %vm1696, %v4391, 0.0
        %4411 = vadd.xlane.f32.xlu0 %v4410
        %v4412 = vpop.xlane.xlu0 %4411
        %v4413 = vsel %vm1696, %v4393, 0.0
        %4414 = vadd.xlane.f32.xlu0 %v4413
        %v4415 = vpop.xlane.xlu0 %4414
        %v4416 = vsel %vm1696, %v4395, 0.0
        %4417 = vadd.xlane.f32.xlu0 %v4416
        %v4418 = vpop.xlane.xlu0 %4417
        %v4419 = vsel %vm1696, %v4397, 0.0
        %4420 = vadd.xlane.f32.xlu0 %v4419
        %v4421 = vpop.xlane.xlu0 %4420
        %v4422 = vrcp.pop %v4400
        %v4423 = vrcp.pop %v4403
        %v4424 = vrcp.pop %v4406
        %v4425 = vrcp.pop %v4409
        %v4426 = vrcp.pop %v4412
        %v4427 = vrcp.pop %v4415
        %v4428 = vrcp.pop %v4418
        %v4429 = vrcp.pop %v4421
        %v4430 = vmul.f32 %v4383, %v4422
        %v4431 = vmul.f32 %v4385, %v4423
        %v4432 = vmul.f32 %v4387, %v4424
        %v4433 = vmul.f32 %v4389, %v4425
        %v4434 = vmul.f32 %v4391, %v4426
        %v4435 = vmul.f32 %v4393, %v4427
        %v4436 = vmul.f32 %v4395, %v4428
        %v4437 = vmul.f32 %v4397, %v4429
        %v4438 = vpack.c.bf16 %v4430, %v4430
        %v4439 = vpack.c.bf16 %v4431, %v4431
        %v4440 = vpack.c.bf16 %v4432, %v4432
        %v4441 = vpack.c.bf16 %v4433, %v4433
        %v4442 = vpack.c.bf16 %v4434, %v4434
        %v4443 = vpack.c.bf16 %v4435, %v4435
        %v4444 = vpack.c.bf16 %v4436, %v4436
        %v4445 = vpack.c.bf16 %v4437, %v4437
        %v4447 = vsel %vm1696, %v4438, 0
        %v4450 = vsel %vm2172, %v3940, 0
        %4452 = vmatprep.subr.bf16.mxu0 0
        %4453 = vmatpush1.bf16.msra.mxu0 %v4450
        %4454 = vmatprep.subr.bf16.mxu0 0
        %4455 = vmatpush1.bf16.msra.mxu0 0
        %4456 = vmatprep.subr.bf16.mxu0 0
        %4457 = vmatpush1.bf16.msra.mxu0 0
        %4458 = vmatprep.subr.bf16.mxu0 0
        %4459 = vmatpush1.bf16.msra.mxu0 0
        %4460 = vmatprep.subr.bf16.mxu0 0
        %4461 = vmatpush1.bf16.msra.mxu0 0
        %4462 = vmatprep.subr.bf16.mxu0 0
        %4463 = vmatpush1.bf16.msra.mxu0 0
        %4464 = vmatprep.subr.bf16.mxu0 0
        %4465 = vmatpush1.bf16.msra.mxu0 0
        %4466 = vmatprep.subr.bf16.mxu0 0
        %4467 = vmatpush1.bf16.msra.mxu0 0
        %4468 = vmatprep.subr.bf16.mxu0 0
        %4469 = vmatpush1.bf16.msra.mxu0 0
        %4470 = vmatprep.subr.bf16.mxu0 0
        %4471 = vmatpush1.bf16.msra.mxu0 0
        %4472 = vmatprep.subr.bf16.mxu0 0
        %4473 = vmatpush1.bf16.msra.mxu0 0
        %4474 = vmatprep.subr.bf16.mxu0 0
        %4475 = vmatpush1.bf16.msra.mxu0 0
        %4476 = vmatprep.subr.bf16.mxu0 0
        %4477 = vmatpush1.bf16.msra.mxu0 0
        %4478 = vmatprep.subr.bf16.mxu0 0
        %4479 = vmatpush1.bf16.msra.mxu0 0
        %4480 = vmatprep.subr.bf16.mxu0 0
        %4481 = vmatpush1.bf16.msra.mxu0 0
        %4482 = vmatprep.subr.bf16.mxu0 0
        %4483 = vmatpush1.bf16.msra.mxu0 0
        %4484 = vmatprep.mubr.bf16.mxu0 0
        %4485 = vmatmul.mubr.bf16.gmra.mrb[0].mxu0 %v4447
        %v4486 = vpop.f32.mrb[0].mxu0
        %v4487 = vadd.f32 0.0, %v4486
        %v4488 = vpop.f32.mrb[0].mxu0
        %v4489 = vpop.f32.mrb[0].mxu0
        %v4490 = vpop.f32.mrb[0].mxu0
        %4491 = vdwg.mxu0
        %v4493 = vsel %vm1696, %v4439, 0
        %v4496 = vsel %vm2172, %v3943, 0
        %4498 = vmatprep.subr.bf16.mxu0 0
        %4499 = vmatpush1.bf16.msra.mxu0 %v4496
        %4500 = vmatprep.subr.bf16.mxu0 0
        %4501 = vmatpush1.bf16.msra.mxu0 0
        %4502 = vmatprep.subr.bf16.mxu0 0
        %4503 = vmatpush1.bf16.msra.mxu0 0
        %4504 = vmatprep.subr.bf16.mxu0 0
        %4505 = vmatpush1.bf16.msra.mxu0 0
        %4506 = vmatprep.subr.bf16.mxu0 0
        %4507 = vmatpush1.bf16.msra.mxu0 0
        %4508 = vmatprep.subr.bf16.mxu0 0
        %4509 = vmatpush1.bf16.msra.mxu0 0
        %4510 = vmatprep.subr.bf16.mxu0 0
        %4511 = vmatpush1.bf16.msra.mxu0 0
        %4512 = vmatprep.subr.bf16.mxu0 0
        %4513 = vmatpush1.bf16.msra.mxu0 0
        %4514 = vmatprep.subr.bf16.mxu0 0
        %4515 = vmatpush1.bf16.msra.mxu0 0
        %4516 = vmatprep.subr.bf16.mxu0 0
        %4517 = vmatpush1.bf16.msra.mxu0 0
        %4518 = vmatprep.subr.bf16.mxu0 0
        %4519 = vmatpush1.bf16.msra.mxu0 0
        %4520 = vmatprep.subr.bf16.mxu0 0
        %4521 = vmatpush1.bf16.msra.mxu0 0
        %4522 = vmatprep.subr.bf16.mxu0 0
        %4523 = vmatpush1.bf16.msra.mxu0 0
        %4524 = vmatprep.subr.bf16.mxu0 0
        %4525 = vmatpush1.bf16.msra.mxu0 0
        %4526 = vmatprep.subr.bf16.mxu0 0
        %4527 = vmatpush1.bf16.msra.mxu0 0
        %4528 = vmatprep.subr.bf16.mxu0 0
        %4529 = vmatpush1.bf16.msra.mxu0 0
        %4530 = vmatprep.mubr.bf16.mxu0 0
        %4531 = vmatmul.mubr.bf16.gmra.mrb[0].mxu0 %v4493
        %v4532 = vpop.f32.mrb[0].mxu0
        %v4533 = vadd.f32 0.0, %v4532
        %v4534 = vpop.f32.mrb[0].mxu0
        %v4535 = vpop.f32.mrb[0].mxu0
        %v4536 = vpop.f32.mrb[0].mxu0
        %4537 = vdwg.mxu0
        %v4539 = vsel %vm1696, %v4440, 0
        %v4542 = vsel %vm2172, %v3946, 0
        %4544 = vmatprep.subr.bf16.mxu0 0
        %4545 = vmatpush1.bf16.msra.mxu0 %v4542
        %4546 = vmatprep.subr.bf16.mxu0 0
        %4547 = vmatpush1.bf16.msra.mxu0 0
        %4548 = vmatprep.subr.bf16.mxu0 0
        %4549 = vmatpush1.bf16.msra.mxu0 0
        %4550 = vmatprep.subr.bf16.mxu0 0
        %4551 = vmatpush1.bf16.msra.mxu0 0
        %4552 = vmatprep.subr.bf16.mxu0 0
        %4553 = vmatpush1.bf16.msra.mxu0 0
        %4554 = vmatprep.subr.bf16.mxu0 0
        %4555 = vmatpush1.bf16.msra.mxu0 0
        %4556 = vmatprep.subr.bf16.mxu0 0
        %4557 = vmatpush1.bf16.msra.mxu0 0
        %4558 = vmatprep.subr.bf16.mxu0 0
        %4559 = vmatpush1.bf16.msra.mxu0 0
        %4560 = vmatprep.subr.bf16.mxu0 0
        %4561 = vmatpush1.bf16.msra.mxu0 0
        %4562 = vmatprep.subr.bf16.mxu0 0
        %4563 = vmatpush1.bf16.msra.mxu0 0
        %4564 = vmatprep.subr.bf16.mxu0 0
        %4565 = vmatpush1.bf16.msra.mxu0 0
        %4566 = vmatprep.subr.bf16.mxu0 0
        %4567 = vmatpush1.bf16.msra.mxu0 0
        %4568 = vmatprep.subr.bf16.mxu0 0
        %4569 = vmatpush1.bf16.msra.mxu0 0
        %4570 = vmatprep.subr.bf16.mxu0 0
        %4571 = vmatpush1.bf16.msra.mxu0 0
        %4572 = vmatprep.subr.bf16.mxu0 0
        %4573 = vmatpush1.bf16.msra.mxu0 0
        %4574 = vmatprep.subr.bf16.mxu0 0
        %4575 = vmatpush1.bf16.msra.mxu0 0
        %4576 = vmatprep.mubr.bf16.mxu0 0
        %4577 = vmatmul.mubr.bf16.gmra.mrb[0].mxu0 %v4539
        %v4578 = vpop.f32.mrb[0].mxu0
        %v4579 = vadd.f32 0.0, %v4578
        %v4580 = vpop.f32.mrb[0].mxu0
        %v4581 = vpop.f32.mrb[0].mxu0
        %v4582 = vpop.f32.mrb[0].mxu0
        %4583 = vdwg.mxu0
        %v4585 = vsel %vm1696, %v4441, 0
        %v4588 = vsel %vm2172, %v3949, 0
        %4590 = vmatprep.subr.bf16.mxu0 0
        %4591 = vmatpush1.bf16.msra.mxu0 %v4588
        %4592 = vmatprep.subr.bf16.mxu0 0
        %4593 = vmatpush1.bf16.msra.mxu0 0
        %4594 = vmatprep.subr.bf16.mxu0 0
        %4595 = vmatpush1.bf16.msra.mxu0 0
        %4596 = vmatprep.subr.bf16.mxu0 0
        %4597 = vmatpush1.bf16.msra.mxu0 0
        %4598 = vmatprep.subr.bf16.mxu0 0
        %4599 = vmatpush1.bf16.msra.mxu0 0
        %4600 = vmatprep.subr.bf16.mxu0 0
        %4601 = vmatpush1.bf16.msra.mxu0 0
        %4602 = vmatprep.subr.bf16.mxu0 0
        %4603 = vmatpush1.bf16.msra.mxu0 0
        %4604 = vmatprep.subr.bf16.mxu0 0
        %4605 = vmatpush1.bf16.msra.mxu0 0
        %4606 = vmatprep.subr.bf16.mxu0 0
        %4607 = vmatpush1.bf16.msra.mxu0 0
        %4608 = vmatprep.subr.bf16.mxu0 0
        %4609 = vmatpush1.bf16.msra.mxu0 0
        %4610 = vmatprep.subr.bf16.mxu0 0
        %4611 = vmatpush1.bf16.msra.mxu0 0
        %4612 = vmatprep.subr.bf16.mxu0 0
        %4613 = vmatpush1.bf16.msra.mxu0 0
        %4614 = vmatprep.subr.bf16.mxu0 0
        %4615 = vmatpush1.bf16.msra.mxu0 0
        %4616 = vmatprep.subr.bf16.mxu0 0
        %4617 = vmatpush1.bf16.msra.mxu0 0
        %4618 = vmatprep.subr.bf16.mxu0 0
        %4619 = vmatpush1.bf16.msra.mxu0 0
        %4620 = vmatprep.subr.bf16.mxu0 0
        %4621 = vmatpush1.bf16.msra.mxu0 0
        %4622 = vmatprep.mubr.bf16.mxu0 0
        %4623 = vmatmul.mubr.bf16.gmra.mrb[0].mxu0 %v4585
        %v4624 = vpop.f32.mrb[0].mxu0
        %v4625 = vadd.f32 0.0, %v4624
        %v4626 = vpop.f32.mrb[0].mxu0
        %v4627 = vpop.f32.mrb[0].mxu0
        %v4628 = vpop.f32.mrb[0].mxu0
        %4629 = vdwg.mxu0
        %v4631 = vsel %vm1696, %v4442, 0
        %v4634 = vsel %vm2172, %v3952, 0
        %4636 = vmatprep.subr.bf16.mxu0 0
        %4637 = vmatpush1.bf16.msra.mxu0 %v4634
        %4638 = vmatprep.subr.bf16.mxu0 0
        %4639 = vmatpush1.bf16.msra.mxu0 0
        %4640 = vmatprep.subr.bf16.mxu0 0
        %4641 = vmatpush1.bf16.msra.mxu0 0
        %4642 = vmatprep.subr.bf16.mxu0 0
        %4643 = vmatpush1.bf16.msra.mxu0 0
        %4644 = vmatprep.subr.bf16.mxu0 0
        %4645 = vmatpush1.bf16.msra.mxu0 0
        %4646 = vmatprep.subr.bf16.mxu0 0
        %4647 = vmatpush1.bf16.msra.mxu0 0
        %4648 = vmatprep.subr.bf16.mxu0 0
        %4649 = vmatpush1.bf16.msra.mxu0 0
        %4650 = vmatprep.subr.bf16.mxu0 0
        %4651 = vmatpush1.bf16.msra.mxu0 0
        %4652 = vmatprep.subr.bf16.mxu0 0
        %4653 = vmatpush1.bf16.msra.mxu0 0
        %4654 = vmatprep.subr.bf16.mxu0 0
        %4655 = vmatpush1.bf16.msra.mxu0 0
        %4656 = vmatprep.subr.bf16.mxu0 0
        %4657 = vmatpush1.bf16.msra.mxu0 0
        %4658 = vmatprep.subr.bf16.mxu0 0
        %4659 = vmatpush1.bf16.msra.mxu0 0
        %4660 = vmatprep.subr.bf16.mxu0 0
        %4661 = vmatpush1.bf16.msra.mxu0 0
        %4662 = vmatprep.subr.bf16.mxu0 0
        %4663 = vmatpush1.bf16.msra.mxu0 0
        %4664 = vmatprep.subr.bf16.mxu0 0
        %4665 = vmatpush1.bf16.msra.mxu0 0
        %4666 = vmatprep.subr.bf16.mxu0 0
        %4667 = vmatpush1.bf16.msra.mxu0 0
        %4668 = vmatprep.mubr.bf16.mxu0 0
        %4669 = vmatmul.mubr.bf16.gmra.mrb[0].mxu0 %v4631
        %v4670 = vpop.f32.mrb[0].mxu0
        %v4671 = vadd.f32 0.0, %v4670
        %v4672 = vpop.f32.mrb[0].mxu0
        %v4673 = vpop.f32.mrb[0].mxu0
        %v4674 = vpop.f32.mrb[0].mxu0
        %4675 = vdwg.mxu0
        %v4677 = vsel %vm1696, %v4443, 0
        %v4680 = vsel %vm2172, %v3955, 0
        %4682 = vmatprep.subr.bf16.mxu0 0
        %4683 = vmatpush1.bf16.msra.mxu0 %v4680
        %4684 = vmatprep.subr.bf16.mxu0 0
        %4685 = vmatpush1.bf16.msra.mxu0 0
        %4686 = vmatprep.subr.bf16.mxu0 0
        %4687 = vmatpush1.bf16.msra.mxu0 0
        %4688 = vmatprep.subr.bf16.mxu0 0
        %4689 = vmatpush1.bf16.msra.mxu0 0
        %4690 = vmatprep.subr.bf16.mxu0 0
        %4691 = vmatpush1.bf16.msra.mxu0 0
        %4692 = vmatprep.subr.bf16.mxu0 0
        %4693 = vmatpush1.bf16.msra.mxu0 0
        %4694 = vmatprep.subr.bf16.mxu0 0
        %4695 = vmatpush1.bf16.msra.mxu0 0
        %4696 = vmatprep.subr.bf16.mxu0 0
        %4697 = vmatpush1.bf16.msra.mxu0 0
        %4698 = vmatprep.subr.bf16.mxu0 0
        %4699 = vmatpush1.bf16.msra.mxu0 0
        %4700 = vmatprep.subr.bf16.mxu0 0
        %4701 = vmatpush1.bf16.msra.mxu0 0
        %4702 = vmatprep.subr.bf16.mxu0 0
        %4703 = vmatpush1.bf16.msra.mxu0 0
        %4704 = vmatprep.subr.bf16.mxu0 0
        %4705 = vmatpush1.bf16.msra.mxu0 0
        %4706 = vmatprep.subr.bf16.mxu0 0
        %4707 = vmatpush1.bf16.msra.mxu0 0
        %4708 = vmatprep.subr.bf16.mxu0 0
        %4709 = vmatpush1.bf16.msra.mxu0 0
        %4710 = vmatprep.subr.bf16.mxu0 0
        %4711 = vmatpush1.bf16.msra.mxu0 0
        %4712 = vmatprep.subr.bf16.mxu0 0
        %4713 = vmatpush1.bf16.msra.mxu0 0
        %4714 = vmatprep.mubr.bf16.mxu0 0
        %4715 = vmatmul.mubr.bf16.gmra.mrb[0].mxu0 %v4677
        %v4716 = vpop.f32.mrb[0].mxu0
        %v4717 = vadd.f32 0.0, %v4716
        %v4718 = vpop.f32.mrb[0].mxu0
        %v4719 = vpop.f32.mrb[0].mxu0
        %v4720 = vpop.f32.mrb[0].mxu0
        %4721 = vdwg.mxu0
        %v4723 = vsel %vm1696, %v4444, 0
        %v4726 = vsel %vm2172, %v3958, 0
        %4728 = vmatprep.subr.bf16.mxu0 0
        %4729 = vmatpush1.bf16.msra.mxu0 %v4726
        %4730 = vmatprep.subr.bf16.mxu0 0
        %4731 = vmatpush1.bf16.msra.mxu0 0
        %4732 = vmatprep.subr.bf16.mxu0 0
        %4733 = vmatpush1.bf16.msra.mxu0 0
        %4734 = vmatprep.subr.bf16.mxu0 0
        %4735 = vmatpush1.bf16.msra.mxu0 0
        %4736 = vmatprep.subr.bf16.mxu0 0
        %4737 = vmatpush1.bf16.msra.mxu0 0
        %4738 = vmatprep.subr.bf16.mxu0 0
        %4739 = vmatpush1.bf16.msra.mxu0 0
        %4740 = vmatprep.subr.bf16.mxu0 0
        %4741 = vmatpush1.bf16.msra.mxu0 0
        %4742 = vmatprep.subr.bf16.mxu0 0
        %4743 = vmatpush1.bf16.msra.mxu0 0
        %4744 = vmatprep.subr.bf16.mxu0 0
        %4745 = vmatpush1.bf16.msra.mxu0 0
        %4746 = vmatprep.subr.bf16.mxu0 0
        %4747 = vmatpush1.bf16.msra.mxu0 0
        %4748 = vmatprep.subr.bf16.mxu0 0
        %4749 = vmatpush1.bf16.msra.mxu0 0
        %4750 = vmatprep.subr.bf16.mxu0 0
        %4751 = vmatpush1.bf16.msra.mxu0 0
        %4752 = vmatprep.subr.bf16.mxu0 0
        %4753 = vmatpush1.bf16.msra.mxu0 0
        %4754 = vmatprep.subr.bf16.mxu0 0
        %4755 = vmatpush1.bf16.msra.mxu0 0
        %4756 = vmatprep.subr.bf16.mxu0 0
        %4757 = vmatpush1.bf16.msra.mxu0 0
        %4758 = vmatprep.subr.bf16.mxu0 0
        %4759 = vmatpush1.bf16.msra.mxu0 0
        %4760 = vmatprep.mubr.bf16.mxu0 0
        %4761 = vmatmul.mubr.bf16.gmra.mrb[0].mxu0 %v4723
        %v4762 = vpop.f32.mrb[0].mxu0
        %v4763 = vadd.f32 0.0, %v4762
        %v4764 = vpop.f32.mrb[0].mxu0
        %v4765 = vpop.f32.mrb[0].mxu0
        %v4766 = vpop.f32.mrb[0].mxu0
        %4767 = vdwg.mxu0
        %v4769 = vsel %vm1696, %v4445, 0
        %v4772 = vsel %vm2172, %v3961, 0
        %4774 = vmatprep.subr.bf16.mxu0 0
        %4775 = vmatpush1.bf16.msra.mxu0 %v4772
        %4776 = vmatprep.subr.bf16.mxu0 0
        %4777 = vmatpush1.bf16.msra.mxu0 0
        %4778 = vmatprep.subr.bf16.mxu0 0
        %4779 = vmatpush1.bf16.msra.mxu0 0
        %4780 = vmatprep.subr.bf16.mxu0 0
        %4781 = vmatpush1.bf16.msra.mxu0 0
        %4782 = vmatprep.subr.bf16.mxu0 0
        %4783 = vmatpush1.bf16.msra.mxu0 0
        %4784 = vmatprep.subr.bf16.mxu0 0
        %4785 = vmatpush1.bf16.msra.mxu0 0
        %4786 = vmatprep.subr.bf16.mxu0 0
        %4787 = vmatpush1.bf16.msra.mxu0 0
        %4788 = vmatprep.subr.bf16.mxu0 0
        %4789 = vmatpush1.bf16.msra.mxu0 0
        %4790 = vmatprep.subr.bf16.mxu0 0
        %4791 = vmatpush1.bf16.msra.mxu0 0
        %4792 = vmatprep.subr.bf16.mxu0 0
        %4793 = vmatpush1.bf16.msra.mxu0 0
        %4794 = vmatprep.subr.bf16.mxu0 0
        %4795 = vmatpush1.bf16.msra.mxu0 0
        %4796 = vmatprep.subr.bf16.mxu0 0
        %4797 = vmatpush1.bf16.msra.mxu0 0
        %4798 = vmatprep.subr.bf16.mxu0 0
        %4799 = vmatpush1.bf16.msra.mxu0 0
        %4800 = vmatprep.subr.bf16.mxu0 0
        %4801 = vmatpush1.bf16.msra.mxu0 0
        %4802 = vmatprep.subr.bf16.mxu0 0
        %4803 = vmatpush1.bf16.msra.mxu0 0
        %4804 = vmatprep.subr.bf16.mxu0 0
        %4805 = vmatpush1.bf16.msra.mxu0 0
        %4806 = vmatprep.mubr.bf16.mxu0 0
        %4807 = vmatmul.mubr.bf16.gmra.mrb[0].mxu0 %v4769
        %v4808 = vpop.f32.mrb[0].mxu0
        %v4809 = vadd.f32 0.0, %v4808
        %v4810 = vpop.f32.mrb[0].mxu0
        %v4811 = vpop.f32.mrb[0].mxu0
        %v4812 = vpop.f32.mrb[0].mxu0
        %4813 = vdwg.mxu0
        %v4814 = vpack.c.bf16 %v4487, %v4487
        %v4816 = vunpack.c.l.s4 1983009808
        %v4817 = vunpack.c.0.s8 %v4816
        %v4818 = vlaneseq
        %v4819 = vshrl.u32 %v4818, 7
        %v4820 = vsub.s32 %v4817, %v4819
        %v4821 = vrot.slane %v4814, %v4820
        %v4822 = vpack.c.bf16 %v4579, %v4579
        %v4824 = vunpack.c.l.s4 1983009808
        %v4825 = vunpack.c.0.s8 %v4824
        %v4826 = vlaneseq
        %v4827 = vshrl.u32 %v4826, 7
        %v4828 = vsub.s32 %v4825, %v4827
        %v4829 = vrot.slane %v4822, %v4828
        %v4830 = vcombine.low %v4821, %v4829
        %v4831 = vcombine.high %v4821, %v4829
        %v4833 = vunpack.c.l.s4 1934713408
        %v4834 = vunpack.c.0.s8 %v4833
        %v4835 = vlaneseq
        %v4836 = vshrl.u32 %v4835, 7
        %v4837 = vsub.s32 %v4834, %v4836
        %v4838 = vrot.slane %v4830, %v4837
        %v4840 = vunpack.c.l.s4 1934713408
        %v4841 = vunpack.c.0.s8 %v4840
        %v4842 = vlaneseq
        %v4843 = vshrl.u32 %v4842, 7
        %v4844 = vsub.s32 %v4841, %v4843
        %v4845 = vrot.slane %v4831, %v4844
        %v4846 = vcombine.high %v4838, 0
        %v4847 = vcombine.high %v4845, 0
        %v4848 = vpack.c.bf16 %v4533, %v4533
        %v4850 = vunpack.c.l.s4 1983009808
        %v4851 = vunpack.c.0.s8 %v4850
        %v4852 = vlaneseq
        %v4853 = vshrl.u32 %v4852, 7
        %v4854 = vsub.s32 %v4851, %v4853
        %v4855 = vrot.slane %v4848, %v4854
        %v4856 = vpack.c.bf16 %v4625, %v4625
        %v4858 = vunpack.c.l.s4 1983009808
        %v4859 = vunpack.c.0.s8 %v4858
        %v4860 = vlaneseq
        %v4861 = vshrl.u32 %v4860, 7
        %v4862 = vsub.s32 %v4859, %v4861
        %v4863 = vrot.slane %v4856, %v4862
        %v4864 = vcombine.low %v4855, %v4863
        %v4865 = vcombine.high %v4855, %v4863
        %v4867 = vunpack.c.l.s4 1934713408
        %v4868 = vunpack.c.0.s8 %v4867
        %v4869 = vlaneseq
        %v4870 = vshrl.u32 %v4869, 7
        %v4871 = vsub.s32 %v4868, %v4870
        %v4872 = vrot.slane %v4864, %v4871
        %v4874 = vunpack.c.l.s4 1934713408
        %v4875 = vunpack.c.0.s8 %v4874
        %v4876 = vlaneseq
        %v4877 = vshrl.u32 %v4876, 7
        %v4878 = vsub.s32 %v4875, %v4877
        %v4879 = vrot.slane %v4865, %v4878
        %v4880 = vcombine.high %v4872, 0
        %v4881 = vcombine.high %v4879, 0
        %v4882 = vpack.c.bf16 %v4671, %v4671
        %v4884 = vunpack.c.l.s4 1983009808
        %v4885 = vunpack.c.0.s8 %v4884
        %v4886 = vlaneseq
        %v4887 = vshrl.u32 %v4886, 7
        %v4888 = vsub.s32 %v4885, %v4887
        %v4889 = vrot.slane %v4882, %v4888
        %v4890 = vpack.c.bf16 %v4763, %v4763
        %v4892 = vunpack.c.l.s4 1983009808
        %v4893 = vunpack.c.0.s8 %v4892
        %v4894 = vlaneseq
        %v4895 = vshrl.u32 %v4894, 7
        %v4896 = vsub.s32 %v4893, %v4895
        %v4897 = vrot.slane %v4890, %v4896
        %v4898 = vcombine.low %v4889, %v4897
        %v4899 = vcombine.high %v4889, %v4897
        %v4901 = vunpack.c.l.s4 1934713408
        %v4902 = vunpack.c.0.s8 %v4901
        %v4903 = vlaneseq
        %v4904 = vshrl.u32 %v4903, 7
        %v4905 = vsub.s32 %v4902, %v4904
        %v4906 = vrot.slane %v4898, %v4905
        %v4908 = vunpack.c.l.s4 1934713408
        %v4909 = vunpack.c.0.s8 %v4908
        %v4910 = vlaneseq
        %v4911 = vshrl.u32 %v4910, 7
        %v4912 = vsub.s32 %v4909, %v4911
        %v4913 = vrot.slane %v4899, %v4912
        %v4914 = vcombine.high %v4906, 0
        %v4915 = vcombine.high %v4913, 0
        %v4916 = vpack.c.bf16 %v4717, %v4717
        %v4918 = vunpack.c.l.s4 1983009808
        %v4919 = vunpack.c.0.s8 %v4918
        %v4920 = vlaneseq
        %v4921 = vshrl.u32 %v4920, 7
        %v4922 = vsub.s32 %v4919, %v4921
        %v4923 = vrot.slane %v4916, %v4922
        %v4924 = vpack.c.bf16 %v4809, %v4809
        %v4926 = vunpack.c.l.s4 1983009808
        %v4927 = vunpack.c.0.s8 %v4926
        %v4928 = vlaneseq
        %v4929 = vshrl.u32 %v4928, 7
        %v4930 = vsub.s32 %v4927, %v4929
        %v4931 = vrot.slane %v4924, %v4930
        %v4932 = vcombine.low %v4923, %v4931
        %v4933 = vcombine.high %v4923, %v4931
        %v4935 = vunpack.c.l.s4 1934713408
        %v4936 = vunpack.c.0.s8 %v4935
        %v4937 = vlaneseq
        %v4938 = vshrl.u32 %v4937, 7
        %v4939 = vsub.s32 %v4936, %v4938
        %v4940 = vrot.slane %v4932, %v4939
        %v4942 = vunpack.c.l.s4 1934713408
        %v4943 = vunpack.c.0.s8 %v4942
        %v4944 = vlaneseq
        %v4945 = vshrl.u32 %v4944, 7
        %v4946 = vsub.s32 %v4943, %v4945
        %v4947 = vrot.slane %v4933, %v4946
        %v4948 = vcombine.high %v4940, 0
        %v4949 = vcombine.high %v4947, 0
        %v4952 = vpack.i.b16 %v4872, %v4838
        %v4954 = vshrl.u32 %v4838, 16
        %v4955 = vshrl.u32 %v4872, 16
        %v4956 = vpack.i.b16 %v4955, %v4954
        %v4960 = vpack.i.b16 %v4880, %v4846
        %v4962 = vshrl.u32 %v4846, 16
        %v4963 = vshrl.u32 %v4880, 16
        %v4964 = vpack.i.b16 %v4963, %v4962
        %v4968 = vpack.i.b16 %v4879, %v4845
        %v4970 = vshrl.u32 %v4845, 16
        %v4971 = vshrl.u32 %v4879, 16
        %v4972 = vpack.i.b16 %v4971, %v4970
        %v4976 = vpack.i.b16 %v4881, %v4847
        %v4978 = vshrl.u32 %v4847, 16
        %v4979 = vshrl.u32 %v4881, 16
        %v4980 = vpack.i.b16 %v4979, %v4978
        %v4984 = vpack.i.b16 %v4940, %v4906
        %v4986 = vshrl.u32 %v4906, 16
        %v4987 = vshrl.u32 %v4940, 16
        %v4988 = vpack.i.b16 %v4987, %v4986
        %v4992 = vpack.i.b16 %v4948, %v4914
        %v4994 = vshrl.u32 %v4914, 16
        %v4995 = vshrl.u32 %v4948, 16
        %v4996 = vpack.i.b16 %v4995, %v4994
        %v5000 = vpack.i.b16 %v4947, %v4913
        %v5002 = vshrl.u32 %v4913, 16
        %v5003 = vshrl.u32 %v4947, 16
        %v5004 = vpack.i.b16 %v5003, %v5002
        %v5008 = vpack.i.b16 %v4949, %v4915
        %v5010 = vshrl.u32 %v4915, 16
        %v5011 = vshrl.u32 %v4949, 16
        %v5012 = vpack.i.b16 %v5011, %v5010
        %v5014 = vcombine.low %v4952, %v4968
        %v5016 = vunpack.c.l.s4 1983009808
        %v5017 = vunpack.c.0.s8 %v5016
        %v5018 = vlaneseq
        %v5019 = vshrl.u32 %v5018, 7
        %v5020 = vsub.s32 %v5017, %v5019
        %v5021 = vrot.slane %v5014, %v5020
        %v5022 = vcombine.low %v4960, %v4976
        %v5024 = vunpack.c.l.s4 1983009808
        %v5025 = vunpack.c.0.s8 %v5024
        %v5026 = vlaneseq
        %v5027 = vshrl.u32 %v5026, 7
        %v5028 = vsub.s32 %v5025, %v5027
        %v5029 = vrot.slane %v5022, %v5028
        %v5030 = vcombine.low %v4984, %v5000
        %v5032 = vunpack.c.l.s4 1983009808
        %v5033 = vunpack.c.0.s8 %v5032
        %v5034 = vlaneseq
        %v5035 = vshrl.u32 %v5034, 7
        %v5036 = vsub.s32 %v5033, %v5035
        %v5037 = vrot.slane %v5030, %v5036
        %v5038 = vcombine.low %v4992, %v5008
        %v5040 = vunpack.c.l.s4 1983009808
        %v5041 = vunpack.c.0.s8 %v5040
        %v5042 = vlaneseq
        %v5043 = vshrl.u32 %v5042, 7
        %v5044 = vsub.s32 %v5041, %v5043
        %v5045 = vrot.slane %v5038, %v5044
        %v5046 = vcombine.low %v5021, %v5029
        %v5048 = vunpack.c.l.s4 1934713408
        %v5049 = vunpack.c.0.s8 %v5048
        %v5050 = vlaneseq
        %v5051 = vshrl.u32 %v5050, 7
        %v5052 = vsub.s32 %v5049, %v5051
        %v5053 = vrot.slane %v5046, %v5052
        %v5054 = vcombine.low %v5037, %v5045
        %v5056 = vunpack.c.l.s4 1934713408
        %v5057 = vunpack.c.0.s8 %v5056
        %v5058 = vlaneseq
        %v5059 = vshrl.u32 %v5058, 7
        %v5060 = vsub.s32 %v5057, %v5059
        %v5061 = vrot.slane %v5054, %v5060
        %v5062 = vcombine.low %v5053, %v5061
        %v5063 = vcombine.high %v5053, %v5061
        %v5064 = vcombine.low %v4956, %v4972
        %v5066 = vunpack.c.l.s4 1983009808
        %v5067 = vunpack.c.0.s8 %v5066
        %v5068 = vlaneseq
        %v5069 = vshrl.u32 %v5068, 7
        %v5070 = vsub.s32 %v5067, %v5069
        %v5071 = vrot.slane %v5064, %v5070
        %v5072 = vcombine.low %v4964, %v4980
        %v5074 = vunpack.c.l.s4 1983009808
        %v5075 = vunpack.c.0.s8 %v5074
        %v5076 = vlaneseq
        %v5077 = vshrl.u32 %v5076, 7
        %v5078 = vsub.s32 %v5075, %v5077
        %v5079 = vrot.slane %v5072, %v5078
        %v5080 = vcombine.low %v4988, %v5004
        %v5082 = vunpack.c.l.s4 1983009808
        %v5083 = vunpack.c.0.s8 %v5082
        %v5084 = vlaneseq
        %v5085 = vshrl.u32 %v5084, 7
        %v5086 = vsub.s32 %v5083, %v5085
        %v5087 = vrot.slane %v5080, %v5086
        %v5088 = vcombine.low %v4996, %v5012
        %v5090 = vunpack.c.l.s4 1983009808
        %v5091 = vunpack.c.0.s8 %v5090
        %v5092 = vlaneseq
        %v5093 = vshrl.u32 %v5092, 7
        %v5094 = vsub.s32 %v5091, %v5093
        %v5095 = vrot.slane %v5088, %v5094
        %v5096 = vcombine.low %v5071, %v5079
        %v5098 = vunpack.c.l.s4 1934713408
        %v5099 = vunpack.c.0.s8 %v5098
        %v5100 = vlaneseq
        %v5101 = vshrl.u32 %v5100, 7
        %v5102 = vsub.s32 %v5099, %v5101
        %v5103 = vrot.slane %v5096, %v5102
        %v5104 = vcombine.low %v5087, %v5095
        %v5106 = vunpack.c.l.s4 1934713408
        %v5107 = vunpack.c.0.s8 %v5106
        %v5108 = vlaneseq
        %v5109 = vshrl.u32 %v5108, 7
        %v5110 = vsub.s32 %v5107, %v5109
        %v5111 = vrot.slane %v5104, %v5110
        %v5112 = vcombine.low %v5103, %v5111
        %v5113 = vcombine.high %v5103, %v5111
        %v5116 = vpack.i.b16 %v5112, %v5062
        %v5117 = vshrl.u32 %v5062, 16
        %v5118 = vshrl.u32 %v5112, 16
        %v5119 = vpack.i.b16 %v5118, %v5117
        %v5122 = vpack.i.b16 %v5113, %v5063
        %v5123 = vshrl.u32 %v5063, 16
        %v5124 = vshrl.u32 %v5113, 16
        %v5125 = vpack.i.b16 %v5124, %v5123
        %5126 = vrot.lane.b32.xlu0 %v5119, 8
        %v5127 = vpop.permute.xlu0 %5126
        %5128 = vrot.lane.b32.xlu0 %v5122, 16
        %v5129 = vpop.permute.xlu0 %5128
        %5130 = vrot.lane.b32.xlu0 %v5125, 24
        %v5131 = vpop.permute.xlu0 %5130
        %v5134 = vsel %vm1696, %v5116, %v5127
        %v5136 = vsel %vm2859, %v5134, %v5129
        %v5138 = vsel %vm2862, %v5136, %v5131
        %v5140 = vlaneseq
        %v5141 = vshrl.u32 %v5140, 7
        %v5142 = vsub.s32 0, %v5141
        %v5143 = vrot.slane %v3121, %v5142
        %v5149 = vunpack.c.l.b16 %v3117
        %v5150 = vunpack.c.l.b16 %v3118
        %v5151 = vunpack.c.l.b16 %v3119
        %v5152 = vunpack.c.l.b16 %v3120
        %v5153 = vpack.c.b16 %v5150, %v5149
        %v5154 = vpack.c.b16 %v5152, %v5151
        %v5157 = vsel %vm800, %v5138, 0
        %5159 = vmatprep.subr.bf16.mxu0 0
        %5160 = vmatpush1.bf16.msra.mxu0 %v5153
        %5161 = vmatprep.subr.bf16.mxu0 0
        %5162 = vmatpush1.bf16.msra.mxu0 %v5154
        %5163 = vmatprep.subr.bf16.mxu0 0
        %5164 = vmatpush1.bf16.msra.mxu0 0
        %5165 = vmatprep.subr.bf16.mxu0 0
        %5166 = vmatpush1.bf16.msra.mxu0 0
        %5167 = vmatprep.subr.bf16.mxu0 0
        %5168 = vmatpush1.bf16.msra.mxu0 0
        %5169 = vmatprep.subr.bf16.mxu0 0
        %5170 = vmatpush1.bf16.msra.mxu0 0
        %5171 = vmatprep.subr.bf16.mxu0 0
        %5172 = vmatpush1.bf16.msra.mxu0 0
        %5173 = vmatprep.subr.bf16.mxu0 0
        %5174 = vmatpush1.bf16.msra.mxu0 0
        %5175 = vmatprep.subr.bf16.mxu0 0
        %5176 = vmatpush1.bf16.msra.mxu0 0
        %5177 = vmatprep.subr.bf16.mxu0 0
        %5178 = vmatpush1.bf16.msra.mxu0 0
        %5179 = vmatprep.subr.bf16.mxu0 0
        %5180 = vmatpush1.bf16.msra.mxu0 0
        %5181 = vmatprep.subr.bf16.mxu0 0
        %5182 = vmatpush1.bf16.msra.mxu0 0
        %5183 = vmatprep.subr.bf16.mxu0 0
        %5184 = vmatpush1.bf16.msra.mxu0 0
        %5185 = vmatprep.subr.bf16.mxu0 0
        %5186 = vmatpush1.bf16.msra.mxu0 0
        %5187 = vmatprep.subr.bf16.mxu0 0
        %5188 = vmatpush1.bf16.msra.mxu0 0
        %5189 = vmatprep.subr.bf16.mxu0 0
        %5190 = vmatpush1.bf16.msra.mxu0 0
        %5191 = vmatprep.mubr.bf16.mxu0 0
        %5192 = vmatmul.mubr.bf16.gmra.mrb[0].mxu0 %v5157
        %v5193 = vpop.f32.mrb[0].mxu0
        %v5194 = vadd.f32 %v5143, %v5193
        %v5195 = vpop.f32.mrb[0].mxu0
        %v5196 = vpop.f32.mrb[0].mxu0
        %v5197 = vadd.f32 %v5143, %v5196
        %v5198 = vpop.f32.mrb[0].mxu0
        %5199 = vdwg.mxu0
        %v5200 = vld [vmem:[%s15] sm:$0x1]
        %v5201 = vld [vmem:[%s16] sm:$0x1]
        %v5202 = vadd.f32 %v2975, %v5194
        %v5203 = vadd.f32 %v2976, %v5197
        %v5204 = vsel %vm800, %v5202, 0.0
        %5205 = vadd.xlane.f32.xlu0 %v5204
        %v5206 = vpop.xlane.xlu0 %5205
        %v5207 = vsel %vm800, %v5203, 0.0
        %5208 = vadd.xlane.f32.xlu0 %v5207
        %v5209 = vpop.xlane.xlu0 %5208
        %v5210 = vmul.f32 %v5206, %v2936
        %v5211 = vmul.f32 %v5209, %v2936
        %v5212 = vmul.f32 %v5202, %v5202
        %v5213 = vmul.f32 %v5203, %v5203
        %v5214 = vsel %vm800, %v5212, 0.0
        %5215 = vadd.xlane.f32.xlu0 %v5214
        %v5216 = vpop.xlane.xlu0 %5215
        %v5217 = vsel %vm800, %v5213, 0.0
        %5218 = vadd.xlane.f32.xlu0 %v5217
        %v5219 = vpop.xlane.xlu0 %5218
        %v5220 = vmul.f32 %v5216, %v2936
        %v5221 = vmul.f32 %v5219, %v2936
        %v5222 = vmul.f32 %v5210, %v5210
        %v5223 = vmul.f32 %v5211, %v5211
        %v5224 = vsub.f32 %v5220, %v5222
        %v5225 = vsub.f32 %v5221, %v5223
        %v5226 = vsub.f32 %v5202, %v5210
        %v5227 = vsub.f32 %v5203, %v5211
        %v5229 = vlaneseq
        %v5230 = vshrl.u32 %v5229, 7
        %v5231 = vsub.s32 0, %v5230
        %v5232 = vrot.slane %v5200, %v5231
        %v5234 = vmul.f32 %v5232, %v5226
        %v5235 = vmul.f32 %v5232, %v5227
        %v5236 = vadd.f32 %v5224, 1e-06
        %v5237 = vadd.f32 %v5225, 1e-06
        %v5238 = vrsqrt.pop %v5236
        %v5239 = vrsqrt.pop %v5237
        %v5240 = vmul.f32 %v5234, %v5238
        %v5241 = vmul.f32 %v5235, %v5239
        %v5243 = vlaneseq
        %v5244 = vshrl.u32 %v5243, 7
        %v5245 = vsub.s32 0, %v5244
        %v5246 = vrot.slane %v5201, %v5245
        %v5248 = vadd.f32 %v5240, %v5246
        %v5249 = vadd.f32 %v5241, %v5246
        %v5250 = vpack.c.bf16 %v5249, %v5248
        %v5251 = vld [vmem:[%s17] sm:$0xf]
        %v5252 = vld [vmem:[%s17 + $0x4] sm:$0xf]
        %v5253 = vld [vmem:[%s17 + $0x8] sm:$0xf]
        %v5254 = vld [vmem:[%s17 + $0xc] sm:$0xf]
        %v5255 = vld [vmem:[%s18] sm:$0x1]
        %v5257 = vlaneseq
        %v5258 = vshrl.u32 %v5257, 7
        %v5259 = vsub.s32 0, %v5258
        %v5260 = vrot.slane %v5255, %v5259
        %v5266 = vunpack.c.l.b16 %v5251
        %v5267 = vunpack.c.l.b16 %v5252
        %v5268 = vunpack.c.l.b16 %v5253
        %v5269 = vunpack.c.l.b16 %v5254
        %v5270 = vpack.c.b16 %v5267, %v5266
        %v5271 = vpack.c.b16 %v5269, %v5268
        %v5275 = vsel %vm800, %v5250, 0
        %5277 = vmatprep.subr.bf16.mxu0 0
        %5278 = vmatpush1.bf16.msra.mxu0 %v5270
        %5279 = vmatprep.subr.bf16.mxu0 0
        %5280 = vmatpush1.bf16.msra.mxu0 %v5271
        %5281 = vmatprep.subr.bf16.mxu0 0
        %5282 = vmatpush1.bf16.msra.mxu0 0
        %5283 = vmatprep.subr.bf16.mxu0 0
        %5284 = vmatpush1.bf16.msra.mxu0 0
        %5285 = vmatprep.subr.bf16.mxu0 0
        %5286 = vmatpush1.bf16.msra.mxu0 0
        %5287 = vmatprep.subr.bf16.mxu0 0
        %5288 = vmatpush1.bf16.msra.mxu0 0
        %5289 = vmatprep.subr.bf16.mxu0 0
        %5290 = vmatpush1.bf16.msra.mxu0 0
        %5291 = vmatprep.subr.bf16.mxu0 0
        %5292 = vmatpush1.bf16.msra.mxu0 0
        %5293 = vmatprep.subr.bf16.mxu0 0
        %5294 = vmatpush1.bf16.msra.mxu0 0
        %5295 = vmatprep.subr.bf16.mxu0 0
        %5296 = vmatpush1.bf16.msra.mxu0 0
        %5297 = vmatprep.subr.bf16.mxu0 0
        %5298 = vmatpush1.bf16.msra.mxu0 0
        %5299 = vmatprep.subr.bf16.mxu0 0
        %5300 = vmatpush1.bf16.msra.mxu0 0
        %5301 = vmatprep.subr.bf16.mxu0 0
        %5302 = vmatpush1.bf16.msra.mxu0 0
        %5303 = vmatprep.subr.bf16.mxu0 0
        %5304 = vmatpush1.bf16.msra.mxu0 0
        %5305 = vmatprep.subr.bf16.mxu0 0
        %5306 = vmatpush1.bf16.msra.mxu0 0
        %5307 = vmatprep.subr.bf16.mxu0 0
        %5308 = vmatpush1.bf16.msra.mxu0 0
        %5309 = vmatprep.mubr.bf16.mxu0 0
        %5310 = vmatmul.mubr.bf16.gmra.mrb[0].mxu0 %v5275
        %v5311 = vpop.f32.mrb[0].mxu0
        %v5312 = vadd.f32 %v5260, %v5311
        %v5313 = vpop.f32.mrb[0].mxu0
        %v5314 = vpop.f32.mrb[0].mxu0
        %v5315 = vadd.f32 %v5260, %v5314
        %v5316 = vpop.f32.mrb[0].mxu0
        %5317 = vdwg.mxu0
        %v5318 = vmax.f32 %v5312, 0.0
        %v5319 = vmax.f32 %v5315, 0.0
        %v5320 = vpack.c.bf16 %v5319, %v5318
        %v5321 = vld [vmem:[%s19] sm:$0xf]
        %v5322 = vld [vmem:[%s19 + $0x4] sm:$0xf]
        %v5323 = vld [vmem:[%s19 + $0x8] sm:$0xf]
        %v5324 = vld [vmem:[%s19 + $0xc] sm:$0xf]
        %v5325 = vld [vmem:[%s19 + $0x10] sm:$0xf]
        %v5326 = vld [vmem:[%s19 + $0x14] sm:$0xf]
        %v5327 = vld [vmem:[%s19 + $0x18] sm:$0xf]
        %v5328 = vld [vmem:[%s19 + $0x1c] sm:$0xf]
        %v5329 = vld [vmem:[%s20] sm:$0x1]
        %v5331 = vlaneseq
        %v5332 = vshrl.u32 %v5331, 7
        %v5333 = vsub.s32 0, %v5332
        %v5334 = vrot.slane %v5329, %v5333
        %v5344 = vunpack.c.l.b16 %v5321
        %v5345 = vunpack.c.l.b16 %v5322
        %v5346 = vunpack.c.l.b16 %v5323
        %v5347 = vunpack.c.l.b16 %v5324
        %v5348 = vunpack.c.l.b16 %v5325
        %v5349 = vunpack.c.l.b16 %v5326
        %v5350 = vunpack.c.l.b16 %v5327
        %v5351 = vunpack.c.l.b16 %v5328
        %v5352 = vpack.c.b16 %v5345, %v5344
        %v5353 = vpack.c.b16 %v5347, %v5346
        %v5354 = vpack.c.b16 %v5349, %v5348
        %v5355 = vpack.c.b16 %v5351, %v5350
        %vm5360 = vcmask 523264
        %v5362 = vsel %vm5360, %v5320, 0
        %5364 = vmatprep.subr.bf16.mxu0 0
        %5365 = vmatpush1.bf16.msra.mxu0 %v5352
        %5366 = vmatprep.subr.bf16.mxu0 0
        %5367 = vmatpush1.bf16.msra.mxu0 %v5353
        %5368 = vmatprep.subr.bf16.mxu0 0
        %5369 = vmatpush1.bf16.msra.mxu0 %v5354
        %5370 = vmatprep.subr.bf16.mxu0 0
        %5371 = vmatpush1.bf16.msra.mxu0 %v5355
        %5372 = vmatprep.subr.bf16.mxu0 0
        %5373 = vmatpush1.bf16.msra.mxu0 0
        %5374 = vmatprep.subr.bf16.mxu0 0
        %5375 = vmatpush1.bf16.msra.mxu0 0
        %5376 = vmatprep.subr.bf16.mxu0 0
        %5377 = vmatpush1.bf16.msra.mxu0 0
        %5378 = vmatprep.subr.bf16.mxu0 0
        %5379 = vmatpush1.bf16.msra.mxu0 0
        %5380 = vmatprep.subr.bf16.mxu0 0
        %5381 = vmatpush1.bf16.msra.mxu0 0
        %5382 = vmatprep.subr.bf16.mxu0 0
        %5383 = vmatpush1.bf16.msra.mxu0 0
        %5384 = vmatprep.subr.bf16.mxu0 0
        %5385 = vmatpush1.bf16.msra.mxu0 0
        %5386 = vmatprep.subr.bf16.mxu0 0
        %5387 = vmatpush1.bf16.msra.mxu0 0
        %5388 = vmatprep.subr.bf16.mxu0 0
        %5389 = vmatpush1.bf16.msra.mxu0 0
        %5390 = vmatprep.subr.bf16.mxu0 0
        %5391 = vmatpush1.bf16.msra.mxu0 0
        %5392 = vmatprep.subr.bf16.mxu0 0
        %5393 = vmatpush1.bf16.msra.mxu0 0
        %5394 = vmatprep.subr.bf16.mxu0 0
        %5395 = vmatpush1.bf16.msra.mxu0 0
        %5396 = vmatprep.mubr.bf16.mxu0 0
        %5397 = vmatmul.mubr.bf16.gmra.mrb[0].mxu0 %v5362
        %v5398 = vpop.f32.mrb[0].mxu0
        %v5399 = vadd.f32 %v5334, %v5398
        %v5400 = vpop.f32.mrb[0].mxu0
        %v5401 = vpop.f32.mrb[0].mxu0
        %v5402 = vadd.f32 %v5334, %v5401
        %v5403 = vpop.f32.mrb[0].mxu0
        %5404 = vdwg.mxu0
        %v5405 = vld [vmem:[%s21] sm:$0x1]
        %v5406 = vld [vmem:[%s22] sm:$0x1]
        %v5407 = vadd.f32 %v5248, %v5399
        %v5408 = vadd.f32 %v5249, %v5402
        %v5409 = vsel %vm800, %v5407, 0.0
        %5410 = vadd.xlane.f32.xlu0 %v5409
        %v5411 = vpop.xlane.xlu0 %5410
        %v5412 = vsel %vm800, %v5408, 0.0
        %5413 = vadd.xlane.f32.xlu0 %v5412
        %v5414 = vpop.xlane.xlu0 %5413
        %v5415 = vmul.f32 %v5411, %v2936
        %v5416 = vmul.f32 %v5414, %v2936
        %v5417 = vmul.f32 %v5407, %v5407
        %v5418 = vmul.f32 %v5408, %v5408
        %v5419 = vsel %vm800, %v5417, 0.0
        %5420 = vadd.xlane.f32.xlu0 %v5419
        %v5421 = vpop.xlane.xlu0 %5420
        %v5422 = vsel %vm800, %v5418, 0.0
        %5423 = vadd.xlane.f32.xlu0 %v5422
        %v5424 = vpop.xlane.xlu0 %5423
        %v5425 = vmul.f32 %v5421, %v2936
        %v5426 = vmul.f32 %v5424, %v2936
        %v5427 = vmul.f32 %v5415, %v5415
        %v5428 = vmul.f32 %v5416, %v5416
        %v5429 = vsub.f32 %v5425, %v5427
        %v5430 = vsub.f32 %v5426, %v5428
        %v5431 = vsub.f32 %v5407, %v5415
        %v5432 = vsub.f32 %v5408, %v5416
        %v5434 = vlaneseq
        %v5435 = vshrl.u32 %v5434, 7
        %v5436 = vsub.s32 0, %v5435
        %v5437 = vrot.slane %v5405, %v5436
        %v5439 = vmul.f32 %v5437, %v5431
        %v5440 = vmul.f32 %v5437, %v5432
        %v5441 = vadd.f32 %v5429, 1e-06
        %v5442 = vadd.f32 %v5430, 1e-06
        %v5443 = vrsqrt.pop %v5441
        %v5444 = vrsqrt.pop %v5442
        %v5445 = vmul.f32 %v5439, %v5443
        %v5446 = vmul.f32 %v5440, %v5444
        %v5448 = vlaneseq
        %v5449 = vshrl.u32 %v5448, 7
        %v5450 = vsub.s32 0, %v5449
        %v5451 = vrot.slane %v5406, %v5450
        %v5453 = vadd.f32 %v5445, %v5451
        %v5454 = vadd.f32 %v5446, %v5451
        %5455 = vst.msk [vmem:[%s734] sm:$0xff] %vm800, %v5453
        %5456 = vst.msk [vmem:[%s734 + $0x8] sm:$0xff] %vm800, %v5454
        %s5457 = sand.u32 %s543, 1
        %s5458 = scalar_lea.sflag [#allocation3], %s5457
        %s5459 = sand.u32 %s543, 1
        %s5460 = smul.addr %s5459, 16
        %s5461 = scalar_lea.vmem [#allocation2], %s5460
        // Predicated region
        $region113: #{decoder_forward.1} parent=111 // pred_check
          %p5462 = pneg %p553
        $region114: #{decoder_forward.1} parent=111 // pred_check_branch
          %5464 = sbr.rel (%p5462) target = $region116
        $region115: #{decoder_forward.1} parent=111 // pred_region
          %s5465 = smul.u32 2, %s37
          %s5467 = ssub.s32 256, 256
          %5468 = vsyncadd %s5458, %s5467
          %s5469 = smul.addr %s5465, 128
          %s5470 = scalar_lea.hbm %s23, %s5469
          %s5471 = sshll.u32 %s5461, 4
          %s5472 = int_to_ptr.vmem [resolvable:$true] %s5471
          %5477 = dma.vmem_to_hbm [thread:$0]  %s5472, 256, %s5470, %s5458, 128, 128, 8
        $region116: #{decoder_forward.1} parent=111 // pred_fallthru
          _
      $region112: #{decoder_forward.1} parent=5 // pred_fallthru
        _
      %p5478 = scmp.le.s32.totalorder 2, %s32
      // Predicated region
      $region117: #{decoder_forward.1} parent=5 // pred_check
        %p5479 = pneg %p5478
      $region118: #{decoder_forward.1} parent=5 // pred_check_branch
        %5481 = sbr.rel (%p5479) target = $region120
      $region119: #{decoder_forward.1} parent=5 // pred_region
        %s5482 = ssub.s32 %s32, 2
        // Predicated region
        $region121: #{decoder_forward.1} parent=119 // pred_check
          %p5483 = pneg %p559
        $region122: #{decoder_forward.1} parent=119 // pred_check_branch
          %5485 = sbr.rel (%p5483) target = $region124
        $region123: #{decoder_forward.1} parent=119 // pred_region
          %s5486 = sand.u32 %s544, 1
          %s5487 = scalar_lea.sflag [#allocation3], %s5486
          %s5488 = sand.u32 %s544, 1
          %s5489 = smul.addr %s5488, 16
          %s5490 = scalar_lea.vmem [#allocation2], %s5489
          %5491 = dma.done %s5487, 256
        $region124: #{decoder_forward.1} parent=119 // pred_fallthru
          _
      $region120: #{decoder_forward.1} parent=5 // pred_fallthru
        _
    $region6: #{decoder_forward.1} parent=1 // loop_footer
      %s36 = sadd.s32 1, %s32
    $region7: #{decoder_forward.1} parent=1 // loop_footer_branch
      %31 = sbr.rel target = $region3
    $region8: #{decoder_forward.1} parent=1 // loop_exit
      _
    %5492 = vsyncpa [#allocation3], 1
    %s5493 = scalar_lea.sflag [#allocation3], 1
    %5494 = vsyncpa %s5493, 1

</llo_original>
